<compile_context>
chip_gen: v7x
topology: tpu7x:2x2x1
jax: 0.10.0
libtpu: 0.0.40
codegen_flags: <defaults>
</compile_context>

<pallas_src>
import functools
import math

import jax
import jax.numpy as jnp
from jax.experimental import pallas as pl
from jax.experimental.pallas import tpu as pltpu

EPS = 1e-5
MASK_VALUE = -1e30  # large finite negative: same causal-softmax result as -inf, NaN-safe


def _layernorm(h, w):
    # fp32 LayerNorm, weight-only (module uses bias=False)
    mu = jnp.mean(h, axis=-1, keepdims=True)
    var = jnp.mean((h - mu) ** 2, axis=-1, keepdims=True)
    return (h - mu) * jax.lax.rsqrt(var + EPS) * w


def _gelu(x):
    # exact (erf) GELU, matching torch.nn.GELU() default
    return 0.5 * x * (1.0 + jax.lax.erf(x / jnp.sqrt(2.0).astype(x.dtype)))


def encoder_stack_kernel(
    # inputs (order matches pallas_call operand order)
    x_ref, lnfw_ref,
    ln1w_ref, bqkv_ref, bp_ref, ln2w_ref, b1_ref, b2_ref,   # resident (L, ...) params
    wqkv_ref, wp_ref, w1_ref, w2_ref,                        # streamed per-layer weights
    # outputs
    o_ref,
    # scratch
    x_scr, bias_scr,
    *, n_heads, head_dim, compute_dtype, approx_softmax,
):
    l = pl.program_id(1)
    n_layers = pl.num_programs(1)
    cdt = compute_dtype

    Bt, T, C = x_ref.shape
    H, D = n_heads, head_dim
    M = Bt * T

    @pl.when(l == 0)
    def _():
        # residual carry for this batch block + precomputed additive causal bias
        x_scr[...] = x_ref[...].reshape(M, C).astype(jnp.float32)
        row = jax.lax.broadcasted_iota(jnp.int32, (T, T), 0)
        col = jax.lax.broadcasted_iota(jnp.int32, (T, T), 1)
        bias_scr[...] = jnp.where(row >= col,
                                  jnp.float32(0.0), jnp.float32(MASK_VALUE))

    x = x_scr[...]                                    # (M, C) fp32 residual stream

    # ---------------- attention: x = x + proj(MHA(ln1(x))) ----------------
    h = _layernorm(x, ln1w_ref[l])
    qkv = (jnp.dot(h.astype(cdt), wqkv_ref[0],
                   preferred_element_type=jnp.float32)
           + bqkv_ref[l])                             # (M, 3C) fused QKV matmul

    scale = 1.0 / math.sqrt(D)

    def _heads(t):                                    # (M, C) -> (Bt*H, T, D)
        return t.reshape(Bt, T, H, D).transpose(0, 2, 1, 3).reshape(Bt * H, T, D)

    q = _heads(qkv[:, 0 * C:1 * C] * scale)           # scale folded into q (incl. bias)
    k = _heads(qkv[:, 1 * C:2 * C])
    v = _heads(qkv[:, 2 * C:3 * C])

    att = jnp.einsum('zqd,zkd->zqk', q.astype(cdt), k.astype(cdt),
                     preferred_element_type=jnp.float32)          # (Bt*H, T, T)
    att = att + bias_scr[...][None, :, :]                         # additive causal mask
    att = att - jnp.max(att, axis=-1, keepdims=True)
    e = jnp.exp(att)
    denom = jnp.sum(e, axis=-1, keepdims=True)
    p = e * pl.reciprocal(denom, approx=approx_softmax)

    y = jnp.einsum('zqk,zkd->zqd', p.astype(cdt), v.astype(cdt),
                   preferred_element_type=jnp.float32)            # (Bt*H, T, D)
    y = y.reshape(Bt, H, T, D).transpose(0, 2, 1, 3).reshape(M, C)
    y = (jnp.dot(y.astype(cdt), wp_ref[0], preferred_element_type=jnp.float32)
         + bp_ref[l])
    x = x + y

    # ---------------- MLP: x = x + W2(gelu(W1(ln2(x)))) -------------------
    h = _layernorm(x, ln2w_ref[l])
    h = (jnp.dot(h.astype(cdt), w1_ref[0], preferred_element_type=jnp.float32)
         + b1_ref[l])
    h = _gelu(h)
    h = (jnp.dot(h.astype(cdt), w2_ref[0], preferred_element_type=jnp.float32)
         + b2_ref[l])
    x = x + h

    x_scr[...] = x

    # final LayerNorm fused into the last layer; written once per batch block
    @pl.when(l == n_layers - 1)
    def _():
        o_ref[...] = _layernorm(x, lnfw_ref[...]).reshape(Bt, T, C).astype(o_ref.dtype)


def transformer_encoder_pallas(x, params, n_heads, *,
                               compute_dtype=jnp.bfloat16,
                               approx_softmax=True,
                               batch_block=None):
    """x: (B, T, C).  params: tuple of L-stacked weights (see init_params)."""
    B, T, C = x.shape
    (ln1w, wqkv, bqkv, wp, bp, ln2w, w1, b1, w2, b2, lnfw) = params
    L = ln1w.shape[0]
    assert C % n_heads == 0
    head_dim = C // n_heads
    cdt = jnp.dtype(compute_dtype)

    # Big matmul weights stored/streamed in the compute dtype (halves DMA bytes for bf16);
    # small per-layer params (LN weights + biases) stay fp32 and VMEM-resident.
    big = tuple(p.astype(cdt) for p in (wqkv, wp, w1, w2))
    small = tuple(jnp.asarray(p, jnp.float32) for p in (ln1w, bqkv, bp, ln2w, b1, b2))
    lnfw = jnp.asarray(lnfw, jnp.float32)

    # ---- generation-aware VMEM budget -> batch-block (Bt) selection ----
    try:
        vmem_cap = int(pltpu.get_tpu_info().vmem_capacity_bytes)
    except Exception:
        vmem_cap = 64 * 2**20   # conservative fallback (v7x-sized)
    budget = int(0.70 * vmem_cap)

    def est_bytes(bt):
        m = bt * T
        wbytes = 2 * sum(int(math.prod(p.shape[1:])) for p in big) * cdt.itemsize  # dbl-buffered
        sbytes = (sum(int(p.size) for p in small) + int(lnfw.size)) * 4
        io = 4 * m * C * x.dtype.itemsize                        # x in + out, dbl-buffered
        scr = m * C * 4 + T * max(T, 128) * 4                    # residual carry + causal bias
        interm = (m * 3 * C * (4 + cdt.itemsize)                 # qkv (+ cast copy)
                  + 3 * m * C * (4 + cdt.itemsize)               # q, k, v (+ casts)
                  + 3 * bt * n_heads * T * T * 4                 # att, e, p
                  + m * 4 * C * (4 + cdt.itemsize)               # mlp hidden (+ cast)
                  + 3 * m * C * 4)                               # y / residual temporaries
        return wbytes + sbytes + io + scr + interm

    if batch_block is None:
        bt = B
        while bt > 1 and (B % bt != 0 or est_bytes(bt) > budget):
            bt -= 1
    else:
        bt = int(batch_block)
        assert B % bt == 0
    nb = B // bt
    # NOTE: on v7x (2 TCs/chip) prefer nb % 2 == 0 so both TensorCores stay busy.

    vmem_limit = int(min(max(int(est_bytes(bt) * 1.3), 32 * 2**20),
                         int(0.85 * vmem_cap)))

    kernel = functools.partial(
        encoder_stack_kernel,
        n_heads=n_heads, head_dim=head_dim,
        compute_dtype=cdt, approx_softmax=approx_softmax)

    def resident_spec(p):   # whole stack resident for the entire grid
        return pl.BlockSpec(p.shape, lambda b, l, _n=p.ndim: (0,) * _n)

    def streamed_spec(p):   # one layer's weight block per grid step (double-buffered)
        return pl.BlockSpec((1,) + p.shape[1:],
                            lambda b, l, _n=p.ndim - 1: (l,) + (0,) * _n)

    in_specs = (
        [pl.BlockSpec((bt, T, C), lambda b, l: (b, 0, 0)),   # x: fetched once per batch block
         resident_spec(lnfw)]
        + [resident_spec(p) for p in small]
        + [streamed_spec(p) for p in big]
    )

    return pl.pallas_call(
        kernel,
        out_shape=jax.ShapeDtypeStruct((B, T, C), x.dtype),
        grid=(nb, L),
        in_specs=in_specs,
        out_specs=pl.BlockSpec((bt, T, C), lambda b, l: (b, 0, 0)),
        scratch_shapes=[pltpu.VMEM((bt * T, C), jnp.float32),   # residual carry
                        pltpu.VMEM((T, T), jnp.float32)],       # additive causal bias
        compiler_params=pltpu.CompilerParams(
            dimension_semantics=("parallel", "arbitrary"),
            vmem_limit_bytes=vmem_limit),
    )(x, lnfw, *small, *big)


# ------------------------------- parameter init -------------------------------------
def init_params(key, C, n_layers):
    H4 = 4 * C

    def u(k, shape, fan_in):
        bound = 1.0 / math.sqrt(fan_in)
        return jax.random.uniform(k, shape, jnp.float32, -bound, bound)

    ks = jax.random.split(key, 11)
    wqkv = u(ks[0], (n_layers, C, 3 * C), C)      # fused [Q | K | V], stored (in, out)
    bqkv = u(ks[1], (n_layers, 1, 3 * C), C)
    wp = u(ks[2], (n_layers, C, C), C)
    bp = u(ks[3], (n_layers, 1, C), C)
    w1 = u(ks[4], (n_layers, C, H4), C)
    b1 = u(ks[5], (n_layers, 1, H4), C)
    w2 = u(ks[6], (n_layers, H4, C), H4)
    b2 = u(ks[7], (n_layers, 1, C), H4)
    ln1w = 1.0 + 0.1 * jax.random.normal(ks[8], (n_layers, 1, C), jnp.float32)
    ln2w = 1.0 + 0.1 * jax.random.normal(ks[9], (n_layers, 1, C), jnp.float32)
    lnfw = 1.0 + 0.1 * jax.random.normal(ks[10], (1, C), jnp.float32)
    return (ln1w, wqkv, bqkv, wp, bp, ln2w, w1, b1, w2, b2, lnfw)


def round_big_weights(params, dtype):
    """Round the streamed matmul weights the same way the wrapper does (for the reference)."""
    (ln1w, wqkv, bqkv, wp, bp, ln2w, w1, b1, w2, b2, lnfw) = params
    r = lambda p: p.astype(dtype).astype(jnp.float32)
    return (ln1w, r(wqkv), bqkv, r(wp), bp, ln2w, r(w1), b1, r(w2), b2, lnfw)


# ------------------------------- pure-JAX reference ----------------------------------
def reference(x, params, n_heads):
    (ln1w, wqkv, bqkv, wp, bp, ln2w, w1, b1, w2, b2, lnfw) = [
        jnp.asarray(p, jnp.float32) for p in params]
    B, T, C = x.shape
    L = ln1w.shape[0]
    dh = C // n_heads
    mask = jnp.tril(jnp.ones((T, T), bool))
    hp = jax.lax.Precision.HIGHEST

    def ln(h, w):
        mu = h.mean(-1, keepdims=True)
        var = ((h - mu) ** 2).mean(-1, keepdims=True)
        return (h - mu) * jax.lax.rsqrt(var + EPS) * w

    x = jnp.asarray(x, jnp.float32)
    for l in range(L):
        h = ln(x, ln1w[l])
        qkv = jnp.dot(h, wqkv[l], precision=hp) + bqkv[l]
        q, k, v = jnp.split(qkv, 3, axis=-1)
        q = q.reshape(B, T, n_heads, dh).transpose(0, 2, 1, 3)
        k = k.reshape(B, T, n_heads, dh).transpose(0, 2, 1, 3)
        v = v.reshape(B, T, n_heads, dh).transpose(0, 2, 1, 3)
        att = jnp.einsum('bhqd,bhkd->bhqk', q, k, precision=hp) / math.sqrt(dh)
        att = jnp.where(mask, att, -jnp.inf)
        att = jax.nn.softmax(att, axis=-1)
        y = jnp.einsum('bhqk,bhkd->bhqd', att, v, precision=hp)
        y = y.transpose(0, 2, 1, 3).reshape(B, T, C)
        x = x + (jnp.dot(y, wp[l], precision=hp) + bp[l])
        h = ln(x, ln2w[l])
        h = _gelu(jnp.dot(h, w1[l], precision=hp) + b1[l])
        x = x + (jnp.dot(h, w2[l], precision=hp) + b2[l])
    return ln(x, lnfw)


if __name__ == "__main__":
    # batch, seq (block_size), embed_dim, heads, layers — small but lane-aligned
    B, T, C, H, L = 2, 16, 128, 4, 2
    key = jax.random.PRNGKey(0)
    xkey, pkey = jax.random.split(key)
    x = jax.random.normal(xkey, (B, T, C), jnp.float32)
    params = init_params(pkey, C, L)

    # ---- default path: bf16 weight streaming / bf16 MXU inputs, fp32 accumulation ----
    out = transformer_encoder_pallas(x, params, H)
    out = jax.block_until_ready(out)
    assert out.shape == (B, T, C)
    ref_bf = reference(x, round_big_weights(params, jnp.bfloat16), H)
    assert bool(jnp.allclose(out.astype(jnp.float32), ref_bf, atol=5e-2, rtol=5e-2)), \
        "bf16 kernel/reference mismatch"

    # ---- fp32 path sanity check (exact reciprocal, fp32 matmul inputs) ----
    out32 = transformer_encoder_pallas(x, params, H,
                                       compute_dtype=jnp.float32,
                                       approx_softmax=False)
    out32 = jax.block_until_ready(out32)
    ref32 = reference(x, params, H)
    assert bool(jnp.allclose(out32, ref32, atol=2e-2, rtol=2e-2)), \
        "fp32 kernel/reference mismatch"

    print("KERNEL_OK")
</pallas_src>

<mosaic_0001>
module attributes {stable_mosaic.version = 11 : i64} {
  func.func @encoder_stack_kernel(%arg0: i32, %arg1: i32, %arg2: memref<2x16x128xf32, #tpu.memory_space<vmem>>, %arg3: memref<1x128xf32, #tpu.memory_space<vmem>>, %arg4: memref<2x1x128xf32, #tpu.memory_space<vmem>>, %arg5: memref<2x1x384xf32, #tpu.memory_space<vmem>>, %arg6: memref<2x1x128xf32, #tpu.memory_space<vmem>>, %arg7: memref<2x1x128xf32, #tpu.memory_space<vmem>>, %arg8: memref<2x1x512xf32, #tpu.memory_space<vmem>>, %arg9: memref<2x1x128xf32, #tpu.memory_space<vmem>>, %arg10: memref<1x128x384xbf16, #tpu.memory_space<vmem>>, %arg11: memref<1x128x128xbf16, #tpu.memory_space<vmem>>, %arg12: memref<1x128x512xbf16, #tpu.memory_space<vmem>>, %arg13: memref<1x512x128xbf16, #tpu.memory_space<vmem>>, %arg14: memref<2x16x128xf32, #tpu.memory_space<vmem>>, %arg15: memref<32x128xf32, #tpu.memory_space<vmem>>, %arg16: memref<16x16xf32, #tpu.memory_space<vmem>>) attributes {dimension_semantics = [#tpu.dimension_semantics<parallel>, #tpu.dimension_semantics<arbitrary>], iteration_bounds = array<i64: 1, 2>, scalar_prefetch = 0 : i64, scratch_operands = 2 : i64, tpu.core_type = #tpu.core_type<tc>, window_params = [{transform_indices = @transform_0, window_bounds = array<i64: 2, 16, 128>}, {pipeline_mode = #tpu.pipeline_mode<synchronous>, transform_indices = @transform_1, window_bounds = array<i64: 1, 128>}, {pipeline_mode = #tpu.pipeline_mode<synchronous>, transform_indices = @transform_2, window_bounds = array<i64: 2, 1, 128>}, {pipeline_mode = #tpu.pipeline_mode<synchronous>, transform_indices = @transform_3, window_bounds = array<i64: 2, 1, 384>}, {pipeline_mode = #tpu.pipeline_mode<synchronous>, transform_indices = @transform_4, window_bounds = array<i64: 2, 1, 128>}, {pipeline_mode = #tpu.pipeline_mode<synchronous>, transform_indices = @transform_5, window_bounds = array<i64: 2, 1, 128>}, {pipeline_mode = #tpu.pipeline_mode<synchronous>, transform_indices = @transform_6, window_bounds = array<i64: 2, 1, 512>}, {pipeline_mode = #tpu.pipeline_mode<synchronous>, transform_indices = @transform_7, window_bounds = array<i64: 2, 1, 128>}, {transform_indices = @transform_8, window_bounds = array<i64: 1, 128, 384>}, {transform_indices = @transform_9, window_bounds = array<i64: 1, 128, 128>}, {transform_indices = @transform_10, window_bounds = array<i64: 1, 128, 512>}, {transform_indices = @transform_11, window_bounds = array<i64: 1, 512, 128>}, {transform_indices = @transform_12, window_bounds = array<i64: 2, 16, 128>}]} {
    %c0_i32 = arith.constant 0 : i32
    %0 = arith.cmpi eq, %arg1, %c0_i32 : i32
    %1 = arith.extui %0 : i1 to i32
    %c0_i32_0 = arith.constant 0 : i32
    %2 = arith.cmpi ne, %1, %c0_i32_0 : i32
    scf.if %2 {
      %c0_52 = arith.constant 0 : index
      %c0_53 = arith.constant 0 : index
      %c0_54 = arith.constant 0 : index
      %138 = vector.load %arg2[%c0_52, %c0_53, %c0_54] : memref<2x16x128xf32, #tpu.memory_space<vmem>>, vector<2x16x128xf32>
      %139 = vector.shape_cast %138 : vector<2x16x128xf32> to vector<32x128xf32>
      %c0_55 = arith.constant 0 : index
      %c0_56 = arith.constant 0 : index
      %140 = vector.load %arg15[%c0_55, %c0_56] : memref<32x128xf32, #tpu.memory_space<vmem>>, vector<32x128xf32>
      tpu.vector_store %arg15[%c0_55, %c0_56], %139 {strides = array<i32>} : memref<32x128xf32, #tpu.memory_space<vmem>>, vector<32x128xf32>,
      %141 = tpu.iota {dimensions = array<i32: 0>} : vector<16x16xi32>
      %142 = tpu.iota {dimensions = array<i32: 1>} : vector<16x16xi32>
      %143 = arith.cmpi sge, %141, %142 : vector<16x16xi32>
      %cst_57 = arith.constant 0.000000e+00 : f32
      %cst_58 = arith.constant -1.000000e+30 : f32
      %144 = vector.broadcast %cst_57 : f32 to vector<16x16xf32>
      %145 = vector.broadcast %cst_58 : f32 to vector<16x16xf32>
      %146 = arith.select %143, %144, %145 : vector<16x16xi1>, vector<16x16xf32>
      %c0_59 = arith.constant 0 : index
      %c0_60 = arith.constant 0 : index
      %147 = vector.load %arg16[%c0_59, %c0_60] : memref<16x16xf32, #tpu.memory_space<vmem>>, vector<16x16xf32>
      tpu.vector_store %arg16[%c0_59, %c0_60], %146 {strides = array<i32>} : memref<16x16xf32, #tpu.memory_space<vmem>>, vector<16x16xf32>,
    } else {
    }
    %c0 = arith.constant 0 : index
    %c0_1 = arith.constant 0 : index
    %3 = vector.load %arg15[%c0, %c0_1] : memref<32x128xf32, #tpu.memory_space<vmem>>, vector<32x128xf32>
    %4 = arith.index_cast %arg1 : i32 to index
    %c0_2 = arith.constant 0 : index
    %c0_3 = arith.constant 0 : index
    %5 = vector.load %arg4[%4, %c0_2, %c0_3] : memref<2x1x128xf32, #tpu.memory_space<vmem>>, vector<1x1x128xf32>
    %6 = vector.shape_cast %5 : vector<1x1x128xf32> to vector<1x128xf32>
    %cst = arith.constant dense<0.000000e+00> : vector<32xf32>
    %7 = vector.multi_reduction <add>, %3, %cst [1] : vector<32x128xf32> to vector<32xf32>
    %8 = vector.shape_cast %7 : vector<32xf32> to vector<32x1xf32>
    %cst_4 = arith.constant 1.280000e+02 : f32
    %9 = vector.broadcast %cst_4 : f32 to vector<32x1xf32>
    %10 = arith.divf %8, %9 : vector<32x1xf32>
    %11 = vector.broadcast %10 : vector<32x1xf32> to vector<32x128xf32>
    %12 = arith.subf %3, %11 : vector<32x128xf32>
    %13 = arith.mulf %12, %12 : vector<32x128xf32>
    %cst_5 = arith.constant dense<0.000000e+00> : vector<32xf32>
    %14 = vector.multi_reduction <add>, %13, %cst_5 [1] : vector<32x128xf32> to vector<32xf32>
    %15 = vector.shape_cast %14 : vector<32xf32> to vector<32x1xf32>
    %cst_6 = arith.constant 1.280000e+02 : f32
    %16 = vector.broadcast %cst_6 : f32 to vector<32x1xf32>
    %17 = arith.divf %15, %16 : vector<32x1xf32>
    %18 = vector.broadcast %10 : vector<32x1xf32> to vector<32x128xf32>
    %19 = arith.subf %3, %18 : vector<32x128xf32>
    %cst_7 = arith.constant 9.99999974E-6 : f32
    %20 = vector.broadcast %cst_7 : f32 to vector<32x1xf32>
    %21 = arith.addf %17, %20 : vector<32x1xf32>
    %22 = math.rsqrt %21 : vector<32x1xf32>
    %23 = vector.broadcast %22 : vector<32x1xf32> to vector<32x128xf32>
    %24 = arith.mulf %19, %23 : vector<32x128xf32>
    %25 = vector.broadcast %6 : vector<1x128xf32> to vector<32x128xf32>
    %26 = arith.mulf %24, %25 : vector<32x128xf32>
    %27 = arith.truncf %26 : vector<32x128xf32> to vector<32x128xbf16>
    %c0_8 = arith.constant 0 : index
    %c0_9 = arith.constant 0 : index
    %c0_10 = arith.constant 0 : index
    %28 = vector.load %arg10[%c0_8, %c0_9, %c0_10] : memref<1x128x384xbf16, #tpu.memory_space<vmem>>, vector<1x128x384xbf16>
    %29 = vector.shape_cast %28 : vector<1x128x384xbf16> to vector<128x384xbf16>
    %cst_11 = arith.constant dense<0.000000e+00> : vector<32x384xf32>
    %30 = tpu.matmul %27, %29, %cst_11 {dimension_numbers = #tpu.dot_dimension_numbers<[1], [0], [0], [1], [0, 0, 1, 1], [], []>} : vector<32x128xbf16>, vector<128x384xbf16>, vector<32x384xf32> -> vector<32x384xf32>
    %31 = arith.index_cast %arg1 : i32 to index
    %c0_12 = arith.constant 0 : index
    %c0_13 = arith.constant 0 : index
    %32 = vector.load %arg5[%31, %c0_12, %c0_13] : memref<2x1x384xf32, #tpu.memory_space<vmem>>, vector<1x1x384xf32>
    %33 = vector.shape_cast %32 : vector<1x1x384xf32> to vector<1x384xf32>
    %34 = vector.broadcast %33 : vector<1x384xf32> to vector<32x384xf32>
    %35 = arith.addf %30, %34 : vector<32x384xf32>
    %36 = vector.extract_strided_slice %35 {offsets = [0, 0], sizes = [32, 128], strides = [1, 1]} : vector<32x384xf32> to vector<32x128xf32>
    %cst_14 = arith.constant 0.176776692 : f32
    %37 = vector.broadcast %cst_14 : f32 to vector<32x128xf32>
    %38 = arith.mulf %36, %37 : vector<32x128xf32>
    %39 = vector.shape_cast %38 : vector<32x128xf32> to vector<2x16x4x32xf32>
    %40 = tpu.transpose %39, [0, 2, 1, 3] : vector<2x16x4x32xf32> -> vector<2x4x16x32xf32>
    %41 = vector.shape_cast %40 : vector<2x4x16x32xf32> to vector<8x16x32xf32>
    %42 = vector.extract_strided_slice %35 {offsets = [0, 128], sizes = [32, 128], strides = [1, 1]} : vector<32x384xf32> to vector<32x128xf32>
    %43 = vector.shape_cast %42 : vector<32x128xf32> to vector<2x16x4x32xf32>
    %44 = tpu.transpose %43, [0, 2, 1, 3] : vector<2x16x4x32xf32> -> vector<2x4x16x32xf32>
    %45 = vector.shape_cast %44 : vector<2x4x16x32xf32> to vector<8x16x32xf32>
    %46 = vector.extract_strided_slice %35 {offsets = [0, 256], sizes = [32, 128], strides = [1, 1]} : vector<32x384xf32> to vector<32x128xf32>
    %47 = vector.shape_cast %46 : vector<32x128xf32> to vector<2x16x4x32xf32>
    %48 = tpu.transpose %47, [0, 2, 1, 3] : vector<2x16x4x32xf32> -> vector<2x4x16x32xf32>
    %49 = vector.shape_cast %48 : vector<2x4x16x32xf32> to vector<8x16x32xf32>
    %50 = arith.truncf %41 : vector<8x16x32xf32> to vector<8x16x32xbf16>
    %51 = arith.truncf %45 : vector<8x16x32xf32> to vector<8x16x32xbf16>
    "tpu.trace_start"() <{level = 10 : i32, message = "zqd,zkd->zqk"}> : () -> ()
    %cst_15 = arith.constant dense<0.000000e+00> : vector<8x16x16xf32>
    %52 = tpu.matmul %50, %51, %cst_15 {dimension_numbers = #tpu.dot_dimension_numbers<[2], [2], [1], [1], [0, 0, 0, 1, 1, 1], [0], [0]>} : vector<8x16x32xbf16>, vector<8x16x32xbf16>, vector<8x16x16xf32> -> vector<8x16x16xf32>
    "tpu.trace_stop"() : () -> ()
    %c0_16 = arith.constant 0 : index
    %c0_17 = arith.constant 0 : index
    %53 = vector.load %arg16[%c0_16, %c0_17] : memref<16x16xf32, #tpu.memory_space<vmem>>, vector<16x16xf32>
    %54 = vector.shape_cast %53 : vector<16x16xf32> to vector<1x16x16xf32>
    %55 = vector.broadcast %54 : vector<1x16x16xf32> to vector<8x16x16xf32>
    %56 = arith.addf %52, %55 : vector<8x16x16xf32>
    %cst_18 = arith.constant dense<0xFF800000> : vector<8x16xf32>
    %57 = vector.multi_reduction <maximumf>, %56, %cst_18 [2] : vector<8x16x16xf32> to vector<8x16xf32>
    %58 = vector.shape_cast %57 : vector<8x16xf32> to vector<8x16x1xf32>
    %59 = vector.broadcast %58 : vector<8x16x1xf32> to vector<8x16x16xf32>
    %60 = arith.subf %56, %59 : vector<8x16x16xf32>
    %61 = math.exp %60 : vector<8x16x16xf32>
    %cst_19 = arith.constant dense<0.000000e+00> : vector<8x16xf32>
    %62 = vector.multi_reduction <add>, %61, %cst_19 [2] : vector<8x16x16xf32> to vector<8x16xf32>
    %63 = vector.shape_cast %62 : vector<8x16xf32> to vector<8x16x1xf32>
    %64 = tpu.reciprocal %63 {approx = true} : vector<8x16x1xf32> -> vector<8x16x1xf32>
    %65 = vector.broadcast %64 : vector<8x16x1xf32> to vector<8x16x16xf32>
    %66 = arith.mulf %61, %65 : vector<8x16x16xf32>
    %67 = arith.truncf %66 : vector<8x16x16xf32> to vector<8x16x16xbf16>
    %68 = arith.truncf %49 : vector<8x16x32xf32> to vector<8x16x32xbf16>
    "tpu.trace_start"() <{level = 10 : i32, message = "zqk,zkd->zqd"}> : () -> ()
    %cst_20 = arith.constant dense<0.000000e+00> : vector<8x16x32xf32>
    %69 = tpu.matmul %67, %68, %cst_20 {dimension_numbers = #tpu.dot_dimension_numbers<[2], [1], [1], [2], [0, 0, 0, 1, 1, 2], [0], [0]>} : vector<8x16x16xbf16>, vector<8x16x32xbf16>, vector<8x16x32xf32> -> vector<8x16x32xf32>
    "tpu.trace_stop"() : () -> ()
    %70 = vector.shape_cast %69 : vector<8x16x32xf32> to vector<2x4x16x32xf32>
    %71 = tpu.transpose %70, [0, 2, 1, 3] : vector<2x4x16x32xf32> -> vector<2x16x4x32xf32>
    %72 = vector.shape_cast %71 : vector<2x16x4x32xf32> to vector<32x128xf32>
    %73 = arith.truncf %72 : vector<32x128xf32> to vector<32x128xbf16>
    %c0_21 = arith.constant 0 : index
    %c0_22 = arith.constant 0 : index
    %c0_23 = arith.constant 0 : index
    %74 = vector.load %arg11[%c0_21, %c0_22, %c0_23] : memref<1x128x128xbf16, #tpu.memory_space<vmem>>, vector<1x128x128xbf16>
    %75 = vector.shape_cast %74 : vector<1x128x128xbf16> to vector<128x128xbf16>
    %cst_24 = arith.constant dense<0.000000e+00> : vector<32x128xf32>
    %76 = tpu.matmul %73, %75, %cst_24 {dimension_numbers = #tpu.dot_dimension_numbers<[1], [0], [0], [1], [0, 0, 1, 1], [], []>} : vector<32x128xbf16>, vector<128x128xbf16>, vector<32x128xf32> -> vector<32x128xf32>
    %77 = arith.index_cast %arg1 : i32 to index
    %c0_25 = arith.constant 0 : index
    %c0_26 = arith.constant 0 : index
    %78 = vector.load %arg6[%77, %c0_25, %c0_26] : memref<2x1x128xf32, #tpu.memory_space<vmem>>, vector<1x1x128xf32>
    %79 = vector.shape_cast %78 : vector<1x1x128xf32> to vector<1x128xf32>
    %80 = vector.broadcast %79 : vector<1x128xf32> to vector<32x128xf32>
    %81 = arith.addf %76, %80 : vector<32x128xf32>
    %82 = arith.addf %3, %81 : vector<32x128xf32>
    %83 = arith.index_cast %arg1 : i32 to index
    %c0_27 = arith.constant 0 : index
    %c0_28 = arith.constant 0 : index
    %84 = vector.load %arg7[%83, %c0_27, %c0_28] : memref<2x1x128xf32, #tpu.memory_space<vmem>>, vector<1x1x128xf32>
    %85 = vector.shape_cast %84 : vector<1x1x128xf32> to vector<1x128xf32>
    %cst_29 = arith.constant dense<0.000000e+00> : vector<32xf32>
    %86 = vector.multi_reduction <add>, %82, %cst_29 [1] : vector<32x128xf32> to vector<32xf32>
    %87 = vector.shape_cast %86 : vector<32xf32> to vector<32x1xf32>
    %cst_30 = arith.constant 1.280000e+02 : f32
    %88 = vector.broadcast %cst_30 : f32 to vector<32x1xf32>
    %89 = arith.divf %87, %88 : vector<32x1xf32>
    %90 = vector.broadcast %89 : vector<32x1xf32> to vector<32x128xf32>
    %91 = arith.subf %82, %90 : vector<32x128xf32>
    %92 = arith.mulf %91, %91 : vector<32x128xf32>
    %cst_31 = arith.constant dense<0.000000e+00> : vector<32xf32>
    %93 = vector.multi_reduction <add>, %92, %cst_31 [1] : vector<32x128xf32> to vector<32xf32>
    %94 = vector.shape_cast %93 : vector<32xf32> to vector<32x1xf32>
    %cst_32 = arith.constant 1.280000e+02 : f32
    %95 = vector.broadcast %cst_32 : f32 to vector<32x1xf32>
    %96 = arith.divf %94, %95 : vector<32x1xf32>
    %97 = vector.broadcast %89 : vector<32x1xf32> to vector<32x128xf32>
    %98 = arith.subf %82, %97 : vector<32x128xf32>
    %cst_33 = arith.constant 9.99999974E-6 : f32
    %99 = vector.broadcast %cst_33 : f32 to vector<32x1xf32>
    %100 = arith.addf %96, %99 : vector<32x1xf32>
    %101 = math.rsqrt %100 : vector<32x1xf32>
    %102 = vector.broadcast %101 : vector<32x1xf32> to vector<32x128xf32>
    %103 = arith.mulf %98, %102 : vector<32x128xf32>
    %104 = vector.broadcast %85 : vector<1x128xf32> to vector<32x128xf32>
    %105 = arith.mulf %103, %104 : vector<32x128xf32>
    %106 = arith.truncf %105 : vector<32x128xf32> to vector<32x128xbf16>
    %c0_34 = arith.constant 0 : index
    %c0_35 = arith.constant 0 : index
    %c0_36 = arith.constant 0 : index
    %107 = vector.load %arg12[%c0_34, %c0_35, %c0_36] : memref<1x128x512xbf16, #tpu.memory_space<vmem>>, vector<1x128x512xbf16>
    %108 = vector.shape_cast %107 : vector<1x128x512xbf16> to vector<128x512xbf16>
    %cst_37 = arith.constant dense<0.000000e+00> : vector<32x512xf32>
    %109 = tpu.matmul %106, %108, %cst_37 {dimension_numbers = #tpu.dot_dimension_numbers<[1], [0], [0], [1], [0, 0, 1, 1], [], []>} : vector<32x128xbf16>, vector<128x512xbf16>, vector<32x512xf32> -> vector<32x512xf32>
    %110 = arith.index_cast %arg1 : i32 to index
    %c0_38 = arith.constant 0 : index
    %c0_39 = arith.constant 0 : index
    %111 = vector.load %arg8[%110, %c0_38, %c0_39] : memref<2x1x512xf32, #tpu.memory_space<vmem>>, vector<1x1x512xf32>
    %112 = vector.shape_cast %111 : vector<1x1x512xf32> to vector<1x512xf32>
    %113 = vector.broadcast %112 : vector<1x512xf32> to vector<32x512xf32>
    %114 = arith.addf %109, %113 : vector<32x512xf32>
    %cst_40 = arith.constant 5.000000e-01 : f32
    %115 = vector.broadcast %cst_40 : f32 to vector<32x512xf32>
    %116 = arith.mulf %115, %114 : vector<32x512xf32>
    %cst_41 = arith.constant 2.000000e+00 : f32
    %117 = math.sqrt %cst_41 : f32
    %118 = vector.broadcast %117 : f32 to vector<32x512xf32>
    %119 = arith.divf %114, %118 : vector<32x512xf32>
    %120 = math.erf %119 : vector<32x512xf32>
    %cst_42 = arith.constant 1.000000e+00 : f32
    %121 = vector.broadcast %cst_42 : f32 to vector<32x512xf32>
    %122 = arith.addf %121, %120 : vector<32x512xf32>
    %123 = arith.mulf %116, %122 : vector<32x512xf32>
    %124 = arith.truncf %123 : vector<32x512xf32> to vector<32x512xbf16>
    %c0_43 = arith.constant 0 : index
    %c0_44 = arith.constant 0 : index
    %c0_45 = arith.constant 0 : index
    %125 = vector.load %arg13[%c0_43, %c0_44, %c0_45] : memref<1x512x128xbf16, #tpu.memory_space<vmem>>, vector<1x512x128xbf16>
    %126 = vector.shape_cast %125 : vector<1x512x128xbf16> to vector<512x128xbf16>
    %cst_46 = arith.constant dense<0.000000e+00> : vector<32x128xf32>
    %127 = tpu.matmul %124, %126, %cst_46 {dimension_numbers = #tpu.dot_dimension_numbers<[1], [0], [0], [1], [0, 0, 1, 1], [], []>} : vector<32x512xbf16>, vector<512x128xbf16>, vector<32x128xf32> -> vector<32x128xf32>
    %128 = arith.index_cast %arg1 : i32 to index
    %c0_47 = arith.constant 0 : index
    %c0_48 = arith.constant 0 : index
    %129 = vector.load %arg9[%128, %c0_47, %c0_48] : memref<2x1x128xf32, #tpu.memory_space<vmem>>, vector<1x1x128xf32>
    %130 = vector.shape_cast %129 : vector<1x1x128xf32> to vector<1x128xf32>
    %131 = vector.broadcast %130 : vector<1x128xf32> to vector<32x128xf32>
    %132 = arith.addf %127, %131 : vector<32x128xf32>
    %133 = arith.addf %82, %132 : vector<32x128xf32>
    %c0_49 = arith.constant 0 : index
    %c0_50 = arith.constant 0 : index
    %134 = vector.load %arg15[%c0_49, %c0_50] : memref<32x128xf32, #tpu.memory_space<vmem>>, vector<32x128xf32>
    tpu.vector_store %arg15[%c0_49, %c0_50], %133 {strides = array<i32>} : memref<32x128xf32, #tpu.memory_space<vmem>>, vector<32x128xf32>,
    %c1_i32 = arith.constant 1 : i32
    %135 = arith.cmpi eq, %arg1, %c1_i32 : i32
    %136 = arith.extui %135 : i1 to i32
    %c0_i32_51 = arith.constant 0 : i32
    %137 = arith.cmpi ne, %136, %c0_i32_51 : i32
    scf.if %137 {
      %c0_52 = arith.constant 0 : index
      %c0_53 = arith.constant 0 : index
      %138 = vector.load %arg3[%c0_52, %c0_53] : memref<1x128xf32, #tpu.memory_space<vmem>>, vector<1x128xf32>
      %cst_54 = arith.constant dense<0.000000e+00> : vector<32xf32>
      %139 = vector.multi_reduction <add>, %133, %cst_54 [1] : vector<32x128xf32> to vector<32xf32>
      %140 = vector.shape_cast %139 : vector<32xf32> to vector<32x1xf32>
      %cst_55 = arith.constant 1.280000e+02 : f32
      %141 = vector.broadcast %cst_55 : f32 to vector<32x1xf32>
      %142 = arith.divf %140, %141 : vector<32x1xf32>
      %143 = vector.broadcast %142 : vector<32x1xf32> to vector<32x128xf32>
      %144 = arith.subf %133, %143 : vector<32x128xf32>
      %145 = arith.mulf %144, %144 : vector<32x128xf32>
      %cst_56 = arith.constant dense<0.000000e+00> : vector<32xf32>
      %146 = vector.multi_reduction <add>, %145, %cst_56 [1] : vector<32x128xf32> to vector<32xf32>
      %147 = vector.shape_cast %146 : vector<32xf32> to vector<32x1xf32>
      %cst_57 = arith.constant 1.280000e+02 : f32
      %148 = vector.broadcast %cst_57 : f32 to vector<32x1xf32>
      %149 = arith.divf %147, %148 : vector<32x1xf32>
      %150 = vector.broadcast %142 : vector<32x1xf32> to vector<32x128xf32>
      %151 = arith.subf %133, %150 : vector<32x128xf32>
      %cst_58 = arith.constant 9.99999974E-6 : f32
      %152 = vector.broadcast %cst_58 : f32 to vector<32x1xf32>
      %153 = arith.addf %149, %152 : vector<32x1xf32>
      %154 = math.rsqrt %153 : vector<32x1xf32>
      %155 = vector.broadcast %154 : vector<32x1xf32> to vector<32x128xf32>
      %156 = arith.mulf %151, %155 : vector<32x128xf32>
      %157 = vector.broadcast %138 : vector<1x128xf32> to vector<32x128xf32>
      %158 = arith.mulf %156, %157 : vector<32x128xf32>
      %159 = vector.shape_cast %158 : vector<32x128xf32> to vector<2x16x128xf32>
      %c0_59 = arith.constant 0 : index
      %c0_60 = arith.constant 0 : index
      %c0_61 = arith.constant 0 : index
      %160 = vector.load %arg14[%c0_59, %c0_60, %c0_61] : memref<2x16x128xf32, #tpu.memory_space<vmem>>, vector<2x16x128xf32>
      tpu.vector_store %arg14[%c0_59, %c0_60, %c0_61], %159 {strides = array<i32>} : memref<2x16x128xf32, #tpu.memory_space<vmem>>, vector<2x16x128xf32>,
    } else {
    }
    return
  }
  func.func @transform_0(%arg0: i32, %arg1: i32) -> (i32, i32, i32) {
    %c0_i32 = arith.constant 0 : i32
    %c0_i32_0 = arith.constant 0 : i32
    %c0_i32_1 = arith.constant 0 : i32
    return %arg0, %c0_i32, %c0_i32_0 : i32, i32, i32
  }
  func.func @transform_1(%arg0: i32, %arg1: i32) -> (i32, i32) {
    %c0_i32 = arith.constant 0 : i32
    %c0_i32_0 = arith.constant 0 : i32
    %c0_i32_1 = arith.constant 0 : i32
    return %c0_i32, %c0_i32_0 : i32, i32
  }
  func.func @transform_2(%arg0: i32, %arg1: i32) -> (i32, i32, i32) {
    %c0_i32 = arith.constant 0 : i32
    %c0_i32_0 = arith.constant 0 : i32
    %c0_i32_1 = arith.constant 0 : i32
    %c0_i32_2 = arith.constant 0 : i32
    return %c0_i32, %c0_i32_0, %c0_i32_1 : i32, i32, i32
  }
  func.func @transform_3(%arg0: i32, %arg1: i32) -> (i32, i32, i32) {
    %c0_i32 = arith.constant 0 : i32
    %c0_i32_0 = arith.constant 0 : i32
    %c0_i32_1 = arith.constant 0 : i32
    %c0_i32_2 = arith.constant 0 : i32
    return %c0_i32, %c0_i32_0, %c0_i32_1 : i32, i32, i32
  }
  func.func @transform_4(%arg0: i32, %arg1: i32) -> (i32, i32, i32) {
    %c0_i32 = arith.constant 0 : i32
    %c0_i32_0 = arith.constant 0 : i32
    %c0_i32_1 = arith.constant 0 : i32
    %c0_i32_2 = arith.constant 0 : i32
    return %c0_i32, %c0_i32_0, %c0_i32_1 : i32, i32, i32
  }
  func.func @transform_5(%arg0: i32, %arg1: i32) -> (i32, i32, i32) {
    %c0_i32 = arith.constant 0 : i32
    %c0_i32_0 = arith.constant 0 : i32
    %c0_i32_1 = arith.constant 0 : i32
    %c0_i32_2 = arith.constant 0 : i32
    return %c0_i32, %c0_i32_0, %c0_i32_1 : i32, i32, i32
  }
  func.func @transform_6(%arg0: i32, %arg1: i32) -> (i32, i32, i32) {
    %c0_i32 = arith.constant 0 : i32
    %c0_i32_0 = arith.constant 0 : i32
    %c0_i32_1 = arith.constant 0 : i32
    %c0_i32_2 = arith.constant 0 : i32
    return %c0_i32, %c0_i32_0, %c0_i32_1 : i32, i32, i32
  }
  func.func @transform_7(%arg0: i32, %arg1: i32) -> (i32, i32, i32) {
    %c0_i32 = arith.constant 0 : i32
    %c0_i32_0 = arith.constant 0 : i32
    %c0_i32_1 = arith.constant 0 : i32
    %c0_i32_2 = arith.constant 0 : i32
    return %c0_i32, %c0_i32_0, %c0_i32_1 : i32, i32, i32
  }
  func.func @transform_8(%arg0: i32, %arg1: i32) -> (i32, i32, i32) {
    %c0_i32 = arith.constant 0 : i32
    %c0_i32_0 = arith.constant 0 : i32
    %c0_i32_1 = arith.constant 0 : i32
    return %arg1, %c0_i32, %c0_i32_0 : i32, i32, i32
  }
  func.func @transform_9(%arg0: i32, %arg1: i32) -> (i32, i32, i32) {
    %c0_i32 = arith.constant 0 : i32
    %c0_i32_0 = arith.constant 0 : i32
    %c0_i32_1 = arith.constant 0 : i32
    return %arg1, %c0_i32, %c0_i32_0 : i32, i32, i32
  }
  func.func @transform_10(%arg0: i32, %arg1: i32) -> (i32, i32, i32) {
    %c0_i32 = arith.constant 0 : i32
    %c0_i32_0 = arith.constant 0 : i32
    %c0_i32_1 = arith.constant 0 : i32
    return %arg1, %c0_i32, %c0_i32_0 : i32, i32, i32
  }
  func.func @transform_11(%arg0: i32, %arg1: i32) -> (i32, i32, i32) {
    %c0_i32 = arith.constant 0 : i32
    %c0_i32_0 = arith.constant 0 : i32
    %c0_i32_1 = arith.constant 0 : i32
    return %arg1, %c0_i32, %c0_i32_0 : i32, i32, i32
  }
  func.func @transform_12(%arg0: i32, %arg1: i32) -> (i32, i32, i32) {
    %c0_i32 = arith.constant 0 : i32
    %c0_i32_0 = arith.constant 0 : i32
    %c0_i32_1 = arith.constant 0 : i32
    return %arg0, %c0_i32, %c0_i32_0 : i32, i32, i32
  }
}

</mosaic_0001>

<llo_original>
// kernel: tpu_custom_call.1
$region0: #{tpu_custom_call.1}
  #allocation0 [shape = 'u32[]', space=smem, size = 0x4, offset = 0x4, fixed_abs, tag = 'smem constant byte address 0x4 - core index']
  #allocation1 [shape = 'u32[144,128]{1,0:T(1,128)}', space=vmem, size = 0x12000, scoped, tag = 'internal scratch']
  #allocation2 [shape = 'f32[32,128]{1,0:T(8,128)}', space=vmem, size = 0x4000, scoped, tag = 'scratch operand']
  #allocation3 [shape = 'f32[16,16]{1,0:T(8,128)}', space=vmem, size = 0x2000, scoped, tag = 'scratch operand']
  %s0 = inlined_call_operand.hbm [shape: f32[2,16,128], index: 0, kind: input, shape index: {}]
  %s1 = inlined_call_operand.hbm [shape: f32[1,128], index: 1, kind: input, shape index: {}]
  %s2 = inlined_call_operand.hbm [shape: f32[2,1,128], index: 2, kind: input, shape index: {}]
  %s3 = inlined_call_operand.vmem [shape: f32[2,1,384], index: 3, kind: input, shape index: {}]
  %s4 = inlined_call_operand.hbm [shape: f32[2,1,128], index: 4, kind: input, shape index: {}]
  %s5 = inlined_call_operand.vmem [shape: f32[2,1,128], index: 5, kind: input, shape index: {}]
  %s6 = inlined_call_operand.vmem [shape: f32[2,1,512], index: 6, kind: input, shape index: {}]
  %s7 = inlined_call_operand.vmem [shape: f32[2,1,128], index: 7, kind: input, shape index: {}]
  %s8 = inlined_call_operand.hbm [shape: bf16[2,128,384], index: 8, kind: input, shape index: {}]
  %s9 = inlined_call_operand.hbm [shape: bf16[2,128,128], index: 9, kind: input, shape index: {}]
  %s10 = inlined_call_operand.hbm [shape: bf16[2,128,512], index: 10, kind: input, shape index: {}]
  %s11 = inlined_call_operand.hbm [shape: bf16[2,512,128], index: 11, kind: input, shape index: {}]
  %s12 = inlined_call_operand.hbm [shape: f32[2,16,128], index: 12, kind: output, shape index: {}]
  %s13 = sld [smem:[#allocation0]]
  $region121: #{tpu_custom_call.1} parent=0
    _
  %s15 = ssub.s32 1, %s13
  %s16 = scalar_select 0, %s15, %s13
  $region1: #{tpu_custom_call.1} parent=0
    #allocation4 [shape = 'u8[16384]{0}', space=vmem, size = 0x4000, scoped, tag = 'input window, operand 0, single buffered']
    #allocation5 [shape = 's32[2]{0}', space=sflag, size = 0x8, scoped, tag = 'scoped memory for tpu_custom_call.1']
    #allocation6 [shape = 's32[2]{0}', space=sflag, size = 0x8, scoped, tag = 'scoped memory for tpu_custom_call.1']
    #allocation7 [shape = 'u8[512]{0}', space=vmem, size = 0x400, scoped, tag = 'input window, operand 1, single buffered']
    #allocation8 [shape = 's32[1]{0}', space=sflag, size = 0x4, scoped, tag = 'scoped memory for tpu_custom_call.1']
    #allocation9 [shape = 'u8[1024]{0}', space=vmem, size = 0x400, scoped, tag = 'input window, operand 2, single buffered']
    #allocation10 [shape = 'u8[1024]{0}', space=vmem, size = 0x400, scoped, tag = 'input window, operand 4, single buffered']
    #allocation11 [shape = 's32[1]{0}', space=sflag, size = 0x4, scoped, tag = 'scoped memory for tpu_custom_call.1']
    #allocation12 [shape = 'u8[196608]{0}', space=vmem, size = 0x30000, scoped, tag = 'input window, operand 8']
    #allocation13 [shape = 'u8[65536]{0}', space=vmem, size = 0x10000, scoped, tag = 'input window, operand 9']
    #allocation14 [shape = 'u8[262144]{0}', space=vmem, size = 0x40000, scoped, tag = 'input window, operand 10']
    #allocation15 [shape = 'u8[262144]{0}', space=vmem, size = 0x40000, scoped, tag = 'input window, operand 11']
    #allocation16 [shape = 'u8[16384]{0}', space=vmem, size = 0x4000, scoped, tag = 'output window, operand 0, single buffered']
    %17 = vsyncpa [#allocation5], 0
    %18 = vsyncpa [#allocation8], 0
    %19 = vsyncpa [#allocation11], 0
    %20 = vsyncpa [#allocation6], 0
    loop: start=0, step=1, limit=4
    $region2: #{tpu_custom_call.1} parent=1 // loop_pre_header
      _
    $region3: #{tpu_custom_call.1} parent=1 // loop_header
      %s22 = sphi 0, %s26
      %p23 = scmp.ge.s32.totalorder %s22, 4
      %s29 = sphi 0, %s41
      %s30 = sphi 0, %s37
      %s31 = sphi 0, %s29
      %s32 = sphi 0, %s30
      %s33 = sphi 0, %s31
      %s34 = sphi 0, %s32
      %s44 = sphi 0, %s46
      %s47 = sphi 0, %s44
      %s48 = sphi 0, %s47
      %s64 = sphi 0, %s48
      %s68 = sphi 0, %s68
      %s70 = sphi 0, %s68
      %s71 = sphi 0, %s70
      %s85 = sphi 0, %s71
      %s89 = sphi 0, %s89
      %s91 = sphi 0, %s89
      %s92 = sphi 0, %s91
      %s106 = sphi 0, %s92
      %s110 = sphi 0, %s110
      %s112 = sphi 0, %s110
      %s113 = sphi 0, %s112
      %s127 = sphi 0, %s113
      %s131 = sphi 0, %s131
      %s133 = sphi 0, %s131
      %s134 = sphi 0, %s133
      %s148 = sphi 0, %s134
      %s152 = sphi 0, %s152
      %s154 = sphi 0, %s152
      %s155 = sphi 0, %s154
      %s169 = sphi 0, %s155
      %s173 = sphi 0, %s173
      %s175 = sphi 0, %s173
      %s176 = sphi 0, %s175
      %s190 = sphi 0, %s176
      %s194 = sphi 0, %s194
      %s196 = sphi 0, %s194
      %s197 = sphi 0, %s196
      %s211 = sphi 0, %s197
      %s217 = sphi 0, %s219
      %s220 = sphi 0, %s217
      %s221 = sphi 0, %s220
      %s237 = sphi 0, %s221
      %s243 = sphi 0, %s245
      %s246 = sphi 0, %s243
      %s247 = sphi 0, %s246
      %s263 = sphi 0, %s247
      %s269 = sphi 0, %s271
      %s272 = sphi 0, %s269
      %s273 = sphi 0, %s272
      %s289 = sphi 0, %s273
      %s295 = sphi 0, %s297
      %s298 = sphi 0, %s295
      %s299 = sphi 0, %s298
      %s315 = sphi 0, %s299
      %s321 = sphi 0, %s323
      %s324 = sphi 0, %s321
      %s325 = sphi 0, %s324
      %s341 = sphi 0, %s325
    $region4: #{tpu_custom_call.1} parent=1 // loop_header_branch
      %25 = sbr.rel (%p23) target = $region8
    $region5: #{tpu_custom_call.1} parent=1 // loop_body
      %s27 = ssub.s32 %s22, 1
      %s28 = ssub.s32 %s22, 2
      %s35 = sadd.s32 1, %s30
      %p36 = scmp.ge.s32.totalorder %s35, 2
      %s37 = scalar_select %p36, 0, %s35
      %s38 = sadd.s32 1, %s29
      %s39 = scalar_select %p36, %s38, %s29
      %p40 = scmp.ge.s32.totalorder %s39, 1
      %s41 = scalar_select %p40, 0, %s39
      %s42 = ssub.s32 %s29, %s41
      %p43 = scmp.eq.s32.totalorder %s42, 0
      %s45 = sadd.s32 %s44, 1
      %s46 = scalar_select %p43, %s44, %s45
      %p49 = pneg %p43
      %p50 = scmp.eq.s32.totalorder %s22, 1
      %p51 = por %p49, %p50
      %p52 = scmp.ne.s32.totalorder %s44, %s47
      %p53 = scmp.eq.s32.totalorder %s22, 0
      %p54 = por %p52, %p53
      %p55 = scmp.ne.s32.totalorder %s44, %s47
      %p56 = scmp.eq.s32.totalorder %s27, 1
      %p57 = por %p55, %p56
      %p58 = scmp.ne.s32.totalorder %s47, %s48
      %p59 = scmp.eq.s32.totalorder %s27, 0
      %p60 = por %p58, %p59
      %p61 = scmp.ne.s32.totalorder %s47, %s48
      %p62 = scmp.eq.s32.totalorder %s28, 1
      %p63 = por %p61, %p62
      %p65 = scmp.ne.s32.totalorder %s48, %s64
      %p66 = scmp.eq.s32.totalorder %s28, 0
      %p67 = por %p65, %p66
      %s69 = sadd.s32 %s68, 1
      %p72 = scmp.eq.s32.totalorder %s22, 1
      %p73 = scmp.ne.s32.totalorder %s68, %s70
      %p74 = scmp.eq.s32.totalorder %s22, 0
      %p75 = por %p73, %p74
      %p76 = scmp.ne.s32.totalorder %s68, %s70
      %p77 = scmp.eq.s32.totalorder %s27, 1
      %p78 = por %p76, %p77
      %p79 = scmp.ne.s32.totalorder %s70, %s71
      %p80 = scmp.eq.s32.totalorder %s27, 0
      %p81 = por %p79, %p80
      %p82 = scmp.ne.s32.totalorder %s70, %s71
      %p83 = scmp.eq.s32.totalorder %s28, 1
      %p84 = por %p82, %p83
      %p86 = scmp.ne.s32.totalorder %s71, %s85
      %p87 = scmp.eq.s32.totalorder %s28, 0
      %p88 = por %p86, %p87
      %s90 = sadd.s32 %s89, 1
      %p93 = scmp.eq.s32.totalorder %s22, 1
      %p94 = scmp.ne.s32.totalorder %s89, %s91
      %p95 = scmp.eq.s32.totalorder %s22, 0
      %p96 = por %p94, %p95
      %p97 = scmp.ne.s32.totalorder %s89, %s91
      %p98 = scmp.eq.s32.totalorder %s27, 1
      %p99 = por %p97, %p98
      %p100 = scmp.ne.s32.totalorder %s91, %s92
      %p101 = scmp.eq.s32.totalorder %s27, 0
      %p102 = por %p100, %p101
      %p103 = scmp.ne.s32.totalorder %s91, %s92
      %p104 = scmp.eq.s32.totalorder %s28, 1
      %p105 = por %p103, %p104
      %p107 = scmp.ne.s32.totalorder %s92, %s106
      %p108 = scmp.eq.s32.totalorder %s28, 0
      %p109 = por %p107, %p108
      %s111 = sadd.s32 %s110, 1
      %p114 = scmp.eq.s32.totalorder %s22, 1
      %p115 = scmp.ne.s32.totalorder %s110, %s112
      %p116 = scmp.eq.s32.totalorder %s22, 0
      %p117 = por %p115, %p116
      %p118 = scmp.ne.s32.totalorder %s110, %s112
      %p119 = scmp.eq.s32.totalorder %s27, 1
      %p120 = por %p118, %p119
      %p121 = scmp.ne.s32.totalorder %s112, %s113
      %p122 = scmp.eq.s32.totalorder %s27, 0
      %p123 = por %p121, %p122
      %p124 = scmp.ne.s32.totalorder %s112, %s113
      %p125 = scmp.eq.s32.totalorder %s28, 1
      %p126 = por %p124, %p125
      %p128 = scmp.ne.s32.totalorder %s113, %s127
      %p129 = scmp.eq.s32.totalorder %s28, 0
      %p130 = por %p128, %p129
      %s132 = sadd.s32 %s131, 1
      %p135 = scmp.eq.s32.totalorder %s22, 1
      %p136 = scmp.ne.s32.totalorder %s131, %s133
      %p137 = scmp.eq.s32.totalorder %s22, 0
      %p138 = por %p136, %p137
      %p139 = scmp.ne.s32.totalorder %s131, %s133
      %p140 = scmp.eq.s32.totalorder %s27, 1
      %p141 = por %p139, %p140
      %p142 = scmp.ne.s32.totalorder %s133, %s134
      %p143 = scmp.eq.s32.totalorder %s27, 0
      %p144 = por %p142, %p143
      %p145 = scmp.ne.s32.totalorder %s133, %s134
      %p146 = scmp.eq.s32.totalorder %s28, 1
      %p147 = por %p145, %p146
      %p149 = scmp.ne.s32.totalorder %s134, %s148
      %p150 = scmp.eq.s32.totalorder %s28, 0
      %p151 = por %p149, %p150
      %s153 = sadd.s32 %s152, 1
      %p156 = scmp.eq.s32.totalorder %s22, 1
      %p157 = scmp.ne.s32.totalorder %s152, %s154
      %p158 = scmp.eq.s32.totalorder %s22, 0
      %p159 = por %p157, %p158
      %p160 = scmp.ne.s32.totalorder %s152, %s154
      %p161 = scmp.eq.s32.totalorder %s27, 1
      %p162 = por %p160, %p161
      %p163 = scmp.ne.s32.totalorder %s154, %s155
      %p164 = scmp.eq.s32.totalorder %s27, 0
      %p165 = por %p163, %p164
      %p166 = scmp.ne.s32.totalorder %s154, %s155
      %p167 = scmp.eq.s32.totalorder %s28, 1
      %p168 = por %p166, %p167
      %p170 = scmp.ne.s32.totalorder %s155, %s169
      %p171 = scmp.eq.s32.totalorder %s28, 0
      %p172 = por %p170, %p171
      %s174 = sadd.s32 %s173, 1
      %p177 = scmp.eq.s32.totalorder %s22, 1
      %p178 = scmp.ne.s32.totalorder %s173, %s175
      %p179 = scmp.eq.s32.totalorder %s22, 0
      %p180 = por %p178, %p179
      %p181 = scmp.ne.s32.totalorder %s173, %s175
      %p182 = scmp.eq.s32.totalorder %s27, 1
      %p183 = por %p181, %p182
      %p184 = scmp.ne.s32.totalorder %s175, %s176
      %p185 = scmp.eq.s32.totalorder %s27, 0
      %p186 = por %p184, %p185
      %p187 = scmp.ne.s32.totalorder %s175, %s176
      %p188 = scmp.eq.s32.totalorder %s28, 1
      %p189 = por %p187, %p188
      %p191 = scmp.ne.s32.totalorder %s176, %s190
      %p192 = scmp.eq.s32.totalorder %s28, 0
      %p193 = por %p191, %p192
      %s195 = sadd.s32 %s194, 1
      %p198 = scmp.eq.s32.totalorder %s22, 1
      %p199 = scmp.ne.s32.totalorder %s194, %s196
      %p200 = scmp.eq.s32.totalorder %s22, 0
      %p201 = por %p199, %p200
      %p202 = scmp.ne.s32.totalorder %s194, %s196
      %p203 = scmp.eq.s32.totalorder %s27, 1
      %p204 = por %p202, %p203
      %p205 = scmp.ne.s32.totalorder %s196, %s197
      %p206 = scmp.eq.s32.totalorder %s27, 0
      %p207 = por %p205, %p206
      %p208 = scmp.ne.s32.totalorder %s196, %s197
      %p209 = scmp.eq.s32.totalorder %s28, 1
      %p210 = por %p208, %p209
      %p212 = scmp.ne.s32.totalorder %s197, %s211
      %p213 = scmp.eq.s32.totalorder %s28, 0
      %p214 = por %p212, %p213
      %s215 = ssub.s32 %s30, %s37
      %p216 = scmp.eq.s32.totalorder %s215, 0
      %s218 = sadd.s32 %s217, 1
      %s219 = scalar_select %p216, %s217, %s218
      %p222 = pneg %p216
      %p223 = scmp.eq.s32.totalorder %s22, 1
      %p224 = por %p222, %p223
      %p225 = scmp.ne.s32.totalorder %s217, %s220
      %p226 = scmp.eq.s32.totalorder %s22, 0
      %p227 = por %p225, %p226
      %p228 = scmp.ne.s32.totalorder %s217, %s220
      %p229 = scmp.eq.s32.totalorder %s27, 1
      %p230 = por %p228, %p229
      %p231 = scmp.ne.s32.totalorder %s220, %s221
      %p232 = scmp.eq.s32.totalorder %s27, 0
      %p233 = por %p231, %p232
      %p234 = scmp.ne.s32.totalorder %s220, %s221
      %p235 = scmp.eq.s32.totalorder %s28, 1
      %p236 = por %p234, %p235
      %p238 = scmp.ne.s32.totalorder %s221, %s237
      %p239 = scmp.eq.s32.totalorder %s28, 0
      %p240 = por %p238, %p239
      %s241 = ssub.s32 %s30, %s37
      %p242 = scmp.eq.s32.totalorder %s241, 0
      %s244 = sadd.s32 %s243, 1
      %s245 = scalar_select %p242, %s243, %s244
      %p248 = pneg %p242
      %p249 = scmp.eq.s32.totalorder %s22, 1
      %p250 = por %p248, %p249
      %p251 = scmp.ne.s32.totalorder %s243, %s246
      %p252 = scmp.eq.s32.totalorder %s22, 0
      %p253 = por %p251, %p252
      %p254 = scmp.ne.s32.totalorder %s243, %s246
      %p255 = scmp.eq.s32.totalorder %s27, 1
      %p256 = por %p254, %p255
      %p257 = scmp.ne.s32.totalorder %s246, %s247
      %p258 = scmp.eq.s32.totalorder %s27, 0
      %p259 = por %p257, %p258
      %p260 = scmp.ne.s32.totalorder %s246, %s247
      %p261 = scmp.eq.s32.totalorder %s28, 1
      %p262 = por %p260, %p261
      %p264 = scmp.ne.s32.totalorder %s247, %s263
      %p265 = scmp.eq.s32.totalorder %s28, 0
      %p266 = por %p264, %p265
      %s267 = ssub.s32 %s30, %s37
      %p268 = scmp.eq.s32.totalorder %s267, 0
      %s270 = sadd.s32 %s269, 1
      %s271 = scalar_select %p268, %s269, %s270
      %p274 = pneg %p268
      %p275 = scmp.eq.s32.totalorder %s22, 1
      %p276 = por %p274, %p275
      %p277 = scmp.ne.s32.totalorder %s269, %s272
      %p278 = scmp.eq.s32.totalorder %s22, 0
      %p279 = por %p277, %p278
      %p280 = scmp.ne.s32.totalorder %s269, %s272
      %p281 = scmp.eq.s32.totalorder %s27, 1
      %p282 = por %p280, %p281
      %p283 = scmp.ne.s32.totalorder %s272, %s273
      %p284 = scmp.eq.s32.totalorder %s27, 0
      %p285 = por %p283, %p284
      %p286 = scmp.ne.s32.totalorder %s272, %s273
      %p287 = scmp.eq.s32.totalorder %s28, 1
      %p288 = por %p286, %p287
      %p290 = scmp.ne.s32.totalorder %s273, %s289
      %p291 = scmp.eq.s32.totalorder %s28, 0
      %p292 = por %p290, %p291
      %s293 = ssub.s32 %s30, %s37
      %p294 = scmp.eq.s32.totalorder %s293, 0
      %s296 = sadd.s32 %s295, 1
      %s297 = scalar_select %p294, %s295, %s296
      %p300 = pneg %p294
      %p301 = scmp.eq.s32.totalorder %s22, 1
      %p302 = por %p300, %p301
      %p303 = scmp.ne.s32.totalorder %s295, %s298
      %p304 = scmp.eq.s32.totalorder %s22, 0
      %p305 = por %p303, %p304
      %p306 = scmp.ne.s32.totalorder %s295, %s298
      %p307 = scmp.eq.s32.totalorder %s27, 1
      %p308 = por %p306, %p307
      %p309 = scmp.ne.s32.totalorder %s298, %s299
      %p310 = scmp.eq.s32.totalorder %s27, 0
      %p311 = por %p309, %p310
      %p312 = scmp.ne.s32.totalorder %s298, %s299
      %p313 = scmp.eq.s32.totalorder %s28, 1
      %p314 = por %p312, %p313
      %p316 = scmp.ne.s32.totalorder %s299, %s315
      %p317 = scmp.eq.s32.totalorder %s28, 0
      %p318 = por %p316, %p317
      %s319 = ssub.s32 %s29, %s41
      %p320 = scmp.eq.s32.totalorder %s319, 0
      %s322 = sadd.s32 %s321, 1
      %s323 = scalar_select %p320, %s321, %s322
      %p326 = pneg %p320
      %p327 = scmp.eq.s32.totalorder %s22, 1
      %p328 = por %p326, %p327
      %p329 = scmp.ne.s32.totalorder %s321, %s324
      %p330 = scmp.eq.s32.totalorder %s22, 0
      %p331 = por %p329, %p330
      %p332 = scmp.ne.s32.totalorder %s321, %s324
      %p333 = scmp.eq.s32.totalorder %s27, 1
      %p334 = por %p332, %p333
      %p335 = scmp.ne.s32.totalorder %s324, %s325
      %p336 = scmp.eq.s32.totalorder %s27, 0
      %p337 = por %p335, %p336
      %p338 = scmp.ne.s32.totalorder %s324, %s325
      %p339 = scmp.eq.s32.totalorder %s28, 1
      %p340 = por %p338, %p339
      %p342 = scmp.ne.s32.totalorder %s325, %s341
      %p343 = scmp.eq.s32.totalorder %s28, 0
      %p344 = por %p342, %p343
      %p345 = scmp.le.s32.totalorder 1, %s22
      %p346 = scmp.lt.s32.totalorder %s22, 3
      %p347 = pnand %p345, %p346
      %p348 = pneg %p347
      // Predicated region
      $region9: #{tpu_custom_call.1} parent=5 // pred_check
        _
      $region10: #{tpu_custom_call.1} parent=5 // pred_check_branch
        %350 = sbr.rel (%p347) target = $region12
      $region11: #{tpu_custom_call.1} parent=5 // pred_region
        %s351 = ssub.s32 %s22, 1
        // Predicated region
        $region13: #{tpu_custom_call.1} parent=11 // pred_check
          %p352 = pneg %p60
        $region14: #{tpu_custom_call.1} parent=11 // pred_check_branch
          %354 = sbr.rel (%p352) target = $region16
        $region15: #{tpu_custom_call.1} parent=11 // pred_region
          %s355 = smul.u32 2, %s31
          %s357 = ssub.s32 512, 512
          %358 = vsyncadd [#allocation5], %s357
          %s359 = smul.addr %s355, 2
          %s360 = smul.addr %s359, 128
          %s361 = scalar_lea.hbm %s0, %s360
          %s362 = sshll.u32 [#allocation4], 4
          %s363 = int_to_ptr.vmem [resolvable:$true] %s362
          %368 = dma.hbm_to_vmem [thread:$0]  %s361, 512, %s363, [#allocation5], 128, 128, 8
        $region16: #{tpu_custom_call.1} parent=11 // pred_fallthru
          _
        // Predicated region
        $region17: #{tpu_custom_call.1} parent=11 // pred_check
          %p369 = pneg %p81
        $region18: #{tpu_custom_call.1} parent=11 // pred_check_branch
          %371 = sbr.rel (%p369) target = $region20
        $region19: #{tpu_custom_call.1} parent=11 // pred_region
          %s373 = ssub.s32 16, 16
          %374 = vsyncadd [#allocation8], %s373
          %s376 = sshll.u32 [#allocation7], 4
          %s377 = int_to_ptr.vmem [resolvable:$true] %s376
          %379 = dma.hbm_to_vmem [thread:$0]  %s1, 16, %s377, [#allocation8]
        $region20: #{tpu_custom_call.1} parent=11 // pred_fallthru
          _
        // Predicated region
        $region21: #{tpu_custom_call.1} parent=11 // pred_check
          %p380 = pneg %p102
        $region22: #{tpu_custom_call.1} parent=11 // pred_check_branch
          %382 = sbr.rel (%p380) target = $region24
        $region23: #{tpu_custom_call.1} parent=11 // pred_region
          %s384 = ssub.s32 32, 32
          %385 = vsyncadd [#allocation8], %s384
          %s386 = sshll.u32 [#allocation9], 4
          %s387 = int_to_ptr.vmem [resolvable:$true] %s386
          %392 = dma.hbm_to_vmem [thread:$0]  %s2, 32, %s387, [#allocation8], 16, 16, 1
        $region24: #{tpu_custom_call.1} parent=11 // pred_fallthru
          _
        // Predicated region
        $region25: #{tpu_custom_call.1} parent=11 // pred_check
          %p393 = pneg %p123
        $region26: #{tpu_custom_call.1} parent=11 // pred_check_branch
          %395 = sbr.rel (%p393) target = $region28
        $region27: #{tpu_custom_call.1} parent=11 // pred_region
          _
        $region28: #{tpu_custom_call.1} parent=11 // pred_fallthru
          _
        // Predicated region
        $region29: #{tpu_custom_call.1} parent=11 // pred_check
          %p396 = pneg %p144
        $region30: #{tpu_custom_call.1} parent=11 // pred_check_branch
          %398 = sbr.rel (%p396) target = $region32
        $region31: #{tpu_custom_call.1} parent=11 // pred_region
          %s400 = ssub.s32 32, 32
          %401 = vsyncadd [#allocation11], %s400
          %s402 = sshll.u32 [#allocation10], 4
          %s403 = int_to_ptr.vmem [resolvable:$true] %s402
          %408 = dma.hbm_to_vmem [thread:$0]  %s4, 32, %s403, [#allocation11], 16, 16, 1
        $region32: #{tpu_custom_call.1} parent=11 // pred_fallthru
          _
        // Predicated region
        $region33: #{tpu_custom_call.1} parent=11 // pred_check
          %p409 = pneg %p165
        $region34: #{tpu_custom_call.1} parent=11 // pred_check_branch
          %411 = sbr.rel (%p409) target = $region36
        $region35: #{tpu_custom_call.1} parent=11 // pred_region
          _
        $region36: #{tpu_custom_call.1} parent=11 // pred_fallthru
          _
        // Predicated region
        $region37: #{tpu_custom_call.1} parent=11 // pred_check
          %p412 = pneg %p186
        $region38: #{tpu_custom_call.1} parent=11 // pred_check_branch
          %414 = sbr.rel (%p412) target = $region40
        $region39: #{tpu_custom_call.1} parent=11 // pred_region
          _
        $region40: #{tpu_custom_call.1} parent=11 // pred_fallthru
          _
        // Predicated region
        $region41: #{tpu_custom_call.1} parent=11 // pred_check
          %p415 = pneg %p207
        $region42: #{tpu_custom_call.1} parent=11 // pred_check_branch
          %417 = sbr.rel (%p415) target = $region44
        $region43: #{tpu_custom_call.1} parent=11 // pred_region
          _
        $region44: #{tpu_custom_call.1} parent=11 // pred_fallthru
          _
      $region12: #{tpu_custom_call.1} parent=5 // pred_fallthru
        _
      %p418 = scmp.lt.s32.totalorder %s22, 2
      // Predicated region
      $region45: #{tpu_custom_call.1} parent=5 // pred_check
        %p419 = pneg %p418
      $region46: #{tpu_custom_call.1} parent=5 // pred_check_branch
        %421 = sbr.rel (%p419) target = $region48
      $region47: #{tpu_custom_call.1} parent=5 // pred_region
        // Predicated region
        $region49: #{tpu_custom_call.1} parent=47 // pred_check
          %p422 = pneg %p227
        $region50: #{tpu_custom_call.1} parent=47 // pred_check_branch
          %424 = sbr.rel (%p422) target = $region52
        $region51: #{tpu_custom_call.1} parent=47 // pred_region
          %s425 = sand.u32 %s22, 1
          %s426 = scalar_lea.sflag [#allocation5], %s425
          %s427 = sand.u32 %s217, 1
          %s428 = smul.addr %s427, 192
          %s429 = scalar_lea.vmem [#allocation12], %s428
          %s431 = ssub.s32 3072, 3072
          %432 = vsyncadd %s426, %s431
          %s433 = smul.addr %s30, 48
          %s434 = smul.addr %s433, 64
          %s435 = scalar_lea.hbm %s8, %s434
          %s436 = sshll.u32 %s429, 4
          %s437 = int_to_ptr.vmem [resolvable:$true] %s436
          %442 = dma.hbm_to_vmem [thread:$0]  %s435, 3072, %s437, %s426, 192, 192, 12
        $region52: #{tpu_custom_call.1} parent=47 // pred_fallthru
          _
        // Predicated region
        $region53: #{tpu_custom_call.1} parent=47 // pred_check
          %p443 = pneg %p253
        $region54: #{tpu_custom_call.1} parent=47 // pred_check_branch
          %445 = sbr.rel (%p443) target = $region56
        $region55: #{tpu_custom_call.1} parent=47 // pred_region
          %s446 = sand.u32 %s22, 1
          %s447 = scalar_lea.sflag [#allocation5], %s446
          %s448 = sand.u32 %s243, 1
          %s449 = smul.addr %s448, 64
          %s450 = scalar_lea.vmem [#allocation13], %s449
          %s452 = ssub.s32 1024, 1024
          %453 = vsyncadd %s447, %s452
          %s454 = smul.addr %s30, 16
          %s455 = smul.addr %s454, 64
          %s456 = scalar_lea.hbm %s9, %s455
          %s457 = sshll.u32 %s450, 4
          %s458 = int_to_ptr.vmem [resolvable:$true] %s457
          %463 = dma.hbm_to_vmem [thread:$0]  %s456, 1024, %s458, %s447, 64, 64, 4
        $region56: #{tpu_custom_call.1} parent=47 // pred_fallthru
          _
        // Predicated region
        $region57: #{tpu_custom_call.1} parent=47 // pred_check
          %p464 = pneg %p279
        $region58: #{tpu_custom_call.1} parent=47 // pred_check_branch
          %466 = sbr.rel (%p464) target = $region60
        $region59: #{tpu_custom_call.1} parent=47 // pred_region
          %s467 = sand.u32 %s22, 1
          %s468 = scalar_lea.sflag [#allocation5], %s467
          %s469 = sand.u32 %s269, 1
          %s470 = smul.addr %s469, 256
          %s471 = scalar_lea.vmem [#allocation14], %s470
          %s473 = ssub.s32 4096, 4096
          %474 = vsyncadd %s468, %s473
          %s475 = smul.addr %s30, 64
          %s476 = smul.addr %s475, 64
          %s477 = scalar_lea.hbm %s10, %s476
          %s478 = sshll.u32 %s471, 4
          %s479 = int_to_ptr.vmem [resolvable:$true] %s478
          %484 = dma.hbm_to_vmem [thread:$0]  %s477, 4096, %s479, %s468, 256, 256, 16
        $region60: #{tpu_custom_call.1} parent=47 // pred_fallthru
          _
        // Predicated region
        $region61: #{tpu_custom_call.1} parent=47 // pred_check
          %p485 = pneg %p305
        $region62: #{tpu_custom_call.1} parent=47 // pred_check_branch
          %487 = sbr.rel (%p485) target = $region64
        $region63: #{tpu_custom_call.1} parent=47 // pred_region
          %s488 = sand.u32 %s22, 1
          %s489 = scalar_lea.sflag [#allocation5], %s488
          %s490 = sand.u32 %s295, 1
          %s491 = smul.addr %s490, 256
          %s492 = scalar_lea.vmem [#allocation15], %s491
          %s494 = ssub.s32 4096, 4096
          %495 = vsyncadd %s489, %s494
          %s496 = smul.addr %s30, 64
          %s497 = smul.addr %s496, 64
          %s498 = scalar_lea.hbm %s11, %s497
          %s499 = sshll.u32 %s492, 4
          %s500 = int_to_ptr.vmem [resolvable:$true] %s499
          %505 = dma.hbm_to_vmem [thread:$0]  %s498, 4096, %s500, %s489, 64, 64, 4
        $region64: #{tpu_custom_call.1} parent=47 // pred_fallthru
          _
      $region48: #{tpu_custom_call.1} parent=5 // pred_fallthru
        _
      %p506 = scmp.le.s32.totalorder 1, %s22
      %p507 = scmp.lt.s32.totalorder %s22, 3
      %p508 = pnand %p506, %p507
      %p509 = pneg %p508
      // Predicated region
      $region65: #{tpu_custom_call.1} parent=5 // pred_check
        _
      $region66: #{tpu_custom_call.1} parent=5 // pred_check_branch
        %511 = sbr.rel (%p508) target = $region68
      $region67: #{tpu_custom_call.1} parent=5 // pred_region
        %s512 = ssub.s32 %s22, 1
        // Predicated region
        $region69: #{tpu_custom_call.1} parent=67 // pred_check
          %p513 = pneg %p60
        $region70: #{tpu_custom_call.1} parent=67 // pred_check_branch
          %515 = sbr.rel (%p513) target = $region72
        $region71: #{tpu_custom_call.1} parent=67 // pred_region
          %516 = dma.done [#allocation5], 512
        $region72: #{tpu_custom_call.1} parent=67 // pred_fallthru
          _
        // Predicated region
        $region73: #{tpu_custom_call.1} parent=67 // pred_check
          %p517 = pneg %p81
        $region74: #{tpu_custom_call.1} parent=67 // pred_check_branch
          %519 = sbr.rel (%p517) target = $region76
        $region75: #{tpu_custom_call.1} parent=67 // pred_region
          %520 = dma.done [#allocation8], 16
        $region76: #{tpu_custom_call.1} parent=67 // pred_fallthru
          _
        // Predicated region
        $region77: #{tpu_custom_call.1} parent=67 // pred_check
          %p521 = pneg %p102
        $region78: #{tpu_custom_call.1} parent=67 // pred_check_branch
          %523 = sbr.rel (%p521) target = $region80
        $region79: #{tpu_custom_call.1} parent=67 // pred_region
          %524 = dma.done [#allocation8], 32
        $region80: #{tpu_custom_call.1} parent=67 // pred_fallthru
          _
        // Predicated region
        $region81: #{tpu_custom_call.1} parent=67 // pred_check
          %p525 = pneg %p144
        $region82: #{tpu_custom_call.1} parent=67 // pred_check_branch
          %527 = sbr.rel (%p525) target = $region84
        $region83: #{tpu_custom_call.1} parent=67 // pred_region
          %528 = dma.done [#allocation11], 32
        $region84: #{tpu_custom_call.1} parent=67 // pred_fallthru
          _
        %s529 = sand.u32 %s27, 1
        %s530 = scalar_lea.sflag [#allocation5], %s529
        %s531 = sand.u32 %s220, 1
        %s532 = smul.addr %s531, 192
        %s533 = scalar_lea.vmem [#allocation12], %s532
        // Predicated region
        $region85: #{tpu_custom_call.1} parent=67 // pred_check
          %p534 = pneg %p233
        $region86: #{tpu_custom_call.1} parent=67 // pred_check_branch
          %536 = sbr.rel (%p534) target = $region88
        $region87: #{tpu_custom_call.1} parent=67 // pred_region
          %537 = dma.done %s530, 3072
        $region88: #{tpu_custom_call.1} parent=67 // pred_fallthru
          _
        %s538 = sand.u32 %s27, 1
        %s539 = scalar_lea.sflag [#allocation5], %s538
        %s540 = sand.u32 %s246, 1
        %s541 = smul.addr %s540, 64
        %s542 = scalar_lea.vmem [#allocation13], %s541
        // Predicated region
        $region89: #{tpu_custom_call.1} parent=67 // pred_check
          %p543 = pneg %p259
        $region90: #{tpu_custom_call.1} parent=67 // pred_check_branch
          %545 = sbr.rel (%p543) target = $region92
        $region91: #{tpu_custom_call.1} parent=67 // pred_region
          %546 = dma.done %s539, 1024
        $region92: #{tpu_custom_call.1} parent=67 // pred_fallthru
          _
        %s547 = sand.u32 %s27, 1
        %s548 = scalar_lea.sflag [#allocation5], %s547
        %s549 = sand.u32 %s272, 1
        %s550 = smul.addr %s549, 256
        %s551 = scalar_lea.vmem [#allocation14], %s550
        // Predicated region
        $region93: #{tpu_custom_call.1} parent=67 // pred_check
          %p552 = pneg %p285
        $region94: #{tpu_custom_call.1} parent=67 // pred_check_branch
          %554 = sbr.rel (%p552) target = $region96
        $region95: #{tpu_custom_call.1} parent=67 // pred_region
          %555 = dma.done %s548, 4096
        $region96: #{tpu_custom_call.1} parent=67 // pred_fallthru
          _
        %s556 = sand.u32 %s27, 1
        %s557 = scalar_lea.sflag [#allocation5], %s556
        %s558 = sand.u32 %s298, 1
        %s559 = smul.addr %s558, 256
        %s560 = scalar_lea.vmem [#allocation15], %s559
        // Predicated region
        $region97: #{tpu_custom_call.1} parent=67 // pred_check
          %p561 = pneg %p311
        $region98: #{tpu_custom_call.1} parent=67 // pred_check_branch
          %563 = sbr.rel (%p561) target = $region100
        $region99: #{tpu_custom_call.1} parent=67 // pred_region
          %564 = dma.done %s557, 4096
        $region100: #{tpu_custom_call.1} parent=67 // pred_fallthru
          _
        %p565 = pneg %p60
        %p566 = pneg %p57
        %p567 = pneg %p81
        %p568 = pneg %p78
        %p569 = pneg %p102
        %p570 = pneg %p99
        %p571 = pneg %p123
        %p572 = pneg %p120
        %p573 = pneg %p144
        %p574 = pneg %p141
        %p575 = pneg %p165
        %p576 = pneg %p162
        %p577 = pneg %p186
        %p578 = pneg %p183
        %p579 = pneg %p207
        %p580 = pneg %p204
        %s581 = sand.u32 %s27, 1
        %s582 = scalar_lea.sflag [#allocation5], %s581
        %s583 = sand.u32 %s220, 1
        %s584 = smul.addr %s583, 192
        %s585 = scalar_lea.vmem [#allocation12], %s584
        %p586 = pneg %p233
        %p587 = pneg %p230
        %s588 = sand.u32 %s27, 1
        %s589 = scalar_lea.sflag [#allocation5], %s588
        %s590 = sand.u32 %s246, 1
        %s591 = smul.addr %s590, 64
        %s592 = scalar_lea.vmem [#allocation13], %s591
        %p593 = pneg %p259
        %p594 = pneg %p256
        %s595 = sand.u32 %s27, 1
        %s596 = scalar_lea.sflag [#allocation5], %s595
        %s597 = sand.u32 %s272, 1
        %s598 = smul.addr %s597, 256
        %s599 = scalar_lea.vmem [#allocation14], %s598
        %p600 = pneg %p285
        %p601 = pneg %p282
        %s602 = sand.u32 %s27, 1
        %s603 = scalar_lea.sflag [#allocation5], %s602
        %s604 = sand.u32 %s298, 1
        %s605 = smul.addr %s604, 256
        %s606 = scalar_lea.vmem [#allocation15], %s605
        %p607 = pneg %p311
        %p608 = pneg %p308
        %p609 = pneg %p337
        %p610 = pneg %p334
        %s611 = smul.u32 2, %s31
        %s612 = smul.u32 2, %s31
        %p614 = scmp.eq.s32.totalorder %s32, 0
        // Predicated region
        $region101: #{tpu_custom_call.1} parent=67 // pred_check
          %p615 = pneg %p614
        $region102: #{tpu_custom_call.1} parent=67 // pred_check_branch
          %617 = sbr.rel (%p615) target = $region104
        $region103: #{tpu_custom_call.1} parent=67 // pred_region
          %v618 = vld [vmem:[#allocation4] sm:$0xff]
          %v619 = vld [vmem:[#allocation4 + $0x8] sm:$0xff]
          %v620 = vld [vmem:[#allocation4 + $0x10] sm:$0xff]
          %v621 = vld [vmem:[#allocation4 + $0x18] sm:$0xff]
          %622 = vst [vmem:[#allocation2] sm:$0xff] %v618
          %623 = vst [vmem:[#allocation2 + $0x8] sm:$0xff] %v619
          %624 = vst [vmem:[#allocation2 + $0x10] sm:$0xff] %v620
          %625 = vst [vmem:[#allocation2 + $0x18] sm:$0xff] %v621
          %v626 = vlaneseq
          %v627 = vshrl.u32 %v626, 7
          %v628 = vadd.s32 %v627, 8
          %v629 = vlaneseq
          %v630 = vand.u32 %v629, 127
          %vm631 = vcmp.ge.s32.totalorder %v627, %v630
          %vm632 = vcmp.ge.s32.totalorder %v628, %v630
          %v633 = vsel %vm631, 0.0, -1e+30
          %v634 = vsel %vm632, 0.0, -1e+30
          %vm635 = vcmask 130048
          %636 = vst.msk [vmem:[#allocation3] sm:$0xff] %vm635, %v633
          %637 = vst.msk [vmem:[#allocation3 + $0x8] sm:$0xff] %vm635, %v634
        $region104: #{tpu_custom_call.1} parent=67 // pred_fallthru
          _
        %v638 = vld [vmem:[#allocation2] sm:$0xff]
        %v639 = vld [vmem:[#allocation2 + $0x8] sm:$0xff]
        %v640 = vld [vmem:[#allocation2 + $0x10] sm:$0xff]
        %v641 = vld [vmem:[#allocation2 + $0x18] sm:$0xff]
        %s642 = scalar_lea.vmem [#allocation9], %s32
        %v643 = vld [vmem:[%s642] sm:$0x1]
        %644 = vadd.xlane.f32.xlu0 %v638
        %v645 = vpop.xlane.xlu0 %644
        %646 = vadd.xlane.f32.xlu0 %v639
        %v647 = vpop.xlane.xlu0 %646
        %648 = vadd.xlane.f32.xlu0 %v640
        %v649 = vpop.xlane.xlu0 %648
        %650 = vadd.xlane.f32.xlu0 %v641
        %v651 = vpop.xlane.xlu0 %650
        %v652 = vrcp.pop 128.0
        %v653 = vmul.f32 %v645, %v652
        %v654 = vmul.f32 %v647, %v652
        %v655 = vmul.f32 %v649, %v652
        %v656 = vmul.f32 %v651, %v652
        %v657 = vsub.f32 %v638, %v653
        %v658 = vsub.f32 %v639, %v654
        %v659 = vsub.f32 %v640, %v655
        %v660 = vsub.f32 %v641, %v656
        %v661 = vmul.f32 %v657, %v657
        %v662 = vmul.f32 %v658, %v658
        %v663 = vmul.f32 %v659, %v659
        %v664 = vmul.f32 %v660, %v660
        %665 = vadd.xlane.f32.xlu0 %v661
        %v666 = vpop.xlane.xlu0 %665
        %667 = vadd.xlane.f32.xlu0 %v662
        %v668 = vpop.xlane.xlu0 %667
        %669 = vadd.xlane.f32.xlu0 %v663
        %v670 = vpop.xlane.xlu0 %669
        %671 = vadd.xlane.f32.xlu0 %v664
        %v672 = vpop.xlane.xlu0 %671
        %v673 = vmul.f32 %v666, %v652
        %v674 = vmul.f32 %v668, %v652
        %v675 = vmul.f32 %v670, %v652
        %v676 = vmul.f32 %v672, %v652
        %v677 = vadd.f32 %v673, 1e-05
        %v678 = vadd.f32 %v674, 1e-05
        %v679 = vadd.f32 %v675, 1e-05
        %v680 = vadd.f32 %v676, 1e-05
        %v681 = vrsqrt.pop %v677
        %v682 = vrsqrt.pop %v678
        %v683 = vrsqrt.pop %v679
        %v684 = vrsqrt.pop %v680
        %v685 = vmul.f32 %v657, %v681
        %v686 = vmul.f32 %v658, %v682
        %v687 = vmul.f32 %v659, %v683
        %v688 = vmul.f32 %v660, %v684
        %v690 = vlaneseq
        %v691 = vshrl.u32 %v690, 7
        %v692 = vsub.s32 0, %v691
        %v693 = vrot.slane %v643, %v692
        %v695 = vmul.f32 %v685, %v693
        %v696 = vmul.f32 %v686, %v693
        %v697 = vmul.f32 %v687, %v693
        %v698 = vmul.f32 %v688, %v693
        %v699 = vpack.c.bf16 %v696, %v695
        %v700 = vpack.c.bf16 %v698, %v697
        %v701 = vld [vmem:[%s533] sm:$0xff]
        %v702 = vld [vmem:[%s533 + $0x8] sm:$0xf]
        %v703 = vld [vmem:[%s533 + $0xc] sm:$0xff]
        %v704 = vld [vmem:[%s533 + $0x14] sm:$0xf]
        %v705 = vld [vmem:[%s533 + $0x18] sm:$0xff]
        %v706 = vld [vmem:[%s533 + $0x20] sm:$0xf]
        %v707 = vld [vmem:[%s533 + $0x24] sm:$0xff]
        %v708 = vld [vmem:[%s533 + $0x2c] sm:$0xf]
        %v709 = vld [vmem:[%s533 + $0x30] sm:$0xff]
        %v710 = vld [vmem:[%s533 + $0x38] sm:$0xf]
        %v711 = vld [vmem:[%s533 + $0x3c] sm:$0xff]
        %v712 = vld [vmem:[%s533 + $0x44] sm:$0xf]
        %v713 = vld [vmem:[%s533 + $0x48] sm:$0xff]
        %v714 = vld [vmem:[%s533 + $0x50] sm:$0xf]
        %v715 = vld [vmem:[%s533 + $0x54] sm:$0xff]
        %v716 = vld [vmem:[%s533 + $0x5c] sm:$0xf]
        %v717 = vld [vmem:[%s533 + $0x60] sm:$0xff]
        %v718 = vld [vmem:[%s533 + $0x68] sm:$0xf]
        %v719 = vld [vmem:[%s533 + $0x6c] sm:$0xff]
        %v720 = vld [vmem:[%s533 + $0x74] sm:$0xf]
        %v721 = vld [vmem:[%s533 + $0x78] sm:$0xff]
        %v722 = vld [vmem:[%s533 + $0x80] sm:$0xf]
        %v723 = vld [vmem:[%s533 + $0x84] sm:$0xff]
        %v724 = vld [vmem:[%s533 + $0x8c] sm:$0xf]
        %v725 = vld [vmem:[%s533 + $0x90] sm:$0xff]
        %v726 = vld [vmem:[%s533 + $0x98] sm:$0xf]
        %v727 = vld [vmem:[%s533 + $0x9c] sm:$0xff]
        %v728 = vld [vmem:[%s533 + $0xa4] sm:$0xf]
        %v729 = vld [vmem:[%s533 + $0xa8] sm:$0xff]
        %v730 = vld [vmem:[%s533 + $0xb0] sm:$0xf]
        %v731 = vld [vmem:[%s533 + $0xb4] sm:$0xff]
        %v732 = vld [vmem:[%s533 + $0xbc] sm:$0xf]
        %s733 = smul.u32 %s32, 3
        %s734 = scalar_lea.vmem %s3, %s733
        %v735 = vld [vmem:[%s734] sm:$0x7]
        %v737 = vlaneseq
        %v738 = vshrl.u32 %v737, 7
        %v739 = vsub.s32 0, %v738
        %v740 = vrot.slane %v735, %v739
        %v741 = vlaneseq
        %v742 = vshrl.u32 %v741, 7
        %v743 = vsub.s32 1, %v742
        %v744 = vrot.slane %v735, %v743
        %v745 = vlaneseq
        %v746 = vshrl.u32 %v745, 7
        %v747 = vsub.s32 2, %v746
        %v748 = vrot.slane %v735, %v747
        %v784 = vunpack.c.l.b16 %v701
        %v785 = vunpack.c.h.b16 %v701
        %v786 = vunpack.c.l.b16 %v702
        %v787 = vunpack.c.l.b16 %v703
        %v788 = vunpack.c.h.b16 %v703
        %v789 = vunpack.c.l.b16 %v704
        %v790 = vunpack.c.l.b16 %v705
        %v791 = vunpack.c.h.b16 %v705
        %v792 = vunpack.c.l.b16 %v706
        %v793 = vunpack.c.l.b16 %v707
        %v794 = vunpack.c.h.b16 %v707
        %v795 = vunpack.c.l.b16 %v708
        %v796 = vunpack.c.l.b16 %v709
        %v797 = vunpack.c.h.b16 %v709
        %v798 = vunpack.c.l.b16 %v710
        %v799 = vunpack.c.l.b16 %v711
        %v800 = vunpack.c.h.b16 %v711
        %v801 = vunpack.c.l.b16 %v712
        %v802 = vunpack.c.l.b16 %v713
        %v803 = vunpack.c.h.b16 %v713
        %v804 = vunpack.c.l.b16 %v714
        %v805 = vunpack.c.l.b16 %v715
        %v806 = vunpack.c.h.b16 %v715
        %v807 = vunpack.c.l.b16 %v716
        %v808 = vunpack.c.l.b16 %v717
        %v809 = vunpack.c.h.b16 %v717
        %v810 = vunpack.c.l.b16 %v718
        %v811 = vunpack.c.l.b16 %v719
        %v812 = vunpack.c.h.b16 %v719
        %v813 = vunpack.c.l.b16 %v720
        %v814 = vunpack.c.l.b16 %v721
        %v815 = vunpack.c.h.b16 %v721
        %v816 = vunpack.c.l.b16 %v722
        %v817 = vunpack.c.l.b16 %v723
        %v818 = vunpack.c.h.b16 %v723
        %v819 = vunpack.c.l.b16 %v724
        %v820 = vunpack.c.l.b16 %v725
        %v821 = vunpack.c.h.b16 %v725
        %v822 = vunpack.c.l.b16 %v726
        %v823 = vunpack.c.l.b16 %v727
        %v824 = vunpack.c.h.b16 %v727
        %v825 = vunpack.c.l.b16 %v728
        %v826 = vunpack.c.l.b16 %v729
        %v827 = vunpack.c.h.b16 %v729
        %v828 = vunpack.c.l.b16 %v730
        %v829 = vunpack.c.l.b16 %v731
        %v830 = vunpack.c.h.b16 %v731
        %v831 = vunpack.c.l.b16 %v732
        %v832 = vpack.c.b16 %v787, %v784
        %v833 = vpack.c.b16 %v788, %v785
        %v834 = vpack.c.b16 %v789, %v786
        %v835 = vpack.c.b16 %v793, %v790
        %v836 = vpack.c.b16 %v794, %v791
        %v837 = vpack.c.b16 %v795, %v792
        %v838 = vpack.c.b16 %v799, %v796
        %v839 = vpack.c.b16 %v800, %v797
        %v840 = vpack.c.b16 %v801, %v798
        %v841 = vpack.c.b16 %v805, %v802
        %v842 = vpack.c.b16 %v806, %v803
        %v843 = vpack.c.b16 %v807, %v804
        %v844 = vpack.c.b16 %v811, %v808
        %v845 = vpack.c.b16 %v812, %v809
        %v846 = vpack.c.b16 %v813, %v810
        %v847 = vpack.c.b16 %v817, %v814
        %v848 = vpack.c.b16 %v818, %v815
        %v849 = vpack.c.b16 %v819, %v816
        %v850 = vpack.c.b16 %v823, %v820
        %v851 = vpack.c.b16 %v824, %v821
        %v852 = vpack.c.b16 %v825, %v822
        %v853 = vpack.c.b16 %v829, %v826
        %v854 = vpack.c.b16 %v830, %v827
        %v855 = vpack.c.b16 %v831, %v828
        %880 = vmatprep.subr.bf16.mxu0 %v833
        %881 = vmatpush1.bf16.msra.mxu0 %v832
        %882 = vmatprep.subr.bf16.mxu0 %v836
        %883 = vmatpush1.bf16.msra.mxu0 %v835
        %884 = vmatprep.subr.bf16.mxu0 %v839
        %885 = vmatpush1.bf16.msra.mxu0 %v838
        %886 = vmatprep.subr.bf16.mxu0 %v842
        %887 = vmatpush1.bf16.msra.mxu0 %v841
        %888 = vmatprep.subr.bf16.mxu0 %v845
        %889 = vmatpush1.bf16.msra.mxu0 %v844
        %890 = vmatprep.subr.bf16.mxu0 %v848
        %891 = vmatpush1.bf16.msra.mxu0 %v847
        %892 = vmatprep.subr.bf16.mxu0 %v851
        %893 = vmatpush1.bf16.msra.mxu0 %v850
        %894 = vmatprep.subr.bf16.mxu0 %v854
        %895 = vmatpush1.bf16.msra.mxu0 %v853
        %896 = vmatprep.subr.bf16.mxu0 0
        %897 = vmatpush1.bf16.msra.mxu0 0
        %898 = vmatprep.subr.bf16.mxu0 0
        %899 = vmatpush1.bf16.msra.mxu0 0
        %900 = vmatprep.subr.bf16.mxu0 0
        %901 = vmatpush1.bf16.msra.mxu0 0
        %902 = vmatprep.subr.bf16.mxu0 0
        %903 = vmatpush1.bf16.msra.mxu0 0
        %904 = vmatprep.subr.bf16.mxu0 0
        %905 = vmatpush1.bf16.msra.mxu0 0
        %906 = vmatprep.subr.bf16.mxu0 0
        %907 = vmatpush1.bf16.msra.mxu0 0
        %908 = vmatprep.subr.bf16.mxu0 0
        %909 = vmatpush1.bf16.msra.mxu0 0
        %910 = vmatprep.subr.bf16.mxu0 0
        %911 = vmatpush1.bf16.msra.mxu0 0
        %912 = vmatprep.mubr.bf16.mxu0 0
        %913 = vmatmul.mubr.bf16.gmra.mrb[0].mxu0 %v699
        %v914 = vpop.f32.mrb[0].mxu0
        %v915 = vadd.f32 %v740, %v914
        %v916 = vpop.f32.mrb[0].mxu0
        %v917 = vadd.f32 %v744, %v916
        %v918 = vpop.f32.mrb[0].mxu0
        %v919 = vadd.f32 %v740, %v918
        %v920 = vpop.f32.mrb[0].mxu0
        %v921 = vadd.f32 %v744, %v920
        %922 = vmatprep.mubr.bf16.mxu0 0
        %923 = vmatmul.mubr.bf16.gmra.mrb[0].mxu0 %v700
        %v924 = vpop.f32.mrb[0].mxu0
        %v925 = vadd.f32 %v740, %v924
        %v926 = vpop.f32.mrb[0].mxu0
        %v927 = vadd.f32 %v744, %v926
        %v928 = vpop.f32.mrb[0].mxu0
        %v929 = vadd.f32 %v740, %v928
        %v930 = vpop.f32.mrb[0].mxu0
        %v931 = vadd.f32 %v744, %v930
        %932 = vdwg.mxu0
        %933 = vmatprep.subr.bf16.mxu0 0
        %934 = vmatpush1.bf16.msra.mxu0 %v834
        %935 = vmatprep.subr.bf16.mxu0 0
        %936 = vmatpush1.bf16.msra.mxu0 %v837
        %937 = vmatprep.subr.bf16.mxu0 0
        %938 = vmatpush1.bf16.msra.mxu0 %v840
        %939 = vmatprep.subr.bf16.mxu0 0
        %940 = vmatpush1.bf16.msra.mxu0 %v843
        %941 = vmatprep.subr.bf16.mxu0 0
        %942 = vmatpush1.bf16.msra.mxu0 %v846
        %943 = vmatprep.subr.bf16.mxu0 0
        %944 = vmatpush1.bf16.msra.mxu0 %v849
        %945 = vmatprep.subr.bf16.mxu0 0
        %946 = vmatpush1.bf16.msra.mxu0 %v852
        %947 = vmatprep.subr.bf16.mxu0 0
        %948 = vmatpush1.bf16.msra.mxu0 %v855
        %949 = vmatprep.subr.bf16.mxu0 0
        %950 = vmatpush1.bf16.msra.mxu0 0
        %951 = vmatprep.subr.bf16.mxu0 0
        %952 = vmatpush1.bf16.msra.mxu0 0
        %953 = vmatprep.subr.bf16.mxu0 0
        %954 = vmatpush1.bf16.msra.mxu0 0
        %955 = vmatprep.subr.bf16.mxu0 0
        %956 = vmatpush1.bf16.msra.mxu0 0
        %957 = vmatprep.subr.bf16.mxu0 0
        %958 = vmatpush1.bf16.msra.mxu0 0
        %959 = vmatprep.subr.bf16.mxu0 0
        %960 = vmatpush1.bf16.msra.mxu0 0
        %961 = vmatprep.subr.bf16.mxu0 0
        %962 = vmatpush1.bf16.msra.mxu0 0
        %963 = vmatprep.subr.bf16.mxu0 0
        %964 = vmatpush1.bf16.msra.mxu0 0
        %965 = vmatprep.mubr.bf16.mxu0 0
        %966 = vmatmul.mubr.bf16.gmra.mrb[0].mxu0 %v699
        %v967 = vpop.f32.mrb[0].mxu0
        %v968 = vadd.f32 %v748, %v967
        %v969 = vpop.f32.mrb[0].mxu0
        %v970 = vpop.f32.mrb[0].mxu0
        %v971 = vadd.f32 %v748, %v970
        %v972 = vpop.f32.mrb[0].mxu0
        %973 = vmatprep.mubr.bf16.mxu0 0
        %974 = vmatmul.mubr.bf16.gmra.mrb[0].mxu0 %v700
        %v975 = vpop.f32.mrb[0].mxu0
        %v976 = vadd.f32 %v748, %v975
        %v977 = vpop.f32.mrb[0].mxu0
        %v978 = vpop.f32.mrb[0].mxu0
        %v979 = vadd.f32 %v748, %v978
        %v980 = vpop.f32.mrb[0].mxu0
        %981 = vdwg.mxu0
        %v982 = vmul.f32 %v915, 0.17677669
        %v983 = vmul.f32 %v919, 0.17677669
        %v984 = vmul.f32 %v925, 0.17677669
        %v985 = vmul.f32 %v929, 0.17677669
        %990 = vrot.lane.b32.xlu0 %v982, 96
        %v991 = vpop.permute.xlu0 %990
        %992 = vrot.lane.b32.xlu0 %v983, 96
        %v993 = vpop.permute.xlu0 %992
        %994 = vrot.lane.b32.xlu0 %v984, 96
        %v995 = vpop.permute.xlu0 %994
        %996 = vrot.lane.b32.xlu0 %v985, 96
        %v997 = vpop.permute.xlu0 %996
        %1002 = vrot.lane.b32.xlu0 %v982, 64
        %v1003 = vpop.permute.xlu0 %1002
        %1004 = vrot.lane.b32.xlu0 %v983, 64
        %v1005 = vpop.permute.xlu0 %1004
        %1006 = vrot.lane.b32.xlu0 %v984, 64
        %v1007 = vpop.permute.xlu0 %1006
        %1008 = vrot.lane.b32.xlu0 %v985, 64
        %v1009 = vpop.permute.xlu0 %1008
        %1014 = vrot.lane.b32.xlu0 %v982, 32
        %v1015 = vpop.permute.xlu0 %1014
        %1016 = vrot.lane.b32.xlu0 %v983, 32
        %v1017 = vpop.permute.xlu0 %1016
        %1018 = vrot.lane.b32.xlu0 %v984, 32
        %v1019 = vpop.permute.xlu0 %1018
        %1020 = vrot.lane.b32.xlu0 %v985, 32
        %v1021 = vpop.permute.xlu0 %1020
        %v1026 = vcombine.low %v982, %v1003
        %v1027 = vcombine.high %v982, %v1003
        %v1029 = vunpack.c.l.s4 1983009808
        %v1030 = vunpack.c.0.s8 %v1029
        %v1031 = vlaneseq
        %v1032 = vshrl.u32 %v1031, 7
        %v1033 = vsub.s32 %v1030, %v1032
        %v1034 = vrot.slane %v1026, %v1033
        %v1036 = vunpack.c.l.s4 1983009808
        %v1037 = vunpack.c.0.s8 %v1036
        %v1038 = vlaneseq
        %v1039 = vshrl.u32 %v1038, 7
        %v1040 = vsub.s32 %v1037, %v1039
        %v1041 = vrot.slane %v1027, %v1040
        %v1042 = vcombine.low %v991, %v1015
        %v1043 = vcombine.high %v991, %v1015
        %v1045 = vunpack.c.l.s4 1983009808
        %v1046 = vunpack.c.0.s8 %v1045
        %v1047 = vlaneseq
        %v1048 = vshrl.u32 %v1047, 7
        %v1049 = vsub.s32 %v1046, %v1048
        %v1050 = vrot.slane %v1042, %v1049
        %v1052 = vunpack.c.l.s4 1983009808
        %v1053 = vunpack.c.0.s8 %v1052
        %v1054 = vlaneseq
        %v1055 = vshrl.u32 %v1054, 7
        %v1056 = vsub.s32 %v1053, %v1055
        %v1057 = vrot.slane %v1043, %v1056
        %v1058 = vcombine.low %v1034, %v1050
        %v1059 = vcombine.high %v1034, %v1050
        %v1061 = vunpack.c.l.s4 1934713408
        %v1062 = vunpack.c.0.s8 %v1061
        %v1063 = vlaneseq
        %v1064 = vshrl.u32 %v1063, 7
        %v1065 = vsub.s32 %v1062, %v1064
        %v1066 = vrot.slane %v1058, %v1065
        %v1068 = vunpack.c.l.s4 1934713408
        %v1069 = vunpack.c.0.s8 %v1068
        %v1070 = vlaneseq
        %v1071 = vshrl.u32 %v1070, 7
        %v1072 = vsub.s32 %v1069, %v1071
        %v1073 = vrot.slane %v1059, %v1072
        %v1074 = vcombine.low %v1041, %v1057
        %v1075 = vcombine.high %v1041, %v1057
        %v1077 = vunpack.c.l.s4 1934713408
        %v1078 = vunpack.c.0.s8 %v1077
        %v1079 = vlaneseq
        %v1080 = vshrl.u32 %v1079, 7
        %v1081 = vsub.s32 %v1078, %v1080
        %v1082 = vrot.slane %v1074, %v1081
        %v1084 = vunpack.c.l.s4 1934713408
        %v1085 = vunpack.c.0.s8 %v1084
        %v1086 = vlaneseq
        %v1087 = vshrl.u32 %v1086, 7
        %v1088 = vsub.s32 %v1085, %v1087
        %v1089 = vrot.slane %v1075, %v1088
        %v1090 = vcombine.high %v1066, 0.0
        %v1091 = vcombine.high %v1073, 0.0
        %v1092 = vcombine.high %v1082, 0.0
        %v1093 = vcombine.high %v1089, 0.0
        %v1094 = vcombine.low %v983, %v1005
        %v1095 = vcombine.high %v983, %v1005
        %v1097 = vunpack.c.l.s4 1983009808
        %v1098 = vunpack.c.0.s8 %v1097
        %v1099 = vlaneseq
        %v1100 = vshrl.u32 %v1099, 7
        %v1101 = vsub.s32 %v1098, %v1100
        %v1102 = vrot.slane %v1094, %v1101
        %v1104 = vunpack.c.l.s4 1983009808
        %v1105 = vunpack.c.0.s8 %v1104
        %v1106 = vlaneseq
        %v1107 = vshrl.u32 %v1106, 7
        %v1108 = vsub.s32 %v1105, %v1107
        %v1109 = vrot.slane %v1095, %v1108
        %v1110 = vcombine.low %v993, %v1017
        %v1111 = vcombine.high %v993, %v1017
        %v1113 = vunpack.c.l.s4 1983009808
        %v1114 = vunpack.c.0.s8 %v1113
        %v1115 = vlaneseq
        %v1116 = vshrl.u32 %v1115, 7
        %v1117 = vsub.s32 %v1114, %v1116
        %v1118 = vrot.slane %v1110, %v1117
        %v1120 = vunpack.c.l.s4 1983009808
        %v1121 = vunpack.c.0.s8 %v1120
        %v1122 = vlaneseq
        %v1123 = vshrl.u32 %v1122, 7
        %v1124 = vsub.s32 %v1121, %v1123
        %v1125 = vrot.slane %v1111, %v1124
        %v1126 = vcombine.low %v1102, %v1118
        %v1127 = vcombine.high %v1102, %v1118
        %v1129 = vunpack.c.l.s4 1934713408
        %v1130 = vunpack.c.0.s8 %v1129
        %v1131 = vlaneseq
        %v1132 = vshrl.u32 %v1131, 7
        %v1133 = vsub.s32 %v1130, %v1132
        %v1134 = vrot.slane %v1126, %v1133
        %v1136 = vunpack.c.l.s4 1934713408
        %v1137 = vunpack.c.0.s8 %v1136
        %v1138 = vlaneseq
        %v1139 = vshrl.u32 %v1138, 7
        %v1140 = vsub.s32 %v1137, %v1139
        %v1141 = vrot.slane %v1127, %v1140
        %v1142 = vcombine.low %v1109, %v1125
        %v1143 = vcombine.high %v1109, %v1125
        %v1145 = vunpack.c.l.s4 1934713408
        %v1146 = vunpack.c.0.s8 %v1145
        %v1147 = vlaneseq
        %v1148 = vshrl.u32 %v1147, 7
        %v1149 = vsub.s32 %v1146, %v1148
        %v1150 = vrot.slane %v1142, %v1149
        %v1152 = vunpack.c.l.s4 1934713408
        %v1153 = vunpack.c.0.s8 %v1152
        %v1154 = vlaneseq
        %v1155 = vshrl.u32 %v1154, 7
        %v1156 = vsub.s32 %v1153, %v1155
        %v1157 = vrot.slane %v1143, %v1156
        %v1158 = vcombine.high %v1134, 0.0
        %v1159 = vcombine.high %v1141, 0.0
        %v1160 = vcombine.high %v1150, 0.0
        %v1161 = vcombine.high %v1157, 0.0
        %v1162 = vcombine.low %v984, %v1007
        %v1163 = vcombine.high %v984, %v1007
        %v1165 = vunpack.c.l.s4 1983009808
        %v1166 = vunpack.c.0.s8 %v1165
        %v1167 = vlaneseq
        %v1168 = vshrl.u32 %v1167, 7
        %v1169 = vsub.s32 %v1166, %v1168
        %v1170 = vrot.slane %v1162, %v1169
        %v1172 = vunpack.c.l.s4 1983009808
        %v1173 = vunpack.c.0.s8 %v1172
        %v1174 = vlaneseq
        %v1175 = vshrl.u32 %v1174, 7
        %v1176 = vsub.s32 %v1173, %v1175
        %v1177 = vrot.slane %v1163, %v1176
        %v1178 = vcombine.low %v995, %v1019
        %v1179 = vcombine.high %v995, %v1019
        %v1181 = vunpack.c.l.s4 1983009808
        %v1182 = vunpack.c.0.s8 %v1181
        %v1183 = vlaneseq
        %v1184 = vshrl.u32 %v1183, 7
        %v1185 = vsub.s32 %v1182, %v1184
        %v1186 = vrot.slane %v1178, %v1185
        %v1188 = vunpack.c.l.s4 1983009808
        %v1189 = vunpack.c.0.s8 %v1188
        %v1190 = vlaneseq
        %v1191 = vshrl.u32 %v1190, 7
        %v1192 = vsub.s32 %v1189, %v1191
        %v1193 = vrot.slane %v1179, %v1192
        %v1194 = vcombine.low %v1170, %v1186
        %v1195 = vcombine.high %v1170, %v1186
        %v1197 = vunpack.c.l.s4 1934713408
        %v1198 = vunpack.c.0.s8 %v1197
        %v1199 = vlaneseq
        %v1200 = vshrl.u32 %v1199, 7
        %v1201 = vsub.s32 %v1198, %v1200
        %v1202 = vrot.slane %v1194, %v1201
        %v1204 = vunpack.c.l.s4 1934713408
        %v1205 = vunpack.c.0.s8 %v1204
        %v1206 = vlaneseq
        %v1207 = vshrl.u32 %v1206, 7
        %v1208 = vsub.s32 %v1205, %v1207
        %v1209 = vrot.slane %v1195, %v1208
        %v1210 = vcombine.low %v1177, %v1193
        %v1211 = vcombine.high %v1177, %v1193
        %v1213 = vunpack.c.l.s4 1934713408
        %v1214 = vunpack.c.0.s8 %v1213
        %v1215 = vlaneseq
        %v1216 = vshrl.u32 %v1215, 7
        %v1217 = vsub.s32 %v1214, %v1216
        %v1218 = vrot.slane %v1210, %v1217
        %v1220 = vunpack.c.l.s4 1934713408
        %v1221 = vunpack.c.0.s8 %v1220
        %v1222 = vlaneseq
        %v1223 = vshrl.u32 %v1222, 7
        %v1224 = vsub.s32 %v1221, %v1223
        %v1225 = vrot.slane %v1211, %v1224
        %v1226 = vcombine.high %v1202, 0.0
        %v1227 = vcombine.high %v1209, 0.0
        %v1228 = vcombine.high %v1218, 0.0
        %v1229 = vcombine.high %v1225, 0.0
        %v1230 = vcombine.low %v985, %v1009
        %v1231 = vcombine.high %v985, %v1009
        %v1233 = vunpack.c.l.s4 1983009808
        %v1234 = vunpack.c.0.s8 %v1233
        %v1235 = vlaneseq
        %v1236 = vshrl.u32 %v1235, 7
        %v1237 = vsub.s32 %v1234, %v1236
        %v1238 = vrot.slane %v1230, %v1237
        %v1240 = vunpack.c.l.s4 1983009808
        %v1241 = vunpack.c.0.s8 %v1240
        %v1242 = vlaneseq
        %v1243 = vshrl.u32 %v1242, 7
        %v1244 = vsub.s32 %v1241, %v1243
        %v1245 = vrot.slane %v1231, %v1244
        %v1246 = vcombine.low %v997, %v1021
        %v1247 = vcombine.high %v997, %v1021
        %v1249 = vunpack.c.l.s4 1983009808
        %v1250 = vunpack.c.0.s8 %v1249
        %v1251 = vlaneseq
        %v1252 = vshrl.u32 %v1251, 7
        %v1253 = vsub.s32 %v1250, %v1252
        %v1254 = vrot.slane %v1246, %v1253
        %v1256 = vunpack.c.l.s4 1983009808
        %v1257 = vunpack.c.0.s8 %v1256
        %v1258 = vlaneseq
        %v1259 = vshrl.u32 %v1258, 7
        %v1260 = vsub.s32 %v1257, %v1259
        %v1261 = vrot.slane %v1247, %v1260
        %v1262 = vcombine.low %v1238, %v1254
        %v1263 = vcombine.high %v1238, %v1254
        %v1265 = vunpack.c.l.s4 1934713408
        %v1266 = vunpack.c.0.s8 %v1265
        %v1267 = vlaneseq
        %v1268 = vshrl.u32 %v1267, 7
        %v1269 = vsub.s32 %v1266, %v1268
        %v1270 = vrot.slane %v1262, %v1269
        %v1272 = vunpack.c.l.s4 1934713408
        %v1273 = vunpack.c.0.s8 %v1272
        %v1274 = vlaneseq
        %v1275 = vshrl.u32 %v1274, 7
        %v1276 = vsub.s32 %v1273, %v1275
        %v1277 = vrot.slane %v1263, %v1276
        %v1278 = vcombine.low %v1245, %v1261
        %v1279 = vcombine.high %v1245, %v1261
        %v1281 = vunpack.c.l.s4 1934713408
        %v1282 = vunpack.c.0.s8 %v1281
        %v1283 = vlaneseq
        %v1284 = vshrl.u32 %v1283, 7
        %v1285 = vsub.s32 %v1282, %v1284
        %v1286 = vrot.slane %v1278, %v1285
        %v1288 = vunpack.c.l.s4 1934713408
        %v1289 = vunpack.c.0.s8 %v1288
        %v1290 = vlaneseq
        %v1291 = vshrl.u32 %v1290, 7
        %v1292 = vsub.s32 %v1289, %v1291
        %v1293 = vrot.slane %v1279, %v1292
        %v1294 = vcombine.high %v1270, 0.0
        %v1295 = vcombine.high %v1277, 0.0
        %v1296 = vcombine.high %v1286, 0.0
        %v1297 = vcombine.high %v1293, 0.0
        %v1298 = vcombine.low %v1066, %v1073
        %v1300 = vunpack.c.l.s4 1983009808
        %v1301 = vunpack.c.0.s8 %v1300
        %v1302 = vlaneseq
        %v1303 = vshrl.u32 %v1302, 7
        %v1304 = vsub.s32 %v1301, %v1303
        %v1305 = vrot.slane %v1298, %v1304
        %v1306 = vcombine.low %v1090, %v1091
        %v1308 = vunpack.c.l.s4 1983009808
        %v1309 = vunpack.c.0.s8 %v1308
        %v1310 = vlaneseq
        %v1311 = vshrl.u32 %v1310, 7
        %v1312 = vsub.s32 %v1309, %v1311
        %v1313 = vrot.slane %v1306, %v1312
        %v1314 = vcombine.low %v1082, %v1089
        %v1316 = vunpack.c.l.s4 1983009808
        %v1317 = vunpack.c.0.s8 %v1316
        %v1318 = vlaneseq
        %v1319 = vshrl.u32 %v1318, 7
        %v1320 = vsub.s32 %v1317, %v1319
        %v1321 = vrot.slane %v1314, %v1320
        %v1322 = vcombine.low %v1092, %v1093
        %v1324 = vunpack.c.l.s4 1983009808
        %v1325 = vunpack.c.0.s8 %v1324
        %v1326 = vlaneseq
        %v1327 = vshrl.u32 %v1326, 7
        %v1328 = vsub.s32 %v1325, %v1327
        %v1329 = vrot.slane %v1322, %v1328
        %v1330 = vcombine.low %v1305, %v1313
        %v1331 = vcombine.high %v1305, %v1313
        %v1333 = vunpack.c.l.s4 1934713408
        %v1334 = vunpack.c.0.s8 %v1333
        %v1335 = vlaneseq
        %v1336 = vshrl.u32 %v1335, 7
        %v1337 = vsub.s32 %v1334, %v1336
        %v1338 = vrot.slane %v1330, %v1337
        %v1340 = vunpack.c.l.s4 1934713408
        %v1341 = vunpack.c.0.s8 %v1340
        %v1342 = vlaneseq
        %v1343 = vshrl.u32 %v1342, 7
        %v1344 = vsub.s32 %v1341, %v1343
        %v1345 = vrot.slane %v1331, %v1344
        %v1346 = vcombine.low %v1321, %v1329
        %v1347 = vcombine.high %v1321, %v1329
        %v1349 = vunpack.c.l.s4 1934713408
        %v1350 = vunpack.c.0.s8 %v1349
        %v1351 = vlaneseq
        %v1352 = vshrl.u32 %v1351, 7
        %v1353 = vsub.s32 %v1350, %v1352
        %v1354 = vrot.slane %v1346, %v1353
        %v1356 = vunpack.c.l.s4 1934713408
        %v1357 = vunpack.c.0.s8 %v1356
        %v1358 = vlaneseq
        %v1359 = vshrl.u32 %v1358, 7
        %v1360 = vsub.s32 %v1357, %v1359
        %v1361 = vrot.slane %v1347, %v1360
        %v1362 = vcombine.low %v1338, %v1354
        %v1363 = vcombine.high %v1338, %v1354
        %v1364 = vcombine.low %v1345, %v1361
        %v1365 = vcombine.high %v1345, %v1361
        %v1366 = vcombine.low %v1134, %v1141
        %v1368 = vunpack.c.l.s4 1983009808
        %v1369 = vunpack.c.0.s8 %v1368
        %v1370 = vlaneseq
        %v1371 = vshrl.u32 %v1370, 7
        %v1372 = vsub.s32 %v1369, %v1371
        %v1373 = vrot.slane %v1366, %v1372
        %v1374 = vcombine.low %v1158, %v1159
        %v1376 = vunpack.c.l.s4 1983009808
        %v1377 = vunpack.c.0.s8 %v1376
        %v1378 = vlaneseq
        %v1379 = vshrl.u32 %v1378, 7
        %v1380 = vsub.s32 %v1377, %v1379
        %v1381 = vrot.slane %v1374, %v1380
        %v1382 = vcombine.low %v1150, %v1157
        %v1384 = vunpack.c.l.s4 1983009808
        %v1385 = vunpack.c.0.s8 %v1384
        %v1386 = vlaneseq
        %v1387 = vshrl.u32 %v1386, 7
        %v1388 = vsub.s32 %v1385, %v1387
        %v1389 = vrot.slane %v1382, %v1388
        %v1390 = vcombine.low %v1160, %v1161
        %v1392 = vunpack.c.l.s4 1983009808
        %v1393 = vunpack.c.0.s8 %v1392
        %v1394 = vlaneseq
        %v1395 = vshrl.u32 %v1394, 7
        %v1396 = vsub.s32 %v1393, %v1395
        %v1397 = vrot.slane %v1390, %v1396
        %v1398 = vcombine.low %v1373, %v1381
        %v1399 = vcombine.high %v1373, %v1381
        %v1401 = vunpack.c.l.s4 1934713408
        %v1402 = vunpack.c.0.s8 %v1401
        %v1403 = vlaneseq
        %v1404 = vshrl.u32 %v1403, 7
        %v1405 = vsub.s32 %v1402, %v1404
        %v1406 = vrot.slane %v1398, %v1405
        %v1408 = vunpack.c.l.s4 1934713408
        %v1409 = vunpack.c.0.s8 %v1408
        %v1410 = vlaneseq
        %v1411 = vshrl.u32 %v1410, 7
        %v1412 = vsub.s32 %v1409, %v1411
        %v1413 = vrot.slane %v1399, %v1412
        %v1414 = vcombine.low %v1389, %v1397
        %v1415 = vcombine.high %v1389, %v1397
        %v1417 = vunpack.c.l.s4 1934713408
        %v1418 = vunpack.c.0.s8 %v1417
        %v1419 = vlaneseq
        %v1420 = vshrl.u32 %v1419, 7
        %v1421 = vsub.s32 %v1418, %v1420
        %v1422 = vrot.slane %v1414, %v1421
        %v1424 = vunpack.c.l.s4 1934713408
        %v1425 = vunpack.c.0.s8 %v1424
        %v1426 = vlaneseq
        %v1427 = vshrl.u32 %v1426, 7
        %v1428 = vsub.s32 %v1425, %v1427
        %v1429 = vrot.slane %v1415, %v1428
        %v1430 = vcombine.low %v1406, %v1422
        %v1431 = vcombine.high %v1406, %v1422
        %v1432 = vcombine.low %v1413, %v1429
        %v1433 = vcombine.high %v1413, %v1429
        %v1434 = vcombine.low %v1202, %v1209
        %v1436 = vunpack.c.l.s4 1983009808
        %v1437 = vunpack.c.0.s8 %v1436
        %v1438 = vlaneseq
        %v1439 = vshrl.u32 %v1438, 7
        %v1440 = vsub.s32 %v1437, %v1439
        %v1441 = vrot.slane %v1434, %v1440
        %v1442 = vcombine.low %v1226, %v1227
        %v1444 = vunpack.c.l.s4 1983009808
        %v1445 = vunpack.c.0.s8 %v1444
        %v1446 = vlaneseq
        %v1447 = vshrl.u32 %v1446, 7
        %v1448 = vsub.s32 %v1445, %v1447
        %v1449 = vrot.slane %v1442, %v1448
        %v1450 = vcombine.low %v1218, %v1225
        %v1452 = vunpack.c.l.s4 1983009808
        %v1453 = vunpack.c.0.s8 %v1452
        %v1454 = vlaneseq
        %v1455 = vshrl.u32 %v1454, 7
        %v1456 = vsub.s32 %v1453, %v1455
        %v1457 = vrot.slane %v1450, %v1456
        %v1458 = vcombine.low %v1228, %v1229
        %v1460 = vunpack.c.l.s4 1983009808
        %v1461 = vunpack.c.0.s8 %v1460
        %v1462 = vlaneseq
        %v1463 = vshrl.u32 %v1462, 7
        %v1464 = vsub.s32 %v1461, %v1463
        %v1465 = vrot.slane %v1458, %v1464
        %v1466 = vcombine.low %v1441, %v1449
        %v1467 = vcombine.high %v1441, %v1449
        %v1469 = vunpack.c.l.s4 1934713408
        %v1470 = vunpack.c.0.s8 %v1469
        %v1471 = vlaneseq
        %v1472 = vshrl.u32 %v1471, 7
        %v1473 = vsub.s32 %v1470, %v1472
        %v1474 = vrot.slane %v1466, %v1473
        %v1476 = vunpack.c.l.s4 1934713408
        %v1477 = vunpack.c.0.s8 %v1476
        %v1478 = vlaneseq
        %v1479 = vshrl.u32 %v1478, 7
        %v1480 = vsub.s32 %v1477, %v1479
        %v1481 = vrot.slane %v1467, %v1480
        %v1482 = vcombine.low %v1457, %v1465
        %v1483 = vcombine.high %v1457, %v1465
        %v1485 = vunpack.c.l.s4 1934713408
        %v1486 = vunpack.c.0.s8 %v1485
        %v1487 = vlaneseq
        %v1488 = vshrl.u32 %v1487, 7
        %v1489 = vsub.s32 %v1486, %v1488
        %v1490 = vrot.slane %v1482, %v1489
        %v1492 = vunpack.c.l.s4 1934713408
        %v1493 = vunpack.c.0.s8 %v1492
        %v1494 = vlaneseq
        %v1495 = vshrl.u32 %v1494, 7
        %v1496 = vsub.s32 %v1493, %v1495
        %v1497 = vrot.slane %v1483, %v1496
        %v1498 = vcombine.low %v1474, %v1490
        %v1499 = vcombine.high %v1474, %v1490
        %v1500 = vcombine.low %v1481, %v1497
        %v1501 = vcombine.high %v1481, %v1497
        %v1502 = vcombine.low %v1270, %v1277
        %v1504 = vunpack.c.l.s4 1983009808
        %v1505 = vunpack.c.0.s8 %v1504
        %v1506 = vlaneseq
        %v1507 = vshrl.u32 %v1506, 7
        %v1508 = vsub.s32 %v1505, %v1507
        %v1509 = vrot.slane %v1502, %v1508
        %v1510 = vcombine.low %v1294, %v1295
        %v1512 = vunpack.c.l.s4 1983009808
        %v1513 = vunpack.c.0.s8 %v1512
        %v1514 = vlaneseq
        %v1515 = vshrl.u32 %v1514, 7
        %v1516 = vsub.s32 %v1513, %v1515
        %v1517 = vrot.slane %v1510, %v1516
        %v1518 = vcombine.low %v1286, %v1293
        %v1520 = vunpack.c.l.s4 1983009808
        %v1521 = vunpack.c.0.s8 %v1520
        %v1522 = vlaneseq
        %v1523 = vshrl.u32 %v1522, 7
        %v1524 = vsub.s32 %v1521, %v1523
        %v1525 = vrot.slane %v1518, %v1524
        %v1526 = vcombine.low %v1296, %v1297
        %v1528 = vunpack.c.l.s4 1983009808
        %v1529 = vunpack.c.0.s8 %v1528
        %v1530 = vlaneseq
        %v1531 = vshrl.u32 %v1530, 7
        %v1532 = vsub.s32 %v1529, %v1531
        %v1533 = vrot.slane %v1526, %v1532
        %v1534 = vcombine.low %v1509, %v1517
        %v1535 = vcombine.high %v1509, %v1517
        %v1537 = vunpack.c.l.s4 1934713408
        %v1538 = vunpack.c.0.s8 %v1537
        %v1539 = vlaneseq
        %v1540 = vshrl.u32 %v1539, 7
        %v1541 = vsub.s32 %v1538, %v1540
        %v1542 = vrot.slane %v1534, %v1541
        %v1544 = vunpack.c.l.s4 1934713408
        %v1545 = vunpack.c.0.s8 %v1544
        %v1546 = vlaneseq
        %v1547 = vshrl.u32 %v1546, 7
        %v1548 = vsub.s32 %v1545, %v1547
        %v1549 = vrot.slane %v1535, %v1548
        %v1550 = vcombine.low %v1525, %v1533
        %v1551 = vcombine.high %v1525, %v1533
        %v1553 = vunpack.c.l.s4 1934713408
        %v1554 = vunpack.c.0.s8 %v1553
        %v1555 = vlaneseq
        %v1556 = vshrl.u32 %v1555, 7
        %v1557 = vsub.s32 %v1554, %v1556
        %v1558 = vrot.slane %v1550, %v1557
        %v1560 = vunpack.c.l.s4 1934713408
        %v1561 = vunpack.c.0.s8 %v1560
        %v1562 = vlaneseq
        %v1563 = vshrl.u32 %v1562, 7
        %v1564 = vsub.s32 %v1561, %v1563
        %v1565 = vrot.slane %v1551, %v1564
        %v1566 = vcombine.low %v1542, %v1558
        %v1567 = vcombine.high %v1542, %v1558
        %v1568 = vcombine.low %v1549, %v1565
        %v1569 = vcombine.high %v1549, %v1565
        %1574 = vrot.lane.b32.xlu0 %v917, 96
        %v1575 = vpop.permute.xlu0 %1574
        %1576 = vrot.lane.b32.xlu0 %v921, 96
        %v1577 = vpop.permute.xlu0 %1576
        %1578 = vrot.lane.b32.xlu0 %v927, 96
        %v1579 = vpop.permute.xlu0 %1578
        %1580 = vrot.lane.b32.xlu0 %v931, 96
        %v1581 = vpop.permute.xlu0 %1580
        %1586 = vrot.lane.b32.xlu0 %v917, 64
        %v1587 = vpop.permute.xlu0 %1586
        %1588 = vrot.lane.b32.xlu0 %v921, 64
        %v1589 = vpop.permute.xlu0 %1588
        %1590 = vrot.lane.b32.xlu0 %v927, 64
        %v1591 = vpop.permute.xlu0 %1590
        %1592 = vrot.lane.b32.xlu0 %v931, 64
        %v1593 = vpop.permute.xlu0 %1592
        %1598 = vrot.lane.b32.xlu0 %v917, 32
        %v1599 = vpop.permute.xlu0 %1598
        %1600 = vrot.lane.b32.xlu0 %v921, 32
        %v1601 = vpop.permute.xlu0 %1600
        %1602 = vrot.lane.b32.xlu0 %v927, 32
        %v1603 = vpop.permute.xlu0 %1602
        %1604 = vrot.lane.b32.xlu0 %v931, 32
        %v1605 = vpop.permute.xlu0 %1604
        %v1610 = vcombine.low %v917, %v1587
        %v1611 = vcombine.high %v917, %v1587
        %v1613 = vunpack.c.l.s4 1983009808
        %v1614 = vunpack.c.0.s8 %v1613
        %v1615 = vlaneseq
        %v1616 = vshrl.u32 %v1615, 7
        %v1617 = vsub.s32 %v1614, %v1616
        %v1618 = vrot.slane %v1610, %v1617
        %v1620 = vunpack.c.l.s4 1983009808
        %v1621 = vunpack.c.0.s8 %v1620
        %v1622 = vlaneseq
        %v1623 = vshrl.u32 %v1622, 7
        %v1624 = vsub.s32 %v1621, %v1623
        %v1625 = vrot.slane %v1611, %v1624
        %v1626 = vcombine.low %v1575, %v1599
        %v1627 = vcombine.high %v1575, %v1599
        %v1629 = vunpack.c.l.s4 1983009808
        %v1630 = vunpack.c.0.s8 %v1629
        %v1631 = vlaneseq
        %v1632 = vshrl.u32 %v1631, 7
        %v1633 = vsub.s32 %v1630, %v1632
        %v1634 = vrot.slane %v1626, %v1633
        %v1636 = vunpack.c.l.s4 1983009808
        %v1637 = vunpack.c.0.s8 %v1636
        %v1638 = vlaneseq
        %v1639 = vshrl.u32 %v1638, 7
        %v1640 = vsub.s32 %v1637, %v1639
        %v1641 = vrot.slane %v1627, %v1640
        %v1642 = vcombine.low %v1618, %v1634
        %v1643 = vcombine.high %v1618, %v1634
        %v1645 = vunpack.c.l.s4 1934713408
        %v1646 = vunpack.c.0.s8 %v1645
        %v1647 = vlaneseq
        %v1648 = vshrl.u32 %v1647, 7
        %v1649 = vsub.s32 %v1646, %v1648
        %v1650 = vrot.slane %v1642, %v1649
        %v1652 = vunpack.c.l.s4 1934713408
        %v1653 = vunpack.c.0.s8 %v1652
        %v1654 = vlaneseq
        %v1655 = vshrl.u32 %v1654, 7
        %v1656 = vsub.s32 %v1653, %v1655
        %v1657 = vrot.slane %v1643, %v1656
        %v1658 = vcombine.low %v1625, %v1641
        %v1659 = vcombine.high %v1625, %v1641
        %v1661 = vunpack.c.l.s4 1934713408
        %v1662 = vunpack.c.0.s8 %v1661
        %v1663 = vlaneseq
        %v1664 = vshrl.u32 %v1663, 7
        %v1665 = vsub.s32 %v1662, %v1664
        %v1666 = vrot.slane %v1658, %v1665
        %v1668 = vunpack.c.l.s4 1934713408
        %v1669 = vunpack.c.0.s8 %v1668
        %v1670 = vlaneseq
        %v1671 = vshrl.u32 %v1670, 7
        %v1672 = vsub.s32 %v1669, %v1671
        %v1673 = vrot.slane %v1659, %v1672
        %v1674 = vcombine.high %v1650, 0.0
        %v1675 = vcombine.high %v1657, 0.0
        %v1676 = vcombine.high %v1666, 0.0
        %v1677 = vcombine.high %v1673, 0.0
        %v1678 = vcombine.low %v921, %v1589
        %v1679 = vcombine.high %v921, %v1589
        %v1681 = vunpack.c.l.s4 1983009808
        %v1682 = vunpack.c.0.s8 %v1681
        %v1683 = vlaneseq
        %v1684 = vshrl.u32 %v1683, 7
        %v1685 = vsub.s32 %v1682, %v1684
        %v1686 = vrot.slane %v1678, %v1685
        %v1688 = vunpack.c.l.s4 1983009808
        %v1689 = vunpack.c.0.s8 %v1688
        %v1690 = vlaneseq
        %v1691 = vshrl.u32 %v1690, 7
        %v1692 = vsub.s32 %v1689, %v1691
        %v1693 = vrot.slane %v1679, %v1692
        %v1694 = vcombine.low %v1577, %v1601
        %v1695 = vcombine.high %v1577, %v1601
        %v1697 = vunpack.c.l.s4 1983009808
        %v1698 = vunpack.c.0.s8 %v1697
        %v1699 = vlaneseq
        %v1700 = vshrl.u32 %v1699, 7
        %v1701 = vsub.s32 %v1698, %v1700
        %v1702 = vrot.slane %v1694, %v1701
        %v1704 = vunpack.c.l.s4 1983009808
        %v1705 = vunpack.c.0.s8 %v1704
        %v1706 = vlaneseq
        %v1707 = vshrl.u32 %v1706, 7
        %v1708 = vsub.s32 %v1705, %v1707
        %v1709 = vrot.slane %v1695, %v1708
        %v1710 = vcombine.low %v1686, %v1702
        %v1711 = vcombine.high %v1686, %v1702
        %v1713 = vunpack.c.l.s4 1934713408
        %v1714 = vunpack.c.0.s8 %v1713
        %v1715 = vlaneseq
        %v1716 = vshrl.u32 %v1715, 7
        %v1717 = vsub.s32 %v1714, %v1716
        %v1718 = vrot.slane %v1710, %v1717
        %v1720 = vunpack.c.l.s4 1934713408
        %v1721 = vunpack.c.0.s8 %v1720
        %v1722 = vlaneseq
        %v1723 = vshrl.u32 %v1722, 7
        %v1724 = vsub.s32 %v1721, %v1723
        %v1725 = vrot.slane %v1711, %v1724
        %v1726 = vcombine.low %v1693, %v1709
        %v1727 = vcombine.high %v1693, %v1709
        %v1729 = vunpack.c.l.s4 1934713408
        %v1730 = vunpack.c.0.s8 %v1729
        %v1731 = vlaneseq
        %v1732 = vshrl.u32 %v1731, 7
        %v1733 = vsub.s32 %v1730, %v1732
        %v1734 = vrot.slane %v1726, %v1733
        %v1736 = vunpack.c.l.s4 1934713408
        %v1737 = vunpack.c.0.s8 %v1736
        %v1738 = vlaneseq
        %v1739 = vshrl.u32 %v1738, 7
        %v1740 = vsub.s32 %v1737, %v1739
        %v1741 = vrot.slane %v1727, %v1740
        %v1742 = vcombine.high %v1718, 0.0
        %v1743 = vcombine.high %v1725, 0.0
        %v1744 = vcombine.high %v1734, 0.0
        %v1745 = vcombine.high %v1741, 0.0
        %v1746 = vcombine.low %v927, %v1591
        %v1747 = vcombine.high %v927, %v1591
        %v1749 = vunpack.c.l.s4 1983009808
        %v1750 = vunpack.c.0.s8 %v1749
        %v1751 = vlaneseq
        %v1752 = vshrl.u32 %v1751, 7
        %v1753 = vsub.s32 %v1750, %v1752
        %v1754 = vrot.slane %v1746, %v1753
        %v1756 = vunpack.c.l.s4 1983009808
        %v1757 = vunpack.c.0.s8 %v1756
        %v1758 = vlaneseq
        %v1759 = vshrl.u32 %v1758, 7
        %v1760 = vsub.s32 %v1757, %v1759
        %v1761 = vrot.slane %v1747, %v1760
        %v1762 = vcombine.low %v1579, %v1603
        %v1763 = vcombine.high %v1579, %v1603
        %v1765 = vunpack.c.l.s4 1983009808
        %v1766 = vunpack.c.0.s8 %v1765
        %v1767 = vlaneseq
        %v1768 = vshrl.u32 %v1767, 7
        %v1769 = vsub.s32 %v1766, %v1768
        %v1770 = vrot.slane %v1762, %v1769
        %v1772 = vunpack.c.l.s4 1983009808
        %v1773 = vunpack.c.0.s8 %v1772
        %v1774 = vlaneseq
        %v1775 = vshrl.u32 %v1774, 7
        %v1776 = vsub.s32 %v1773, %v1775
        %v1777 = vrot.slane %v1763, %v1776
        %v1778 = vcombine.low %v1754, %v1770
        %v1779 = vcombine.high %v1754, %v1770
        %v1781 = vunpack.c.l.s4 1934713408
        %v1782 = vunpack.c.0.s8 %v1781
        %v1783 = vlaneseq
        %v1784 = vshrl.u32 %v1783, 7
        %v1785 = vsub.s32 %v1782, %v1784
        %v1786 = vrot.slane %v1778, %v1785
        %v1788 = vunpack.c.l.s4 1934713408
        %v1789 = vunpack.c.0.s8 %v1788
        %v1790 = vlaneseq
        %v1791 = vshrl.u32 %v1790, 7
        %v1792 = vsub.s32 %v1789, %v1791
        %v1793 = vrot.slane %v1779, %v1792
        %v1794 = vcombine.low %v1761, %v1777
        %v1795 = vcombine.high %v1761, %v1777
        %v1797 = vunpack.c.l.s4 1934713408
        %v1798 = vunpack.c.0.s8 %v1797
        %v1799 = vlaneseq
        %v1800 = vshrl.u32 %v1799, 7
        %v1801 = vsub.s32 %v1798, %v1800
        %v1802 = vrot.slane %v1794, %v1801
        %v1804 = vunpack.c.l.s4 1934713408
        %v1805 = vunpack.c.0.s8 %v1804
        %v1806 = vlaneseq
        %v1807 = vshrl.u32 %v1806, 7
        %v1808 = vsub.s32 %v1805, %v1807
        %v1809 = vrot.slane %v1795, %v1808
        %v1810 = vcombine.high %v1786, 0.0
        %v1811 = vcombine.high %v1793, 0.0
        %v1812 = vcombine.high %v1802, 0.0
        %v1813 = vcombine.high %v1809, 0.0
        %v1814 = vcombine.low %v931, %v1593
        %v1815 = vcombine.high %v931, %v1593
        %v1817 = vunpack.c.l.s4 1983009808
        %v1818 = vunpack.c.0.s8 %v1817
        %v1819 = vlaneseq
        %v1820 = vshrl.u32 %v1819, 7
        %v1821 = vsub.s32 %v1818, %v1820
        %v1822 = vrot.slane %v1814, %v1821
        %v1824 = vunpack.c.l.s4 1983009808
        %v1825 = vunpack.c.0.s8 %v1824
        %v1826 = vlaneseq
        %v1827 = vshrl.u32 %v1826, 7
        %v1828 = vsub.s32 %v1825, %v1827
        %v1829 = vrot.slane %v1815, %v1828
        %v1830 = vcombine.low %v1581, %v1605
        %v1831 = vcombine.high %v1581, %v1605
        %v1833 = vunpack.c.l.s4 1983009808
        %v1834 = vunpack.c.0.s8 %v1833
        %v1835 = vlaneseq
        %v1836 = vshrl.u32 %v1835, 7
        %v1837 = vsub.s32 %v1834, %v1836
        %v1838 = vrot.slane %v1830, %v1837
        %v1840 = vunpack.c.l.s4 1983009808
        %v1841 = vunpack.c.0.s8 %v1840
        %v1842 = vlaneseq
        %v1843 = vshrl.u32 %v1842, 7
        %v1844 = vsub.s32 %v1841, %v1843
        %v1845 = vrot.slane %v1831, %v1844
        %v1846 = vcombine.low %v1822, %v1838
        %v1847 = vcombine.high %v1822, %v1838
        %v1849 = vunpack.c.l.s4 1934713408
        %v1850 = vunpack.c.0.s8 %v1849
        %v1851 = vlaneseq
        %v1852 = vshrl.u32 %v1851, 7
        %v1853 = vsub.s32 %v1850, %v1852
        %v1854 = vrot.slane %v1846, %v1853
        %v1856 = vunpack.c.l.s4 1934713408
        %v1857 = vunpack.c.0.s8 %v1856
        %v1858 = vlaneseq
        %v1859 = vshrl.u32 %v1858, 7
        %v1860 = vsub.s32 %v1857, %v1859
        %v1861 = vrot.slane %v1847, %v1860
        %v1862 = vcombine.low %v1829, %v1845
        %v1863 = vcombine.high %v1829, %v1845
        %v1865 = vunpack.c.l.s4 1934713408
        %v1866 = vunpack.c.0.s8 %v1865
        %v1867 = vlaneseq
        %v1868 = vshrl.u32 %v1867, 7
        %v1869 = vsub.s32 %v1866, %v1868
        %v1870 = vrot.slane %v1862, %v1869
        %v1872 = vunpack.c.l.s4 1934713408
        %v1873 = vunpack.c.0.s8 %v1872
        %v1874 = vlaneseq
        %v1875 = vshrl.u32 %v1874, 7
        %v1876 = vsub.s32 %v1873, %v1875
        %v1877 = vrot.slane %v1863, %v1876
        %v1878 = vcombine.high %v1854, 0.0
        %v1879 = vcombine.high %v1861, 0.0
        %v1880 = vcombine.high %v1870, 0.0
        %v1881 = vcombine.high %v1877, 0.0
        %v1882 = vcombine.low %v1650, %v1657
        %v1884 = vunpack.c.l.s4 1983009808
        %v1885 = vunpack.c.0.s8 %v1884
        %v1886 = vlaneseq
        %v1887 = vshrl.u32 %v1886, 7
        %v1888 = vsub.s32 %v1885, %v1887
        %v1889 = vrot.slane %v1882, %v1888
        %v1890 = vcombine.low %v1674, %v1675
        %v1892 = vunpack.c.l.s4 1983009808
        %v1893 = vunpack.c.0.s8 %v1892
        %v1894 = vlaneseq
        %v1895 = vshrl.u32 %v1894, 7
        %v1896 = vsub.s32 %v1893, %v1895
        %v1897 = vrot.slane %v1890, %v1896
        %v1898 = vcombine.low %v1666, %v1673
        %v1900 = vunpack.c.l.s4 1983009808
        %v1901 = vunpack.c.0.s8 %v1900
        %v1902 = vlaneseq
        %v1903 = vshrl.u32 %v1902, 7
        %v1904 = vsub.s32 %v1901, %v1903
        %v1905 = vrot.slane %v1898, %v1904
        %v1906 = vcombine.low %v1676, %v1677
        %v1908 = vunpack.c.l.s4 1983009808
        %v1909 = vunpack.c.0.s8 %v1908
        %v1910 = vlaneseq
        %v1911 = vshrl.u32 %v1910, 7
        %v1912 = vsub.s32 %v1909, %v1911
        %v1913 = vrot.slane %v1906, %v1912
        %v1914 = vcombine.low %v1889, %v1897
        %v1915 = vcombine.high %v1889, %v1897
        %v1917 = vunpack.c.l.s4 1934713408
        %v1918 = vunpack.c.0.s8 %v1917
        %v1919 = vlaneseq
        %v1920 = vshrl.u32 %v1919, 7
        %v1921 = vsub.s32 %v1918, %v1920
        %v1922 = vrot.slane %v1914, %v1921
        %v1924 = vunpack.c.l.s4 1934713408
        %v1925 = vunpack.c.0.s8 %v1924
        %v1926 = vlaneseq
        %v1927 = vshrl.u32 %v1926, 7
        %v1928 = vsub.s32 %v1925, %v1927
        %v1929 = vrot.slane %v1915, %v1928
        %v1930 = vcombine.low %v1905, %v1913
        %v1931 = vcombine.high %v1905, %v1913
        %v1933 = vunpack.c.l.s4 1934713408
        %v1934 = vunpack.c.0.s8 %v1933
        %v1935 = vlaneseq
        %v1936 = vshrl.u32 %v1935, 7
        %v1937 = vsub.s32 %v1934, %v1936
        %v1938 = vrot.slane %v1930, %v1937
        %v1940 = vunpack.c.l.s4 1934713408
        %v1941 = vunpack.c.0.s8 %v1940
        %v1942 = vlaneseq
        %v1943 = vshrl.u32 %v1942, 7
        %v1944 = vsub.s32 %v1941, %v1943
        %v1945 = vrot.slane %v1931, %v1944
        %v1946 = vcombine.low %v1922, %v1938
        %v1947 = vcombine.high %v1922, %v1938
        %v1948 = vcombine.low %v1929, %v1945
        %v1949 = vcombine.high %v1929, %v1945
        %v1950 = vcombine.low %v1718, %v1725
        %v1952 = vunpack.c.l.s4 1983009808
        %v1953 = vunpack.c.0.s8 %v1952
        %v1954 = vlaneseq
        %v1955 = vshrl.u32 %v1954, 7
        %v1956 = vsub.s32 %v1953, %v1955
        %v1957 = vrot.slane %v1950, %v1956
        %v1958 = vcombine.low %v1742, %v1743
        %v1960 = vunpack.c.l.s4 1983009808
        %v1961 = vunpack.c.0.s8 %v1960
        %v1962 = vlaneseq
        %v1963 = vshrl.u32 %v1962, 7
        %v1964 = vsub.s32 %v1961, %v1963
        %v1965 = vrot.slane %v1958, %v1964
        %v1966 = vcombine.low %v1734, %v1741
        %v1968 = vunpack.c.l.s4 1983009808
        %v1969 = vunpack.c.0.s8 %v1968
        %v1970 = vlaneseq
        %v1971 = vshrl.u32 %v1970, 7
        %v1972 = vsub.s32 %v1969, %v1971
        %v1973 = vrot.slane %v1966, %v1972
        %v1974 = vcombine.low %v1744, %v1745
        %v1976 = vunpack.c.l.s4 1983009808
        %v1977 = vunpack.c.0.s8 %v1976
        %v1978 = vlaneseq
        %v1979 = vshrl.u32 %v1978, 7
        %v1980 = vsub.s32 %v1977, %v1979
        %v1981 = vrot.slane %v1974, %v1980
        %v1982 = vcombine.low %v1957, %v1965
        %v1983 = vcombine.high %v1957, %v1965
        %v1985 = vunpack.c.l.s4 1934713408
        %v1986 = vunpack.c.0.s8 %v1985
        %v1987 = vlaneseq
        %v1988 = vshrl.u32 %v1987, 7
        %v1989 = vsub.s32 %v1986, %v1988
        %v1990 = vrot.slane %v1982, %v1989
        %v1992 = vunpack.c.l.s4 1934713408
        %v1993 = vunpack.c.0.s8 %v1992
        %v1994 = vlaneseq
        %v1995 = vshrl.u32 %v1994, 7
        %v1996 = vsub.s32 %v1993, %v1995
        %v1997 = vrot.slane %v1983, %v1996
        %v1998 = vcombine.low %v1973, %v1981
        %v1999 = vcombine.high %v1973, %v1981
        %v2001 = vunpack.c.l.s4 1934713408
        %v2002 = vunpack.c.0.s8 %v2001
        %v2003 = vlaneseq
        %v2004 = vshrl.u32 %v2003, 7
        %v2005 = vsub.s32 %v2002, %v2004
        %v2006 = vrot.slane %v1998, %v2005
        %v2008 = vunpack.c.l.s4 1934713408
        %v2009 = vunpack.c.0.s8 %v2008
        %v2010 = vlaneseq
        %v2011 = vshrl.u32 %v2010, 7
        %v2012 = vsub.s32 %v2009, %v2011
        %v2013 = vrot.slane %v1999, %v2012
        %v2014 = vcombine.low %v1990, %v2006
        %v2015 = vcombine.high %v1990, %v2006
        %v2016 = vcombine.low %v1997, %v2013
        %v2017 = vcombine.high %v1997, %v2013
        %v2018 = vcombine.low %v1786, %v1793
        %v2020 = vunpack.c.l.s4 1983009808
        %v2021 = vunpack.c.0.s8 %v2020
        %v2022 = vlaneseq
        %v2023 = vshrl.u32 %v2022, 7
        %v2024 = vsub.s32 %v2021, %v2023
        %v2025 = vrot.slane %v2018, %v2024
        %v2026 = vcombine.low %v1810, %v1811
        %v2028 = vunpack.c.l.s4 1983009808
        %v2029 = vunpack.c.0.s8 %v2028
        %v2030 = vlaneseq
        %v2031 = vshrl.u32 %v2030, 7
        %v2032 = vsub.s32 %v2029, %v2031
        %v2033 = vrot.slane %v2026, %v2032
        %v2034 = vcombine.low %v1802, %v1809
        %v2036 = vunpack.c.l.s4 1983009808
        %v2037 = vunpack.c.0.s8 %v2036
        %v2038 = vlaneseq
        %v2039 = vshrl.u32 %v2038, 7
        %v2040 = vsub.s32 %v2037, %v2039
        %v2041 = vrot.slane %v2034, %v2040
        %v2042 = vcombine.low %v1812, %v1813
        %v2044 = vunpack.c.l.s4 1983009808
        %v2045 = vunpack.c.0.s8 %v2044
        %v2046 = vlaneseq
        %v2047 = vshrl.u32 %v2046, 7
        %v2048 = vsub.s32 %v2045, %v2047
        %v2049 = vrot.slane %v2042, %v2048
        %v2050 = vcombine.low %v2025, %v2033
        %v2051 = vcombine.high %v2025, %v2033
        %v2053 = vunpack.c.l.s4 1934713408
        %v2054 = vunpack.c.0.s8 %v2053
        %v2055 = vlaneseq
        %v2056 = vshrl.u32 %v2055, 7
        %v2057 = vsub.s32 %v2054, %v2056
        %v2058 = vrot.slane %v2050, %v2057
        %v2060 = vunpack.c.l.s4 1934713408
        %v2061 = vunpack.c.0.s8 %v2060
        %v2062 = vlaneseq
        %v2063 = vshrl.u32 %v2062, 7
        %v2064 = vsub.s32 %v2061, %v2063
        %v2065 = vrot.slane %v2051, %v2064
        %v2066 = vcombine.low %v2041, %v2049
        %v2067 = vcombine.high %v2041, %v2049
        %v2069 = vunpack.c.l.s4 1934713408
        %v2070 = vunpack.c.0.s8 %v2069
        %v2071 = vlaneseq
        %v2072 = vshrl.u32 %v2071, 7
        %v2073 = vsub.s32 %v2070, %v2072
        %v2074 = vrot.slane %v2066, %v2073
        %v2076 = vunpack.c.l.s4 1934713408
        %v2077 = vunpack.c.0.s8 %v2076
        %v2078 = vlaneseq
        %v2079 = vshrl.u32 %v2078, 7
        %v2080 = vsub.s32 %v2077, %v2079
        %v2081 = vrot.slane %v2067, %v2080
        %v2082 = vcombine.low %v2058, %v2074
        %v2083 = vcombine.high %v2058, %v2074
        %v2084 = vcombine.low %v2065, %v2081
        %v2085 = vcombine.high %v2065, %v2081
        %v2086 = vcombine.low %v1854, %v1861
        %v2088 = vunpack.c.l.s4 1983009808
        %v2089 = vunpack.c.0.s8 %v2088
        %v2090 = vlaneseq
        %v2091 = vshrl.u32 %v2090, 7
        %v2092 = vsub.s32 %v2089, %v2091
        %v2093 = vrot.slane %v2086, %v2092
        %v2094 = vcombine.low %v1878, %v1879
        %v2096 = vunpack.c.l.s4 1983009808
        %v2097 = vunpack.c.0.s8 %v2096
        %v2098 = vlaneseq
        %v2099 = vshrl.u32 %v2098, 7
        %v2100 = vsub.s32 %v2097, %v2099
        %v2101 = vrot.slane %v2094, %v2100
        %v2102 = vcombine.low %v1870, %v1877
        %v2104 = vunpack.c.l.s4 1983009808
        %v2105 = vunpack.c.0.s8 %v2104
        %v2106 = vlaneseq
        %v2107 = vshrl.u32 %v2106, 7
        %v2108 = vsub.s32 %v2105, %v2107
        %v2109 = vrot.slane %v2102, %v2108
        %v2110 = vcombine.low %v1880, %v1881
        %v2112 = vunpack.c.l.s4 1983009808
        %v2113 = vunpack.c.0.s8 %v2112
        %v2114 = vlaneseq
        %v2115 = vshrl.u32 %v2114, 7
        %v2116 = vsub.s32 %v2113, %v2115
        %v2117 = vrot.slane %v2110, %v2116
        %v2118 = vcombine.low %v2093, %v2101
        %v2119 = vcombine.high %v2093, %v2101
        %v2121 = vunpack.c.l.s4 1934713408
        %v2122 = vunpack.c.0.s8 %v2121
        %v2123 = vlaneseq
        %v2124 = vshrl.u32 %v2123, 7
        %v2125 = vsub.s32 %v2122, %v2124
        %v2126 = vrot.slane %v2118, %v2125
        %v2128 = vunpack.c.l.s4 1934713408
        %v2129 = vunpack.c.0.s8 %v2128
        %v2130 = vlaneseq
        %v2131 = vshrl.u32 %v2130, 7
        %v2132 = vsub.s32 %v2129, %v2131
        %v2133 = vrot.slane %v2119, %v2132
        %v2134 = vcombine.low %v2109, %v2117
        %v2135 = vcombine.high %v2109, %v2117
        %v2137 = vunpack.c.l.s4 1934713408
        %v2138 = vunpack.c.0.s8 %v2137
        %v2139 = vlaneseq
        %v2140 = vshrl.u32 %v2139, 7
        %v2141 = vsub.s32 %v2138, %v2140
        %v2142 = vrot.slane %v2134, %v2141
        %v2144 = vunpack.c.l.s4 1934713408
        %v2145 = vunpack.c.0.s8 %v2144
        %v2146 = vlaneseq
        %v2147 = vshrl.u32 %v2146, 7
        %v2148 = vsub.s32 %v2145, %v2147
        %v2149 = vrot.slane %v2135, %v2148
        %v2150 = vcombine.low %v2126, %v2142
        %v2151 = vcombine.high %v2126, %v2142
        %v2152 = vcombine.low %v2133, %v2149
        %v2153 = vcombine.high %v2133, %v2149
        %2158 = vrot.lane.b32.xlu0 %v968, 96
        %v2159 = vpop.permute.xlu0 %2158
        %2160 = vrot.lane.b32.xlu0 %v971, 96
        %v2161 = vpop.permute.xlu0 %2160
        %2162 = vrot.lane.b32.xlu0 %v976, 96
        %v2163 = vpop.permute.xlu0 %2162
        %2164 = vrot.lane.b32.xlu0 %v979, 96
        %v2165 = vpop.permute.xlu0 %2164
        %2170 = vrot.lane.b32.xlu0 %v968, 64
        %v2171 = vpop.permute.xlu0 %2170
        %2172 = vrot.lane.b32.xlu0 %v971, 64
        %v2173 = vpop.permute.xlu0 %2172
        %2174 = vrot.lane.b32.xlu0 %v976, 64
        %v2175 = vpop.permute.xlu0 %2174
        %2176 = vrot.lane.b32.xlu0 %v979, 64
        %v2177 = vpop.permute.xlu0 %2176
        %2182 = vrot.lane.b32.xlu0 %v968, 32
        %v2183 = vpop.permute.xlu0 %2182
        %2184 = vrot.lane.b32.xlu0 %v971, 32
        %v2185 = vpop.permute.xlu0 %2184
        %2186 = vrot.lane.b32.xlu0 %v976, 32
        %v2187 = vpop.permute.xlu0 %2186
        %2188 = vrot.lane.b32.xlu0 %v979, 32
        %v2189 = vpop.permute.xlu0 %2188
        %v2194 = vcombine.low %v968, %v2171
        %v2195 = vcombine.high %v968, %v2171
        %v2197 = vunpack.c.l.s4 1983009808
        %v2198 = vunpack.c.0.s8 %v2197
        %v2199 = vlaneseq
        %v2200 = vshrl.u32 %v2199, 7
        %v2201 = vsub.s32 %v2198, %v2200
        %v2202 = vrot.slane %v2194, %v2201
        %v2204 = vunpack.c.l.s4 1983009808
        %v2205 = vunpack.c.0.s8 %v2204
        %v2206 = vlaneseq
        %v2207 = vshrl.u32 %v2206, 7
        %v2208 = vsub.s32 %v2205, %v2207
        %v2209 = vrot.slane %v2195, %v2208
        %v2210 = vcombine.low %v2159, %v2183
        %v2211 = vcombine.high %v2159, %v2183
        %v2213 = vunpack.c.l.s4 1983009808
        %v2214 = vunpack.c.0.s8 %v2213
        %v2215 = vlaneseq
        %v2216 = vshrl.u32 %v2215, 7
        %v2217 = vsub.s32 %v2214, %v2216
        %v2218 = vrot.slane %v2210, %v2217
        %v2220 = vunpack.c.l.s4 1983009808
        %v2221 = vunpack.c.0.s8 %v2220
        %v2222 = vlaneseq
        %v2223 = vshrl.u32 %v2222, 7
        %v2224 = vsub.s32 %v2221, %v2223
        %v2225 = vrot.slane %v2211, %v2224
        %v2226 = vcombine.low %v2202, %v2218
        %v2227 = vcombine.high %v2202, %v2218
        %v2229 = vunpack.c.l.s4 1934713408
        %v2230 = vunpack.c.0.s8 %v2229
        %v2231 = vlaneseq
        %v2232 = vshrl.u32 %v2231, 7
        %v2233 = vsub.s32 %v2230, %v2232
        %v2234 = vrot.slane %v2226, %v2233
        %v2236 = vunpack.c.l.s4 1934713408
        %v2237 = vunpack.c.0.s8 %v2236
        %v2238 = vlaneseq
        %v2239 = vshrl.u32 %v2238, 7
        %v2240 = vsub.s32 %v2237, %v2239
        %v2241 = vrot.slane %v2227, %v2240
        %v2242 = vcombine.low %v2209, %v2225
        %v2243 = vcombine.high %v2209, %v2225
        %v2245 = vunpack.c.l.s4 1934713408
        %v2246 = vunpack.c.0.s8 %v2245
        %v2247 = vlaneseq
        %v2248 = vshrl.u32 %v2247, 7
        %v2249 = vsub.s32 %v2246, %v2248
        %v2250 = vrot.slane %v2242, %v2249
        %v2252 = vunpack.c.l.s4 1934713408
        %v2253 = vunpack.c.0.s8 %v2252
        %v2254 = vlaneseq
        %v2255 = vshrl.u32 %v2254, 7
        %v2256 = vsub.s32 %v2253, %v2255
        %v2257 = vrot.slane %v2243, %v2256
        %v2258 = vcombine.high %v2234, 0.0
        %v2259 = vcombine.high %v2241, 0.0
        %v2260 = vcombine.high %v2250, 0.0
        %v2261 = vcombine.high %v2257, 0.0
        %v2262 = vcombine.low %v971, %v2173
        %v2263 = vcombine.high %v971, %v2173
        %v2265 = vunpack.c.l.s4 1983009808
        %v2266 = vunpack.c.0.s8 %v2265
        %v2267 = vlaneseq
        %v2268 = vshrl.u32 %v2267, 7
        %v2269 = vsub.s32 %v2266, %v2268
        %v2270 = vrot.slane %v2262, %v2269
        %v2272 = vunpack.c.l.s4 1983009808
        %v2273 = vunpack.c.0.s8 %v2272
        %v2274 = vlaneseq
        %v2275 = vshrl.u32 %v2274, 7
        %v2276 = vsub.s32 %v2273, %v2275
        %v2277 = vrot.slane %v2263, %v2276
        %v2278 = vcombine.low %v2161, %v2185
        %v2279 = vcombine.high %v2161, %v2185
        %v2281 = vunpack.c.l.s4 1983009808
        %v2282 = vunpack.c.0.s8 %v2281
        %v2283 = vlaneseq
        %v2284 = vshrl.u32 %v2283, 7
        %v2285 = vsub.s32 %v2282, %v2284
        %v2286 = vrot.slane %v2278, %v2285
        %v2288 = vunpack.c.l.s4 1983009808
        %v2289 = vunpack.c.0.s8 %v2288
        %v2290 = vlaneseq
        %v2291 = vshrl.u32 %v2290, 7
        %v2292 = vsub.s32 %v2289, %v2291
        %v2293 = vrot.slane %v2279, %v2292
        %v2294 = vcombine.low %v2270, %v2286
        %v2295 = vcombine.high %v2270, %v2286
        %v2297 = vunpack.c.l.s4 1934713408
        %v2298 = vunpack.c.0.s8 %v2297
        %v2299 = vlaneseq
        %v2300 = vshrl.u32 %v2299, 7
        %v2301 = vsub.s32 %v2298, %v2300
        %v2302 = vrot.slane %v2294, %v2301
        %v2304 = vunpack.c.l.s4 1934713408
        %v2305 = vunpack.c.0.s8 %v2304
        %v2306 = vlaneseq
        %v2307 = vshrl.u32 %v2306, 7
        %v2308 = vsub.s32 %v2305, %v2307
        %v2309 = vrot.slane %v2295, %v2308
        %v2310 = vcombine.low %v2277, %v2293
        %v2311 = vcombine.high %v2277, %v2293
        %v2313 = vunpack.c.l.s4 1934713408
        %v2314 = vunpack.c.0.s8 %v2313
        %v2315 = vlaneseq
        %v2316 = vshrl.u32 %v2315, 7
        %v2317 = vsub.s32 %v2314, %v2316
        %v2318 = vrot.slane %v2310, %v2317
        %v2320 = vunpack.c.l.s4 1934713408
        %v2321 = vunpack.c.0.s8 %v2320
        %v2322 = vlaneseq
        %v2323 = vshrl.u32 %v2322, 7
        %v2324 = vsub.s32 %v2321, %v2323
        %v2325 = vrot.slane %v2311, %v2324
        %v2326 = vcombine.high %v2302, 0.0
        %v2327 = vcombine.high %v2309, 0.0
        %v2328 = vcombine.high %v2318, 0.0
        %v2329 = vcombine.high %v2325, 0.0
        %v2330 = vcombine.low %v976, %v2175
        %v2331 = vcombine.high %v976, %v2175
        %v2333 = vunpack.c.l.s4 1983009808
        %v2334 = vunpack.c.0.s8 %v2333
        %v2335 = vlaneseq
        %v2336 = vshrl.u32 %v2335, 7
        %v2337 = vsub.s32 %v2334, %v2336
        %v2338 = vrot.slane %v2330, %v2337
        %v2340 = vunpack.c.l.s4 1983009808
        %v2341 = vunpack.c.0.s8 %v2340
        %v2342 = vlaneseq
        %v2343 = vshrl.u32 %v2342, 7
        %v2344 = vsub.s32 %v2341, %v2343
        %v2345 = vrot.slane %v2331, %v2344
        %v2346 = vcombine.low %v2163, %v2187
        %v2347 = vcombine.high %v2163, %v2187
        %v2349 = vunpack.c.l.s4 1983009808
        %v2350 = vunpack.c.0.s8 %v2349
        %v2351 = vlaneseq
        %v2352 = vshrl.u32 %v2351, 7
        %v2353 = vsub.s32 %v2350, %v2352
        %v2354 = vrot.slane %v2346, %v2353
        %v2356 = vunpack.c.l.s4 1983009808
        %v2357 = vunpack.c.0.s8 %v2356
        %v2358 = vlaneseq
        %v2359 = vshrl.u32 %v2358, 7
        %v2360 = vsub.s32 %v2357, %v2359
        %v2361 = vrot.slane %v2347, %v2360
        %v2362 = vcombine.low %v2338, %v2354
        %v2363 = vcombine.high %v2338, %v2354
        %v2365 = vunpack.c.l.s4 1934713408
        %v2366 = vunpack.c.0.s8 %v2365
        %v2367 = vlaneseq
        %v2368 = vshrl.u32 %v2367, 7
        %v2369 = vsub.s32 %v2366, %v2368
        %v2370 = vrot.slane %v2362, %v2369
        %v2372 = vunpack.c.l.s4 1934713408
        %v2373 = vunpack.c.0.s8 %v2372
        %v2374 = vlaneseq
        %v2375 = vshrl.u32 %v2374, 7
        %v2376 = vsub.s32 %v2373, %v2375
        %v2377 = vrot.slane %v2363, %v2376
        %v2378 = vcombine.low %v2345, %v2361
        %v2379 = vcombine.high %v2345, %v2361
        %v2381 = vunpack.c.l.s4 1934713408
        %v2382 = vunpack.c.0.s8 %v2381
        %v2383 = vlaneseq
        %v2384 = vshrl.u32 %v2383, 7
        %v2385 = vsub.s32 %v2382, %v2384
        %v2386 = vrot.slane %v2378, %v2385
        %v2388 = vunpack.c.l.s4 1934713408
        %v2389 = vunpack.c.0.s8 %v2388
        %v2390 = vlaneseq
        %v2391 = vshrl.u32 %v2390, 7
        %v2392 = vsub.s32 %v2389, %v2391
        %v2393 = vrot.slane %v2379, %v2392
        %v2394 = vcombine.high %v2370, 0.0
        %v2395 = vcombine.high %v2377, 0.0
        %v2396 = vcombine.high %v2386, 0.0
        %v2397 = vcombine.high %v2393, 0.0
        %v2398 = vcombine.low %v979, %v2177
        %v2399 = vcombine.high %v979, %v2177
        %v2401 = vunpack.c.l.s4 1983009808
        %v2402 = vunpack.c.0.s8 %v2401
        %v2403 = vlaneseq
        %v2404 = vshrl.u32 %v2403, 7
        %v2405 = vsub.s32 %v2402, %v2404
        %v2406 = vrot.slane %v2398, %v2405
        %v2408 = vunpack.c.l.s4 1983009808
        %v2409 = vunpack.c.0.s8 %v2408
        %v2410 = vlaneseq
        %v2411 = vshrl.u32 %v2410, 7
        %v2412 = vsub.s32 %v2409, %v2411
        %v2413 = vrot.slane %v2399, %v2412
        %v2414 = vcombine.low %v2165, %v2189
        %v2415 = vcombine.high %v2165, %v2189
        %v2417 = vunpack.c.l.s4 1983009808
        %v2418 = vunpack.c.0.s8 %v2417
        %v2419 = vlaneseq
        %v2420 = vshrl.u32 %v2419, 7
        %v2421 = vsub.s32 %v2418, %v2420
        %v2422 = vrot.slane %v2414, %v2421
        %v2424 = vunpack.c.l.s4 1983009808
        %v2425 = vunpack.c.0.s8 %v2424
        %v2426 = vlaneseq
        %v2427 = vshrl.u32 %v2426, 7
        %v2428 = vsub.s32 %v2425, %v2427
        %v2429 = vrot.slane %v2415, %v2428
        %v2430 = vcombine.low %v2406, %v2422
        %v2431 = vcombine.high %v2406, %v2422
        %v2433 = vunpack.c.l.s4 1934713408
        %v2434 = vunpack.c.0.s8 %v2433
        %v2435 = vlaneseq
        %v2436 = vshrl.u32 %v2435, 7
        %v2437 = vsub.s32 %v2434, %v2436
        %v2438 = vrot.slane %v2430, %v2437
        %v2440 = vunpack.c.l.s4 1934713408
        %v2441 = vunpack.c.0.s8 %v2440
        %v2442 = vlaneseq
        %v2443 = vshrl.u32 %v2442, 7
        %v2444 = vsub.s32 %v2441, %v2443
        %v2445 = vrot.slane %v2431, %v2444
        %v2446 = vcombine.low %v2413, %v2429
        %v2447 = vcombine.high %v2413, %v2429
        %v2449 = vunpack.c.l.s4 1934713408
        %v2450 = vunpack.c.0.s8 %v2449
        %v2451 = vlaneseq
        %v2452 = vshrl.u32 %v2451, 7
        %v2453 = vsub.s32 %v2450, %v2452
        %v2454 = vrot.slane %v2446, %v2453
        %v2456 = vunpack.c.l.s4 1934713408
        %v2457 = vunpack.c.0.s8 %v2456
        %v2458 = vlaneseq
        %v2459 = vshrl.u32 %v2458, 7
        %v2460 = vsub.s32 %v2457, %v2459
        %v2461 = vrot.slane %v2447, %v2460
        %v2462 = vcombine.high %v2438, 0.0
        %v2463 = vcombine.high %v2445, 0.0
        %v2464 = vcombine.high %v2454, 0.0
        %v2465 = vcombine.high %v2461, 0.0
        %v2466 = vcombine.low %v2234, %v2241
        %v2468 = vunpack.c.l.s4 1983009808
        %v2469 = vunpack.c.0.s8 %v2468
        %v2470 = vlaneseq
        %v2471 = vshrl.u32 %v2470, 7
        %v2472 = vsub.s32 %v2469, %v2471
        %v2473 = vrot.slane %v2466, %v2472
        %v2474 = vcombine.low %v2258, %v2259
        %v2476 = vunpack.c.l.s4 1983009808
        %v2477 = vunpack.c.0.s8 %v2476
        %v2478 = vlaneseq
        %v2479 = vshrl.u32 %v2478, 7
        %v2480 = vsub.s32 %v2477, %v2479
        %v2481 = vrot.slane %v2474, %v2480
        %v2482 = vcombine.low %v2250, %v2257
        %v2484 = vunpack.c.l.s4 1983009808
        %v2485 = vunpack.c.0.s8 %v2484
        %v2486 = vlaneseq
        %v2487 = vshrl.u32 %v2486, 7
        %v2488 = vsub.s32 %v2485, %v2487
        %v2489 = vrot.slane %v2482, %v2488
        %v2490 = vcombine.low %v2260, %v2261
        %v2492 = vunpack.c.l.s4 1983009808
        %v2493 = vunpack.c.0.s8 %v2492
        %v2494 = vlaneseq
        %v2495 = vshrl.u32 %v2494, 7
        %v2496 = vsub.s32 %v2493, %v2495
        %v2497 = vrot.slane %v2490, %v2496
        %v2498 = vcombine.low %v2473, %v2481
        %v2499 = vcombine.high %v2473, %v2481
        %v2501 = vunpack.c.l.s4 1934713408
        %v2502 = vunpack.c.0.s8 %v2501
        %v2503 = vlaneseq
        %v2504 = vshrl.u32 %v2503, 7
        %v2505 = vsub.s32 %v2502, %v2504
        %v2506 = vrot.slane %v2498, %v2505
        %v2508 = vunpack.c.l.s4 1934713408
        %v2509 = vunpack.c.0.s8 %v2508
        %v2510 = vlaneseq
        %v2511 = vshrl.u32 %v2510, 7
        %v2512 = vsub.s32 %v2509, %v2511
        %v2513 = vrot.slane %v2499, %v2512
        %v2514 = vcombine.low %v2489, %v2497
        %v2515 = vcombine.high %v2489, %v2497
        %v2517 = vunpack.c.l.s4 1934713408
        %v2518 = vunpack.c.0.s8 %v2517
        %v2519 = vlaneseq
        %v2520 = vshrl.u32 %v2519, 7
        %v2521 = vsub.s32 %v2518, %v2520
        %v2522 = vrot.slane %v2514, %v2521
        %v2524 = vunpack.c.l.s4 1934713408
        %v2525 = vunpack.c.0.s8 %v2524
        %v2526 = vlaneseq
        %v2527 = vshrl.u32 %v2526, 7
        %v2528 = vsub.s32 %v2525, %v2527
        %v2529 = vrot.slane %v2515, %v2528
        %v2530 = vcombine.low %v2506, %v2522
        %v2531 = vcombine.high %v2506, %v2522
        %v2532 = vcombine.low %v2513, %v2529
        %v2533 = vcombine.high %v2513, %v2529
        %v2534 = vcombine.low %v2302, %v2309
        %v2536 = vunpack.c.l.s4 1983009808
        %v2537 = vunpack.c.0.s8 %v2536
        %v2538 = vlaneseq
        %v2539 = vshrl.u32 %v2538, 7
        %v2540 = vsub.s32 %v2537, %v2539
        %v2541 = vrot.slane %v2534, %v2540
        %v2542 = vcombine.low %v2326, %v2327
        %v2544 = vunpack.c.l.s4 1983009808
        %v2545 = vunpack.c.0.s8 %v2544
        %v2546 = vlaneseq
        %v2547 = vshrl.u32 %v2546, 7
        %v2548 = vsub.s32 %v2545, %v2547
        %v2549 = vrot.slane %v2542, %v2548
        %v2550 = vcombine.low %v2318, %v2325
        %v2552 = vunpack.c.l.s4 1983009808
        %v2553 = vunpack.c.0.s8 %v2552
        %v2554 = vlaneseq
        %v2555 = vshrl.u32 %v2554, 7
        %v2556 = vsub.s32 %v2553, %v2555
        %v2557 = vrot.slane %v2550, %v2556
        %v2558 = vcombine.low %v2328, %v2329
        %v2560 = vunpack.c.l.s4 1983009808
        %v2561 = vunpack.c.0.s8 %v2560
        %v2562 = vlaneseq
        %v2563 = vshrl.u32 %v2562, 7
        %v2564 = vsub.s32 %v2561, %v2563
        %v2565 = vrot.slane %v2558, %v2564
        %v2566 = vcombine.low %v2541, %v2549
        %v2567 = vcombine.high %v2541, %v2549
        %v2569 = vunpack.c.l.s4 1934713408
        %v2570 = vunpack.c.0.s8 %v2569
        %v2571 = vlaneseq
        %v2572 = vshrl.u32 %v2571, 7
        %v2573 = vsub.s32 %v2570, %v2572
        %v2574 = vrot.slane %v2566, %v2573
        %v2576 = vunpack.c.l.s4 1934713408
        %v2577 = vunpack.c.0.s8 %v2576
        %v2578 = vlaneseq
        %v2579 = vshrl.u32 %v2578, 7
        %v2580 = vsub.s32 %v2577, %v2579
        %v2581 = vrot.slane %v2567, %v2580
        %v2582 = vcombine.low %v2557, %v2565
        %v2583 = vcombine.high %v2557, %v2565
        %v2585 = vunpack.c.l.s4 1934713408
        %v2586 = vunpack.c.0.s8 %v2585
        %v2587 = vlaneseq
        %v2588 = vshrl.u32 %v2587, 7
        %v2589 = vsub.s32 %v2586, %v2588
        %v2590 = vrot.slane %v2582, %v2589
        %v2592 = vunpack.c.l.s4 1934713408
        %v2593 = vunpack.c.0.s8 %v2592
        %v2594 = vlaneseq
        %v2595 = vshrl.u32 %v2594, 7
        %v2596 = vsub.s32 %v2593, %v2595
        %v2597 = vrot.slane %v2583, %v2596
        %v2598 = vcombine.low %v2574, %v2590
        %v2599 = vcombine.high %v2574, %v2590
        %v2600 = vcombine.low %v2581, %v2597
        %v2601 = vcombine.high %v2581, %v2597
        %v2602 = vcombine.low %v2370, %v2377
        %v2604 = vunpack.c.l.s4 1983009808
        %v2605 = vunpack.c.0.s8 %v2604
        %v2606 = vlaneseq
        %v2607 = vshrl.u32 %v2606, 7
        %v2608 = vsub.s32 %v2605, %v2607
        %v2609 = vrot.slane %v2602, %v2608
        %v2610 = vcombine.low %v2394, %v2395
        %v2612 = vunpack.c.l.s4 1983009808
        %v2613 = vunpack.c.0.s8 %v2612
        %v2614 = vlaneseq
        %v2615 = vshrl.u32 %v2614, 7
        %v2616 = vsub.s32 %v2613, %v2615
        %v2617 = vrot.slane %v2610, %v2616
        %v2618 = vcombine.low %v2386, %v2393
        %v2620 = vunpack.c.l.s4 1983009808
        %v2621 = vunpack.c.0.s8 %v2620
        %v2622 = vlaneseq
        %v2623 = vshrl.u32 %v2622, 7
        %v2624 = vsub.s32 %v2621, %v2623
        %v2625 = vrot.slane %v2618, %v2624
        %v2626 = vcombine.low %v2396, %v2397
        %v2628 = vunpack.c.l.s4 1983009808
        %v2629 = vunpack.c.0.s8 %v2628
        %v2630 = vlaneseq
        %v2631 = vshrl.u32 %v2630, 7
        %v2632 = vsub.s32 %v2629, %v2631
        %v2633 = vrot.slane %v2626, %v2632
        %v2634 = vcombine.low %v2609, %v2617
        %v2635 = vcombine.high %v2609, %v2617
        %v2637 = vunpack.c.l.s4 1934713408
        %v2638 = vunpack.c.0.s8 %v2637
        %v2639 = vlaneseq
        %v2640 = vshrl.u32 %v2639, 7
        %v2641 = vsub.s32 %v2638, %v2640
        %v2642 = vrot.slane %v2634, %v2641
        %v2644 = vunpack.c.l.s4 1934713408
        %v2645 = vunpack.c.0.s8 %v2644
        %v2646 = vlaneseq
        %v2647 = vshrl.u32 %v2646, 7
        %v2648 = vsub.s32 %v2645, %v2647
        %v2649 = vrot.slane %v2635, %v2648
        %v2650 = vcombine.low %v2625, %v2633
        %v2651 = vcombine.high %v2625, %v2633
        %v2653 = vunpack.c.l.s4 1934713408
        %v2654 = vunpack.c.0.s8 %v2653
        %v2655 = vlaneseq
        %v2656 = vshrl.u32 %v2655, 7
        %v2657 = vsub.s32 %v2654, %v2656
        %v2658 = vrot.slane %v2650, %v2657
        %v2660 = vunpack.c.l.s4 1934713408
        %v2661 = vunpack.c.0.s8 %v2660
        %v2662 = vlaneseq
        %v2663 = vshrl.u32 %v2662, 7
        %v2664 = vsub.s32 %v2661, %v2663
        %v2665 = vrot.slane %v2651, %v2664
        %v2666 = vcombine.low %v2642, %v2658
        %v2667 = vcombine.high %v2642, %v2658
        %v2668 = vcombine.low %v2649, %v2665
        %v2669 = vcombine.high %v2649, %v2665
        %v2670 = vcombine.low %v2438, %v2445
        %v2672 = vunpack.c.l.s4 1983009808
        %v2673 = vunpack.c.0.s8 %v2672
        %v2674 = vlaneseq
        %v2675 = vshrl.u32 %v2674, 7
        %v2676 = vsub.s32 %v2673, %v2675
        %v2677 = vrot.slane %v2670, %v2676
        %v2678 = vcombine.low %v2462, %v2463
        %v2680 = vunpack.c.l.s4 1983009808
        %v2681 = vunpack.c.0.s8 %v2680
        %v2682 = vlaneseq
        %v2683 = vshrl.u32 %v2682, 7
        %v2684 = vsub.s32 %v2681, %v2683
        %v2685 = vrot.slane %v2678, %v2684
        %v2686 = vcombine.low %v2454, %v2461
        %v2688 = vunpack.c.l.s4 1983009808
        %v2689 = vunpack.c.0.s8 %v2688
        %v2690 = vlaneseq
        %v2691 = vshrl.u32 %v2690, 7
        %v2692 = vsub.s32 %v2689, %v2691
        %v2693 = vrot.slane %v2686, %v2692
        %v2694 = vcombine.low %v2464, %v2465
        %v2696 = vunpack.c.l.s4 1983009808
        %v2697 = vunpack.c.0.s8 %v2696
        %v2698 = vlaneseq
        %v2699 = vshrl.u32 %v2698, 7
        %v2700 = vsub.s32 %v2697, %v2699
        %v2701 = vrot.slane %v2694, %v2700
        %v2702 = vcombine.low %v2677, %v2685
        %v2703 = vcombine.high %v2677, %v2685
        %v2705 = vunpack.c.l.s4 1934713408
        %v2706 = vunpack.c.0.s8 %v2705
        %v2707 = vlaneseq
        %v2708 = vshrl.u32 %v2707, 7
        %v2709 = vsub.s32 %v2706, %v2708
        %v2710 = vrot.slane %v2702, %v2709
        %v2712 = vunpack.c.l.s4 1934713408
        %v2713 = vunpack.c.0.s8 %v2712
        %v2714 = vlaneseq
        %v2715 = vshrl.u32 %v2714, 7
        %v2716 = vsub.s32 %v2713, %v2715
        %v2717 = vrot.slane %v2703, %v2716
        %v2718 = vcombine.low %v2693, %v2701
        %v2719 = vcombine.high %v2693, %v2701
        %v2721 = vunpack.c.l.s4 1934713408
        %v2722 = vunpack.c.0.s8 %v2721
        %v2723 = vlaneseq
        %v2724 = vshrl.u32 %v2723, 7
        %v2725 = vsub.s32 %v2722, %v2724
        %v2726 = vrot.slane %v2718, %v2725
        %v2728 = vunpack.c.l.s4 1934713408
        %v2729 = vunpack.c.0.s8 %v2728
        %v2730 = vlaneseq
        %v2731 = vshrl.u32 %v2730, 7
        %v2732 = vsub.s32 %v2729, %v2731
        %v2733 = vrot.slane %v2719, %v2732
        %v2734 = vcombine.low %v2710, %v2726
        %v2735 = vcombine.high %v2710, %v2726
        %v2736 = vcombine.low %v2717, %v2733
        %v2737 = vcombine.high %v2717, %v2733
        %v2738 = vpack.c.bf16 %v1430, %v1362
        %v2739 = vpack.c.bf16 %v1431, %v1363
        %v2740 = vpack.c.bf16 %v1432, %v1364
        %v2741 = vpack.c.bf16 %v1433, %v1365
        %v2742 = vpack.c.bf16 %v1566, %v1498
        %v2743 = vpack.c.bf16 %v1567, %v1499
        %v2744 = vpack.c.bf16 %v1568, %v1500
        %v2745 = vpack.c.bf16 %v1569, %v1501
        %v2746 = vpack.c.bf16 %v2014, %v1946
        %v2747 = vpack.c.bf16 %v2015, %v1947
        %v2748 = vpack.c.bf16 %v2016, %v1948
        %v2749 = vpack.c.bf16 %v2017, %v1949
        %v2750 = vpack.c.bf16 %v2150, %v2082
        %v2751 = vpack.c.bf16 %v2151, %v2083
        %v2752 = vpack.c.bf16 %v2152, %v2084
        %v2753 = vpack.c.bf16 %v2153, %v2085
        %v2754 = vld [vmem:[#allocation3] sm:$0xff]
        %v2755 = vld [vmem:[#allocation3 + $0x8] sm:$0xff]
        %vm2756 = vcmask 261120
        %v2758 = vsel %vm2756, %v2738, 0
        %v2761 = vsel %vm2756, %v2746, 0
        %2763 = vmatprep.subr.bf16.mxu0 0
        %2764 = vmatpush1.bf16.xpose.msra.mxu0 %v2761
        %2765 = vmatprep.subr.bf16.mxu0 0
        %2766 = vmatpush1.bf16.xpose.msra.mxu0 0
        %2767 = vmatprep.subr.bf16.mxu0 0
        %2768 = vmatpush1.bf16.xpose.msra.mxu0 0
        %2769 = vmatprep.subr.bf16.mxu0 0
        %2770 = vmatpush1.bf16.xpose.msra.mxu0 0
        %2771 = vmatprep.subr.bf16.mxu0 0
        %2772 = vmatpush1.bf16.xpose.msra.mxu0 0
        %2773 = vmatprep.subr.bf16.mxu0 0
        %2774 = vmatpush1.bf16.xpose.msra.mxu0 0
        %2775 = vmatprep.subr.bf16.mxu0 0
        %2776 = vmatpush1.bf16.xpose.msra.mxu0 0
        %2777 = vmatprep.subr.bf16.mxu0 0
        %2778 = vmatpush1.bf16.xpose.msra.mxu0 0
        %2779 = vmatprep.subr.bf16.mxu0 0
        %2780 = vmatpush1.bf16.xpose.msra.mxu0 0
        %2781 = vmatprep.subr.bf16.mxu0 0
        %2782 = vmatpush1.bf16.xpose.msra.mxu0 0
        %2783 = vmatprep.subr.bf16.mxu0 0
        %2784 = vmatpush1.bf16.xpose.msra.mxu0 0
        %2785 = vmatprep.subr.bf16.mxu0 0
        %2786 = vmatpush1.bf16.xpose.msra.mxu0 0
        %2787 = vmatprep.subr.bf16.mxu0 0
        %2788 = vmatpush1.bf16.xpose.msra.mxu0 0
        %2789 = vmatprep.subr.bf16.mxu0 0
        %2790 = vmatpush1.bf16.xpose.msra.mxu0 0
        %2791 = vmatprep.subr.bf16.mxu0 0
        %2792 = vmatpush1.bf16.xpose.msra.mxu0 0
        %2793 = vmatprep.subr.bf16.mxu0 0
        %2794 = vmatpush1.bf16.xpose.msra.mxu0 0
        %2795 = vmatprep.mubr.bf16.mxu0 0
        %2796 = vmatmul.mubr.bf16.gmra.mrb[0].mxu0 %v2758
        %v2797 = vpop.f32.mrb[0].mxu0
        %v2798 = vadd.f32 %v2754, %v2797
        %v2799 = vpop.f32.mrb[0].mxu0
        %v2800 = vpop.f32.mrb[0].mxu0
        %v2801 = vadd.f32 %v2755, %v2800
        %v2802 = vpop.f32.mrb[0].mxu0
        %2803 = vdwg.mxu0
        %v2805 = vsel %vm2756, %v2739, 0
        %v2808 = vsel %vm2756, %v2747, 0
        %2810 = vmatprep.subr.bf16.mxu0 0
        %2811 = vmatpush1.bf16.xpose.msra.mxu0 %v2808
        %2812 = vmatprep.subr.bf16.mxu0 0
        %2813 = vmatpush1.bf16.xpose.msra.mxu0 0
        %2814 = vmatprep.subr.bf16.mxu0 0
        %2815 = vmatpush1.bf16.xpose.msra.mxu0 0
        %2816 = vmatprep.subr.bf16.mxu0 0
        %2817 = vmatpush1.bf16.xpose.msra.mxu0 0
        %2818 = vmatprep.subr.bf16.mxu0 0
        %2819 = vmatpush1.bf16.xpose.msra.mxu0 0
        %2820 = vmatprep.subr.bf16.mxu0 0
        %2821 = vmatpush1.bf16.xpose.msra.mxu0 0
        %2822 = vmatprep.subr.bf16.mxu0 0
        %2823 = vmatpush1.bf16.xpose.msra.mxu0 0
        %2824 = vmatprep.subr.bf16.mxu0 0
        %2825 = vmatpush1.bf16.xpose.msra.mxu0 0
        %2826 = vmatprep.subr.bf16.mxu0 0
        %2827 = vmatpush1.bf16.xpose.msra.mxu0 0
        %2828 = vmatprep.subr.bf16.mxu0 0
        %2829 = vmatpush1.bf16.xpose.msra.mxu0 0
        %2830 = vmatprep.subr.bf16.mxu0 0
        %2831 = vmatpush1.bf16.xpose.msra.mxu0 0
        %2832 = vmatprep.subr.bf16.mxu0 0
        %2833 = vmatpush1.bf16.xpose.msra.mxu0 0
        %2834 = vmatprep.subr.bf16.mxu0 0
        %2835 = vmatpush1.bf16.xpose.msra.mxu0 0
        %2836 = vmatprep.subr.bf16.mxu0 0
        %2837 = vmatpush1.bf16.xpose.msra.mxu0 0
        %2838 = vmatprep.subr.bf16.mxu0 0
        %2839 = vmatpush1.bf16.xpose.msra.mxu0 0
        %2840 = vmatprep.subr.bf16.mxu0 0
        %2841 = vmatpush1.bf16.xpose.msra.mxu0 0
        %2842 = vmatprep.mubr.bf16.mxu0 0
        %2843 = vmatmul.mubr.bf16.gmra.mrb[0].mxu0 %v2805
        %v2844 = vpop.f32.mrb[0].mxu0
        %v2845 = vadd.f32 %v2754, %v2844
        %v2846 = vpop.f32.mrb[0].mxu0
        %v2847 = vpop.f32.mrb[0].mxu0
        %v2848 = vadd.f32 %v2755, %v2847
        %v2849 = vpop.f32.mrb[0].mxu0
        %2850 = vdwg.mxu0
        %v2852 = vsel %vm2756, %v2740, 0
        %v2855 = vsel %vm2756, %v2748, 0
        %2857 = vmatprep.subr.bf16.mxu0 0
        %2858 = vmatpush1.bf16.xpose.msra.mxu0 %v2855
        %2859 = vmatprep.subr.bf16.mxu0 0
        %2860 = vmatpush1.bf16.xpose.msra.mxu0 0
        %2861 = vmatprep.subr.bf16.mxu0 0
        %2862 = vmatpush1.bf16.xpose.msra.mxu0 0
        %2863 = vmatprep.subr.bf16.mxu0 0
        %2864 = vmatpush1.bf16.xpose.msra.mxu0 0
        %2865 = vmatprep.subr.bf16.mxu0 0
        %2866 = vmatpush1.bf16.xpose.msra.mxu0 0
        %2867 = vmatprep.subr.bf16.mxu0 0
        %2868 = vmatpush1.bf16.xpose.msra.mxu0 0
        %2869 = vmatprep.subr.bf16.mxu0 0
        %2870 = vmatpush1.bf16.xpose.msra.mxu0 0
        %2871 = vmatprep.subr.bf16.mxu0 0
        %2872 = vmatpush1.bf16.xpose.msra.mxu0 0
        %2873 = vmatprep.subr.bf16.mxu0 0
        %2874 = vmatpush1.bf16.xpose.msra.mxu0 0
        %2875 = vmatprep.subr.bf16.mxu0 0
        %2876 = vmatpush1.bf16.xpose.msra.mxu0 0
        %2877 = vmatprep.subr.bf16.mxu0 0
        %2878 = vmatpush1.bf16.xpose.msra.mxu0 0
        %2879 = vmatprep.subr.bf16.mxu0 0
        %2880 = vmatpush1.bf16.xpose.msra.mxu0 0
        %2881 = vmatprep.subr.bf16.mxu0 0
        %2882 = vmatpush1.bf16.xpose.msra.mxu0 0
        %2883 = vmatprep.subr.bf16.mxu0 0
        %2884 = vmatpush1.bf16.xpose.msra.mxu0 0
        %2885 = vmatprep.subr.bf16.mxu0 0
        %2886 = vmatpush1.bf16.xpose.msra.mxu0 0
        %2887 = vmatprep.subr.bf16.mxu0 0
        %2888 = vmatpush1.bf16.xpose.msra.mxu0 0
        %2889 = vmatprep.mubr.bf16.mxu0 0
        %2890 = vmatmul.mubr.bf16.gmra.mrb[0].mxu0 %v2852
        %v2891 = vpop.f32.mrb[0].mxu0
        %v2892 = vadd.f32 %v2754, %v2891
        %v2893 = vpop.f32.mrb[0].mxu0
        %v2894 = vpop.f32.mrb[0].mxu0
        %v2895 = vadd.f32 %v2755, %v2894
        %v2896 = vpop.f32.mrb[0].mxu0
        %2897 = vdwg.mxu0
        %v2899 = vsel %vm2756, %v2741, 0
        %v2902 = vsel %vm2756, %v2749, 0
        %2904 = vmatprep.subr.bf16.mxu0 0
        %2905 = vmatpush1.bf16.xpose.msra.mxu0 %v2902
        %2906 = vmatprep.subr.bf16.mxu0 0
        %2907 = vmatpush1.bf16.xpose.msra.mxu0 0
        %2908 = vmatprep.subr.bf16.mxu0 0
        %2909 = vmatpush1.bf16.xpose.msra.mxu0 0
        %2910 = vmatprep.subr.bf16.mxu0 0
        %2911 = vmatpush1.bf16.xpose.msra.mxu0 0
        %2912 = vmatprep.subr.bf16.mxu0 0
        %2913 = vmatpush1.bf16.xpose.msra.mxu0 0
        %2914 = vmatprep.subr.bf16.mxu0 0
        %2915 = vmatpush1.bf16.xpose.msra.mxu0 0
        %2916 = vmatprep.subr.bf16.mxu0 0
        %2917 = vmatpush1.bf16.xpose.msra.mxu0 0
        %2918 = vmatprep.subr.bf16.mxu0 0
        %2919 = vmatpush1.bf16.xpose.msra.mxu0 0
        %2920 = vmatprep.subr.bf16.mxu0 0
        %2921 = vmatpush1.bf16.xpose.msra.mxu0 0
        %2922 = vmatprep.subr.bf16.mxu0 0
        %2923 = vmatpush1.bf16.xpose.msra.mxu0 0
        %2924 = vmatprep.subr.bf16.mxu0 0
        %2925 = vmatpush1.bf16.xpose.msra.mxu0 0
        %2926 = vmatprep.subr.bf16.mxu0 0
        %2927 = vmatpush1.bf16.xpose.msra.mxu0 0
        %2928 = vmatprep.subr.bf16.mxu0 0
        %2929 = vmatpush1.bf16.xpose.msra.mxu0 0
        %2930 = vmatprep.subr.bf16.mxu0 0
        %2931 = vmatpush1.bf16.xpose.msra.mxu0 0
        %2932 = vmatprep.subr.bf16.mxu0 0
        %2933 = vmatpush1.bf16.xpose.msra.mxu0 0
        %2934 = vmatprep.subr.bf16.mxu0 0
        %2935 = vmatpush1.bf16.xpose.msra.mxu0 0
        %2936 = vmatprep.mubr.bf16.mxu0 0
        %2937 = vmatmul.mubr.bf16.gmra.mrb[0].mxu0 %v2899
        %v2938 = vpop.f32.mrb[0].mxu0
        %v2939 = vadd.f32 %v2754, %v2938
        %v2940 = vpop.f32.mrb[0].mxu0
        %v2941 = vpop.f32.mrb[0].mxu0
        %v2942 = vadd.f32 %v2755, %v2941
        %v2943 = vpop.f32.mrb[0].mxu0
        %2944 = vdwg.mxu0
        %v2946 = vsel %vm2756, %v2742, 0
        %v2949 = vsel %vm2756, %v2750, 0
        %2951 = vmatprep.subr.bf16.mxu0 0
        %2952 = vmatpush1.bf16.xpose.msra.mxu0 %v2949
        %2953 = vmatprep.subr.bf16.mxu0 0
        %2954 = vmatpush1.bf16.xpose.msra.mxu0 0
        %2955 = vmatprep.subr.bf16.mxu0 0
        %2956 = vmatpush1.bf16.xpose.msra.mxu0 0
        %2957 = vmatprep.subr.bf16.mxu0 0
        %2958 = vmatpush1.bf16.xpose.msra.mxu0 0
        %2959 = vmatprep.subr.bf16.mxu0 0
        %2960 = vmatpush1.bf16.xpose.msra.mxu0 0
        %2961 = vmatprep.subr.bf16.mxu0 0
        %2962 = vmatpush1.bf16.xpose.msra.mxu0 0
        %2963 = vmatprep.subr.bf16.mxu0 0
        %2964 = vmatpush1.bf16.xpose.msra.mxu0 0
        %2965 = vmatprep.subr.bf16.mxu0 0
        %2966 = vmatpush1.bf16.xpose.msra.mxu0 0
        %2967 = vmatprep.subr.bf16.mxu0 0
        %2968 = vmatpush1.bf16.xpose.msra.mxu0 0
        %2969 = vmatprep.subr.bf16.mxu0 0
        %2970 = vmatpush1.bf16.xpose.msra.mxu0 0
        %2971 = vmatprep.subr.bf16.mxu0 0
        %2972 = vmatpush1.bf16.xpose.msra.mxu0 0
        %2973 = vmatprep.subr.bf16.mxu0 0
        %2974 = vmatpush1.bf16.xpose.msra.mxu0 0
        %2975 = vmatprep.subr.bf16.mxu0 0
        %2976 = vmatpush1.bf16.xpose.msra.mxu0 0
        %2977 = vmatprep.subr.bf16.mxu0 0
        %2978 = vmatpush1.bf16.xpose.msra.mxu0 0
        %2979 = vmatprep.subr.bf16.mxu0 0
        %2980 = vmatpush1.bf16.xpose.msra.mxu0 0
        %2981 = vmatprep.subr.bf16.mxu0 0
        %2982 = vmatpush1.bf16.xpose.msra.mxu0 0
        %2983 = vmatprep.mubr.bf16.mxu0 0
        %2984 = vmatmul.mubr.bf16.gmra.mrb[0].mxu0 %v2946
        %v2985 = vpop.f32.mrb[0].mxu0
        %v2986 = vadd.f32 %v2754, %v2985
        %v2987 = vpop.f32.mrb[0].mxu0
        %v2988 = vpop.f32.mrb[0].mxu0
        %v2989 = vadd.f32 %v2755, %v2988
        %v2990 = vpop.f32.mrb[0].mxu0
        %2991 = vdwg.mxu0
        %v2993 = vsel %vm2756, %v2743, 0
        %v2996 = vsel %vm2756, %v2751, 0
        %2998 = vmatprep.subr.bf16.mxu0 0
        %2999 = vmatpush1.bf16.xpose.msra.mxu0 %v2996
        %3000 = vmatprep.subr.bf16.mxu0 0
        %3001 = vmatpush1.bf16.xpose.msra.mxu0 0
        %3002 = vmatprep.subr.bf16.mxu0 0
        %3003 = vmatpush1.bf16.xpose.msra.mxu0 0
        %3004 = vmatprep.subr.bf16.mxu0 0
        %3005 = vmatpush1.bf16.xpose.msra.mxu0 0
        %3006 = vmatprep.subr.bf16.mxu0 0
        %3007 = vmatpush1.bf16.xpose.msra.mxu0 0
        %3008 = vmatprep.subr.bf16.mxu0 0
        %3009 = vmatpush1.bf16.xpose.msra.mxu0 0
        %3010 = vmatprep.subr.bf16.mxu0 0
        %3011 = vmatpush1.bf16.xpose.msra.mxu0 0
        %3012 = vmatprep.subr.bf16.mxu0 0
        %3013 = vmatpush1.bf16.xpose.msra.mxu0 0
        %3014 = vmatprep.subr.bf16.mxu0 0
        %3015 = vmatpush1.bf16.xpose.msra.mxu0 0
        %3016 = vmatprep.subr.bf16.mxu0 0
        %3017 = vmatpush1.bf16.xpose.msra.mxu0 0
        %3018 = vmatprep.subr.bf16.mxu0 0
        %3019 = vmatpush1.bf16.xpose.msra.mxu0 0
        %3020 = vmatprep.subr.bf16.mxu0 0
        %3021 = vmatpush1.bf16.xpose.msra.mxu0 0
        %3022 = vmatprep.subr.bf16.mxu0 0
        %3023 = vmatpush1.bf16.xpose.msra.mxu0 0
        %3024 = vmatprep.subr.bf16.mxu0 0
        %3025 = vmatpush1.bf16.xpose.msra.mxu0 0
        %3026 = vmatprep.subr.bf16.mxu0 0
        %3027 = vmatpush1.bf16.xpose.msra.mxu0 0
        %3028 = vmatprep.subr.bf16.mxu0 0
        %3029 = vmatpush1.bf16.xpose.msra.mxu0 0
        %3030 = vmatprep.mubr.bf16.mxu0 0
        %3031 = vmatmul.mubr.bf16.gmra.mrb[0].mxu0 %v2993
        %v3032 = vpop.f32.mrb[0].mxu0
        %v3033 = vadd.f32 %v2754, %v3032
        %v3034 = vpop.f32.mrb[0].mxu0
        %v3035 = vpop.f32.mrb[0].mxu0
        %v3036 = vadd.f32 %v2755, %v3035
        %v3037 = vpop.f32.mrb[0].mxu0
        %3038 = vdwg.mxu0
        %v3040 = vsel %vm2756, %v2744, 0
        %v3043 = vsel %vm2756, %v2752, 0
        %3045 = vmatprep.subr.bf16.mxu0 0
        %3046 = vmatpush1.bf16.xpose.msra.mxu0 %v3043
        %3047 = vmatprep.subr.bf16.mxu0 0
        %3048 = vmatpush1.bf16.xpose.msra.mxu0 0
        %3049 = vmatprep.subr.bf16.mxu0 0
        %3050 = vmatpush1.bf16.xpose.msra.mxu0 0
        %3051 = vmatprep.subr.bf16.mxu0 0
        %3052 = vmatpush1.bf16.xpose.msra.mxu0 0
        %3053 = vmatprep.subr.bf16.mxu0 0
        %3054 = vmatpush1.bf16.xpose.msra.mxu0 0
        %3055 = vmatprep.subr.bf16.mxu0 0
        %3056 = vmatpush1.bf16.xpose.msra.mxu0 0
        %3057 = vmatprep.subr.bf16.mxu0 0
        %3058 = vmatpush1.bf16.xpose.msra.mxu0 0
        %3059 = vmatprep.subr.bf16.mxu0 0
        %3060 = vmatpush1.bf16.xpose.msra.mxu0 0
        %3061 = vmatprep.subr.bf16.mxu0 0
        %3062 = vmatpush1.bf16.xpose.msra.mxu0 0
        %3063 = vmatprep.subr.bf16.mxu0 0
        %3064 = vmatpush1.bf16.xpose.msra.mxu0 0
        %3065 = vmatprep.subr.bf16.mxu0 0
        %3066 = vmatpush1.bf16.xpose.msra.mxu0 0
        %3067 = vmatprep.subr.bf16.mxu0 0
        %3068 = vmatpush1.bf16.xpose.msra.mxu0 0
        %3069 = vmatprep.subr.bf16.mxu0 0
        %3070 = vmatpush1.bf16.xpose.msra.mxu0 0
        %3071 = vmatprep.subr.bf16.mxu0 0
        %3072 = vmatpush1.bf16.xpose.msra.mxu0 0
        %3073 = vmatprep.subr.bf16.mxu0 0
        %3074 = vmatpush1.bf16.xpose.msra.mxu0 0
        %3075 = vmatprep.subr.bf16.mxu0 0
        %3076 = vmatpush1.bf16.xpose.msra.mxu0 0
        %3077 = vmatprep.mubr.bf16.mxu0 0
        %3078 = vmatmul.mubr.bf16.gmra.mrb[0].mxu0 %v3040
        %v3079 = vpop.f32.mrb[0].mxu0
        %v3080 = vadd.f32 %v2754, %v3079
        %v3081 = vpop.f32.mrb[0].mxu0
        %v3082 = vpop.f32.mrb[0].mxu0
        %v3083 = vadd.f32 %v2755, %v3082
        %v3084 = vpop.f32.mrb[0].mxu0
        %3085 = vdwg.mxu0
        %v3087 = vsel %vm2756, %v2745, 0
        %v3090 = vsel %vm2756, %v2753, 0
        %3092 = vmatprep.subr.bf16.mxu0 0
        %3093 = vmatpush1.bf16.xpose.msra.mxu0 %v3090
        %3094 = vmatprep.subr.bf16.mxu0 0
        %3095 = vmatpush1.bf16.xpose.msra.mxu0 0
        %3096 = vmatprep.subr.bf16.mxu0 0
        %3097 = vmatpush1.bf16.xpose.msra.mxu0 0
        %3098 = vmatprep.subr.bf16.mxu0 0
        %3099 = vmatpush1.bf16.xpose.msra.mxu0 0
        %3100 = vmatprep.subr.bf16.mxu0 0
        %3101 = vmatpush1.bf16.xpose.msra.mxu0 0
        %3102 = vmatprep.subr.bf16.mxu0 0
        %3103 = vmatpush1.bf16.xpose.msra.mxu0 0
        %3104 = vmatprep.subr.bf16.mxu0 0
        %3105 = vmatpush1.bf16.xpose.msra.mxu0 0
        %3106 = vmatprep.subr.bf16.mxu0 0
        %3107 = vmatpush1.bf16.xpose.msra.mxu0 0
        %3108 = vmatprep.subr.bf16.mxu0 0
        %3109 = vmatpush1.bf16.xpose.msra.mxu0 0
        %3110 = vmatprep.subr.bf16.mxu0 0
        %3111 = vmatpush1.bf16.xpose.msra.mxu0 0
        %3112 = vmatprep.subr.bf16.mxu0 0
        %3113 = vmatpush1.bf16.xpose.msra.mxu0 0
        %3114 = vmatprep.subr.bf16.mxu0 0
        %3115 = vmatpush1.bf16.xpose.msra.mxu0 0
        %3116 = vmatprep.subr.bf16.mxu0 0
        %3117 = vmatpush1.bf16.xpose.msra.mxu0 0
        %3118 = vmatprep.subr.bf16.mxu0 0
        %3119 = vmatpush1.bf16.xpose.msra.mxu0 0
        %3120 = vmatprep.subr.bf16.mxu0 0
        %3121 = vmatpush1.bf16.xpose.msra.mxu0 0
        %3122 = vmatprep.subr.bf16.mxu0 0
        %3123 = vmatpush1.bf16.xpose.msra.mxu0 0
        %3124 = vmatprep.mubr.bf16.mxu0 0
        %3125 = vmatmul.mubr.bf16.gmra.mrb[0].mxu0 %v3087
        %v3126 = vpop.f32.mrb[0].mxu0
        %v3127 = vadd.f32 %v2754, %v3126
        %v3128 = vpop.f32.mrb[0].mxu0
        %v3129 = vpop.f32.mrb[0].mxu0
        %v3130 = vadd.f32 %v2755, %v3129
        %v3131 = vpop.f32.mrb[0].mxu0
        %3132 = vdwg.mxu0
        %vm3133 = vcmask 130048
        %v3134 = vsel %vm3133, %v2798, -inf
        %3135 = vmax.xlane.f32.xlu0 %v3134
        %v3136 = vpop.xlane.xlu0 %3135
        %v3137 = vsel %vm3133, %v2801, -inf
        %3138 = vmax.xlane.f32.xlu0 %v3137
        %v3139 = vpop.xlane.xlu0 %3138
        %v3140 = vsel %vm3133, %v2845, -inf
        %3141 = vmax.xlane.f32.xlu0 %v3140
        %v3142 = vpop.xlane.xlu0 %3141
        %v3143 = vsel %vm3133, %v2848, -inf
        %3144 = vmax.xlane.f32.xlu0 %v3143
        %v3145 = vpop.xlane.xlu0 %3144
        %v3146 = vsel %vm3133, %v2892, -inf
        %3147 = vmax.xlane.f32.xlu0 %v3146
        %v3148 = vpop.xlane.xlu0 %3147
        %v3149 = vsel %vm3133, %v2895, -inf
        %3150 = vmax.xlane.f32.xlu0 %v3149
        %v3151 = vpop.xlane.xlu0 %3150
        %v3152 = vsel %vm3133, %v2939, -inf
        %3153 = vmax.xlane.f32.xlu0 %v3152
        %v3154 = vpop.xlane.xlu0 %3153
        %v3155 = vsel %vm3133, %v2942, -inf
        %3156 = vmax.xlane.f32.xlu0 %v3155
        %v3157 = vpop.xlane.xlu0 %3156
        %v3158 = vsel %vm3133, %v2986, -inf
        %3159 = vmax.xlane.f32.xlu0 %v3158
        %v3160 = vpop.xlane.xlu0 %3159
        %v3161 = vsel %vm3133, %v2989, -inf
        %3162 = vmax.xlane.f32.xlu0 %v3161
        %v3163 = vpop.xlane.xlu0 %3162
        %v3164 = vsel %vm3133, %v3033, -inf
        %3165 = vmax.xlane.f32.xlu0 %v3164
        %v3166 = vpop.xlane.xlu0 %3165
        %v3167 = vsel %vm3133, %v3036, -inf
        %3168 = vmax.xlane.f32.xlu0 %v3167
        %v3169 = vpop.xlane.xlu0 %3168
        %v3170 = vsel %vm3133, %v3080, -inf
        %3171 = vmax.xlane.f32.xlu0 %v3170
        %v3172 = vpop.xlane.xlu0 %3171
        %v3173 = vsel %vm3133, %v3083, -inf
        %3174 = vmax.xlane.f32.xlu0 %v3173
        %v3175 = vpop.xlane.xlu0 %3174
        %v3176 = vsel %vm3133, %v3127, -inf
        %3177 = vmax.xlane.f32.xlu0 %v3176
        %v3178 = vpop.xlane.xlu0 %3177
        %v3179 = vsel %vm3133, %v3130, -inf
        %3180 = vmax.xlane.f32.xlu0 %v3179
        %v3181 = vpop.xlane.xlu0 %3180
        %v3182 = vsub.f32 %v2798, %v3136
        %v3183 = vsub.f32 %v2801, %v3139
        %v3184 = vsub.f32 %v2845, %v3142
        %v3185 = vsub.f32 %v2848, %v3145
        %v3186 = vsub.f32 %v2892, %v3148
        %v3187 = vsub.f32 %v2895, %v3151
        %v3188 = vsub.f32 %v2939, %v3154
        %v3189 = vsub.f32 %v2942, %v3157
        %v3190 = vsub.f32 %v2986, %v3160
        %v3191 = vsub.f32 %v2989, %v3163
        %v3192 = vsub.f32 %v3033, %v3166
        %v3193 = vsub.f32 %v3036, %v3169
        %v3194 = vsub.f32 %v3080, %v3172
        %v3195 = vsub.f32 %v3083, %v3175
        %v3196 = vsub.f32 %v3127, %v3178
        %v3197 = vsub.f32 %v3130, %v3181
        %v3198 = vmul.f32 %v3182, 1.442695
        %v3199 = vpow.pop %v3198
        %v3200 = vmul.f32 %v3183, 1.442695
        %v3201 = vpow.pop %v3200
        %v3202 = vmul.f32 %v3184, 1.442695
        %v3203 = vpow.pop %v3202
        %v3204 = vmul.f32 %v3185, 1.442695
        %v3205 = vpow.pop %v3204
        %v3206 = vmul.f32 %v3186, 1.442695
        %v3207 = vpow.pop %v3206
        %v3208 = vmul.f32 %v3187, 1.442695
        %v3209 = vpow.pop %v3208
        %v3210 = vmul.f32 %v3188, 1.442695
        %v3211 = vpow.pop %v3210
        %v3212 = vmul.f32 %v3189, 1.442695
        %v3213 = vpow.pop %v3212
        %v3214 = vmul.f32 %v3190, 1.442695
        %v3215 = vpow.pop %v3214
        %v3216 = vmul.f32 %v3191, 1.442695
        %v3217 = vpow.pop %v3216
        %v3218 = vmul.f32 %v3192, 1.442695
        %v3219 = vpow.pop %v3218
        %v3220 = vmul.f32 %v3193, 1.442695
        %v3221 = vpow.pop %v3220
        %v3222 = vmul.f32 %v3194, 1.442695
        %v3223 = vpow.pop %v3222
        %v3224 = vmul.f32 %v3195, 1.442695
        %v3225 = vpow.pop %v3224
        %v3226 = vmul.f32 %v3196, 1.442695
        %v3227 = vpow.pop %v3226
        %v3228 = vmul.f32 %v3197, 1.442695
        %v3229 = vpow.pop %v3228
        %v3230 = vsel %vm3133, %v3199, 0.0
        %3231 = vadd.xlane.f32.xlu0 %v3230
        %v3232 = vpop.xlane.xlu0 %3231
        %v3233 = vsel %vm3133, %v3201, 0.0
        %3234 = vadd.xlane.f32.xlu0 %v3233
        %v3235 = vpop.xlane.xlu0 %3234
        %v3236 = vsel %vm3133, %v3203, 0.0
        %3237 = vadd.xlane.f32.xlu0 %v3236
        %v3238 = vpop.xlane.xlu0 %3237
        %v3239 = vsel %vm3133, %v3205, 0.0
        %3240 = vadd.xlane.f32.xlu0 %v3239
        %v3241 = vpop.xlane.xlu0 %3240
        %v3242 = vsel %vm3133, %v3207, 0.0
        %3243 = vadd.xlane.f32.xlu0 %v3242
        %v3244 = vpop.xlane.xlu0 %3243
        %v3245 = vsel %vm3133, %v3209, 0.0
        %3246 = vadd.xlane.f32.xlu0 %v3245
        %v3247 = vpop.xlane.xlu0 %3246
        %v3248 = vsel %vm3133, %v3211, 0.0
        %3249 = vadd.xlane.f32.xlu0 %v3248
        %v3250 = vpop.xlane.xlu0 %3249
        %v3251 = vsel %vm3133, %v3213, 0.0
        %3252 = vadd.xlane.f32.xlu0 %v3251
        %v3253 = vpop.xlane.xlu0 %3252
        %v3254 = vsel %vm3133, %v3215, 0.0
        %3255 = vadd.xlane.f32.xlu0 %v3254
        %v3256 = vpop.xlane.xlu0 %3255
        %v3257 = vsel %vm3133, %v3217, 0.0
        %3258 = vadd.xlane.f32.xlu0 %v3257
        %v3259 = vpop.xlane.xlu0 %3258
        %v3260 = vsel %vm3133, %v3219, 0.0
        %3261 = vadd.xlane.f32.xlu0 %v3260
        %v3262 = vpop.xlane.xlu0 %3261
        %v3263 = vsel %vm3133, %v3221, 0.0
        %3264 = vadd.xlane.f32.xlu0 %v3263
        %v3265 = vpop.xlane.xlu0 %3264
        %v3266 = vsel %vm3133, %v3223, 0.0
        %3267 = vadd.xlane.f32.xlu0 %v3266
        %v3268 = vpop.xlane.xlu0 %3267
        %v3269 = vsel %vm3133, %v3225, 0.0
        %3270 = vadd.xlane.f32.xlu0 %v3269
        %v3271 = vpop.xlane.xlu0 %3270
        %v3272 = vsel %vm3133, %v3227, 0.0
        %3273 = vadd.xlane.f32.xlu0 %v3272
        %v3274 = vpop.xlane.xlu0 %3273
        %v3275 = vsel %vm3133, %v3229, 0.0
        %3276 = vadd.xlane.f32.xlu0 %v3275
        %v3277 = vpop.xlane.xlu0 %3276
        %v3278 = vrcp.pop %v3232
        %v3279 = vrcp.pop %v3235
        %v3280 = vrcp.pop %v3238
        %v3281 = vrcp.pop %v3241
        %v3282 = vrcp.pop %v3244
        %v3283 = vrcp.pop %v3247
        %v3284 = vrcp.pop %v3250
        %v3285 = vrcp.pop %v3253
        %v3286 = vrcp.pop %v3256
        %v3287 = vrcp.pop %v3259
        %v3288 = vrcp.pop %v3262
        %v3289 = vrcp.pop %v3265
        %v3290 = vrcp.pop %v3268
        %v3291 = vrcp.pop %v3271
        %v3292 = vrcp.pop %v3274
        %v3293 = vrcp.pop %v3277
        %v3294 = vmul.f32 %v3199, %v3278
        %v3295 = vmul.f32 %v3201, %v3279
        %v3296 = vmul.f32 %v3203, %v3280
        %v3297 = vmul.f32 %v3205, %v3281
        %v3298 = vmul.f32 %v3207, %v3282
        %v3299 = vmul.f32 %v3209, %v3283
        %v3300 = vmul.f32 %v3211, %v3284
        %v3301 = vmul.f32 %v3213, %v3285
        %v3302 = vmul.f32 %v3215, %v3286
        %v3303 = vmul.f32 %v3217, %v3287
        %v3304 = vmul.f32 %v3219, %v3288
        %v3305 = vmul.f32 %v3221, %v3289
        %v3306 = vmul.f32 %v3223, %v3290
        %v3307 = vmul.f32 %v3225, %v3291
        %v3308 = vmul.f32 %v3227, %v3292
        %v3309 = vmul.f32 %v3229, %v3293
        %v3310 = vpack.c.bf16 %v3295, %v3294
        %v3311 = vpack.c.bf16 %v3297, %v3296
        %v3312 = vpack.c.bf16 %v3299, %v3298
        %v3313 = vpack.c.bf16 %v3301, %v3300
        %v3314 = vpack.c.bf16 %v3303, %v3302
        %v3315 = vpack.c.bf16 %v3305, %v3304
        %v3316 = vpack.c.bf16 %v3307, %v3306
        %v3317 = vpack.c.bf16 %v3309, %v3308
        %v3318 = vpack.c.bf16 %v2598, %v2530
        %v3319 = vpack.c.bf16 %v2599, %v2531
        %v3320 = vpack.c.bf16 %v2600, %v2532
        %v3321 = vpack.c.bf16 %v2601, %v2533
        %v3322 = vpack.c.bf16 %v2734, %v2666
        %v3323 = vpack.c.bf16 %v2735, %v2667
        %v3324 = vpack.c.bf16 %v2736, %v2668
        %v3325 = vpack.c.bf16 %v2737, %v2669
        %v3327 = vsel %vm3133, %v3310, 0
        %3329 = vmatprep.subr.bf16.mxu0 0
        %3330 = vmatpush1.bf16.msra.mxu0 %v3318
        %3331 = vmatprep.subr.bf16.mxu0 0
        %3332 = vmatpush1.bf16.msra.mxu0 0
        %3333 = vmatprep.subr.bf16.mxu0 0
        %3334 = vmatpush1.bf16.msra.mxu0 0
        %3335 = vmatprep.subr.bf16.mxu0 0
        %3336 = vmatpush1.bf16.msra.mxu0 0
        %3337 = vmatprep.subr.bf16.mxu0 0
        %3338 = vmatpush1.bf16.msra.mxu0 0
        %3339 = vmatprep.subr.bf16.mxu0 0
        %3340 = vmatpush1.bf16.msra.mxu0 0
        %3341 = vmatprep.subr.bf16.mxu0 0
        %3342 = vmatpush1.bf16.msra.mxu0 0
        %3343 = vmatprep.subr.bf16.mxu0 0
        %3344 = vmatpush1.bf16.msra.mxu0 0
        %3345 = vmatprep.subr.bf16.mxu0 0
        %3346 = vmatpush1.bf16.msra.mxu0 0
        %3347 = vmatprep.subr.bf16.mxu0 0
        %3348 = vmatpush1.bf16.msra.mxu0 0
        %3349 = vmatprep.subr.bf16.mxu0 0
        %3350 = vmatpush1.bf16.msra.mxu0 0
        %3351 = vmatprep.subr.bf16.mxu0 0
        %3352 = vmatpush1.bf16.msra.mxu0 0
        %3353 = vmatprep.subr.bf16.mxu0 0
        %3354 = vmatpush1.bf16.msra.mxu0 0
        %3355 = vmatprep.subr.bf16.mxu0 0
        %3356 = vmatpush1.bf16.msra.mxu0 0
        %3357 = vmatprep.subr.bf16.mxu0 0
        %3358 = vmatpush1.bf16.msra.mxu0 0
        %3359 = vmatprep.subr.bf16.mxu0 0
        %3360 = vmatpush1.bf16.msra.mxu0 0
        %3361 = vmatprep.mubr.bf16.mxu0 0
        %3362 = vmatmul.mubr.bf16.gmra.mrb[0].mxu0 %v3327
        %v3363 = vpop.f32.mrb[0].mxu0
        %v3364 = vadd.f32 0.0, %v3363
        %v3365 = vpop.f32.mrb[0].mxu0
        %v3366 = vpop.f32.mrb[0].mxu0
        %v3367 = vadd.f32 0.0, %v3366
        %v3368 = vpop.f32.mrb[0].mxu0
        %3369 = vdwg.mxu0
        %v3371 = vsel %vm3133, %v3311, 0
        %3373 = vmatprep.subr.bf16.mxu0 0
        %3374 = vmatpush1.bf16.msra.mxu0 %v3319
        %3375 = vmatprep.subr.bf16.mxu0 0
        %3376 = vmatpush1.bf16.msra.mxu0 0
        %3377 = vmatprep.subr.bf16.mxu0 0
        %3378 = vmatpush1.bf16.msra.mxu0 0
        %3379 = vmatprep.subr.bf16.mxu0 0
        %3380 = vmatpush1.bf16.msra.mxu0 0
        %3381 = vmatprep.subr.bf16.mxu0 0
        %3382 = vmatpush1.bf16.msra.mxu0 0
        %3383 = vmatprep.subr.bf16.mxu0 0
        %3384 = vmatpush1.bf16.msra.mxu0 0
        %3385 = vmatprep.subr.bf16.mxu0 0
        %3386 = vmatpush1.bf16.msra.mxu0 0
        %3387 = vmatprep.subr.bf16.mxu0 0
        %3388 = vmatpush1.bf16.msra.mxu0 0
        %3389 = vmatprep.subr.bf16.mxu0 0
        %3390 = vmatpush1.bf16.msra.mxu0 0
        %3391 = vmatprep.subr.bf16.mxu0 0
        %3392 = vmatpush1.bf16.msra.mxu0 0
        %3393 = vmatprep.subr.bf16.mxu0 0
        %3394 = vmatpush1.bf16.msra.mxu0 0
        %3395 = vmatprep.subr.bf16.mxu0 0
        %3396 = vmatpush1.bf16.msra.mxu0 0
        %3397 = vmatprep.subr.bf16.mxu0 0
        %3398 = vmatpush1.bf16.msra.mxu0 0
        %3399 = vmatprep.subr.bf16.mxu0 0
        %3400 = vmatpush1.bf16.msra.mxu0 0
        %3401 = vmatprep.subr.bf16.mxu0 0
        %3402 = vmatpush1.bf16.msra.mxu0 0
        %3403 = vmatprep.subr.bf16.mxu0 0
        %3404 = vmatpush1.bf16.msra.mxu0 0
        %3405 = vmatprep.mubr.bf16.mxu0 0
        %3406 = vmatmul.mubr.bf16.gmra.mrb[0].mxu0 %v3371
        %v3407 = vpop.f32.mrb[0].mxu0
        %v3408 = vadd.f32 0.0, %v3407
        %v3409 = vpop.f32.mrb[0].mxu0
        %v3410 = vpop.f32.mrb[0].mxu0
        %v3411 = vadd.f32 0.0, %v3410
        %v3412 = vpop.f32.mrb[0].mxu0
        %3413 = vdwg.mxu0
        %v3415 = vsel %vm3133, %v3312, 0
        %3417 = vmatprep.subr.bf16.mxu0 0
        %3418 = vmatpush1.bf16.msra.mxu0 %v3320
        %3419 = vmatprep.subr.bf16.mxu0 0
        %3420 = vmatpush1.bf16.msra.mxu0 0
        %3421 = vmatprep.subr.bf16.mxu0 0
        %3422 = vmatpush1.bf16.msra.mxu0 0
        %3423 = vmatprep.subr.bf16.mxu0 0
        %3424 = vmatpush1.bf16.msra.mxu0 0
        %3425 = vmatprep.subr.bf16.mxu0 0
        %3426 = vmatpush1.bf16.msra.mxu0 0
        %3427 = vmatprep.subr.bf16.mxu0 0
        %3428 = vmatpush1.bf16.msra.mxu0 0
        %3429 = vmatprep.subr.bf16.mxu0 0
        %3430 = vmatpush1.bf16.msra.mxu0 0
        %3431 = vmatprep.subr.bf16.mxu0 0
        %3432 = vmatpush1.bf16.msra.mxu0 0
        %3433 = vmatprep.subr.bf16.mxu0 0
        %3434 = vmatpush1.bf16.msra.mxu0 0
        %3435 = vmatprep.subr.bf16.mxu0 0
        %3436 = vmatpush1.bf16.msra.mxu0 0
        %3437 = vmatprep.subr.bf16.mxu0 0
        %3438 = vmatpush1.bf16.msra.mxu0 0
        %3439 = vmatprep.subr.bf16.mxu0 0
        %3440 = vmatpush1.bf16.msra.mxu0 0
        %3441 = vmatprep.subr.bf16.mxu0 0
        %3442 = vmatpush1.bf16.msra.mxu0 0
        %3443 = vmatprep.subr.bf16.mxu0 0
        %3444 = vmatpush1.bf16.msra.mxu0 0
        %3445 = vmatprep.subr.bf16.mxu0 0
        %3446 = vmatpush1.bf16.msra.mxu0 0
        %3447 = vmatprep.subr.bf16.mxu0 0
        %3448 = vmatpush1.bf16.msra.mxu0 0
        %3449 = vmatprep.mubr.bf16.mxu0 0
        %3450 = vmatmul.mubr.bf16.gmra.mrb[0].mxu0 %v3415
        %v3451 = vpop.f32.mrb[0].mxu0
        %v3452 = vadd.f32 0.0, %v3451
        %v3453 = vpop.f32.mrb[0].mxu0
        %v3454 = vpop.f32.mrb[0].mxu0
        %v3455 = vadd.f32 0.0, %v3454
        %v3456 = vpop.f32.mrb[0].mxu0
        %3457 = vdwg.mxu0
        %v3459 = vsel %vm3133, %v3313, 0
        %3461 = vmatprep.subr.bf16.mxu0 0
        %3462 = vmatpush1.bf16.msra.mxu0 %v3321
        %3463 = vmatprep.subr.bf16.mxu0 0
        %3464 = vmatpush1.bf16.msra.mxu0 0
        %3465 = vmatprep.subr.bf16.mxu0 0
        %3466 = vmatpush1.bf16.msra.mxu0 0
        %3467 = vmatprep.subr.bf16.mxu0 0
        %3468 = vmatpush1.bf16.msra.mxu0 0
        %3469 = vmatprep.subr.bf16.mxu0 0
        %3470 = vmatpush1.bf16.msra.mxu0 0
        %3471 = vmatprep.subr.bf16.mxu0 0
        %3472 = vmatpush1.bf16.msra.mxu0 0
        %3473 = vmatprep.subr.bf16.mxu0 0
        %3474 = vmatpush1.bf16.msra.mxu0 0
        %3475 = vmatprep.subr.bf16.mxu0 0
        %3476 = vmatpush1.bf16.msra.mxu0 0
        %3477 = vmatprep.subr.bf16.mxu0 0
        %3478 = vmatpush1.bf16.msra.mxu0 0
        %3479 = vmatprep.subr.bf16.mxu0 0
        %3480 = vmatpush1.bf16.msra.mxu0 0
        %3481 = vmatprep.subr.bf16.mxu0 0
        %3482 = vmatpush1.bf16.msra.mxu0 0
        %3483 = vmatprep.subr.bf16.mxu0 0
        %3484 = vmatpush1.bf16.msra.mxu0 0
        %3485 = vmatprep.subr.bf16.mxu0 0
        %3486 = vmatpush1.bf16.msra.mxu0 0
        %3487 = vmatprep.subr.bf16.mxu0 0
        %3488 = vmatpush1.bf16.msra.mxu0 0
        %3489 = vmatprep.subr.bf16.mxu0 0
        %3490 = vmatpush1.bf16.msra.mxu0 0
        %3491 = vmatprep.subr.bf16.mxu0 0
        %3492 = vmatpush1.bf16.msra.mxu0 0
        %3493 = vmatprep.mubr.bf16.mxu0 0
        %3494 = vmatmul.mubr.bf16.gmra.mrb[0].mxu0 %v3459
        %v3495 = vpop.f32.mrb[0].mxu0
        %v3496 = vadd.f32 0.0, %v3495
        %v3497 = vpop.f32.mrb[0].mxu0
        %v3498 = vpop.f32.mrb[0].mxu0
        %v3499 = vadd.f32 0.0, %v3498
        %v3500 = vpop.f32.mrb[0].mxu0
        %3501 = vdwg.mxu0
        %v3503 = vsel %vm3133, %v3314, 0
        %3505 = vmatprep.subr.bf16.mxu0 0
        %3506 = vmatpush1.bf16.msra.mxu0 %v3322
        %3507 = vmatprep.subr.bf16.mxu0 0
        %3508 = vmatpush1.bf16.msra.mxu0 0
        %3509 = vmatprep.subr.bf16.mxu0 0
        %3510 = vmatpush1.bf16.msra.mxu0 0
        %3511 = vmatprep.subr.bf16.mxu0 0
        %3512 = vmatpush1.bf16.msra.mxu0 0
        %3513 = vmatprep.subr.bf16.mxu0 0
        %3514 = vmatpush1.bf16.msra.mxu0 0
        %3515 = vmatprep.subr.bf16.mxu0 0
        %3516 = vmatpush1.bf16.msra.mxu0 0
        %3517 = vmatprep.subr.bf16.mxu0 0
        %3518 = vmatpush1.bf16.msra.mxu0 0
        %3519 = vmatprep.subr.bf16.mxu0 0
        %3520 = vmatpush1.bf16.msra.mxu0 0
        %3521 = vmatprep.subr.bf16.mxu0 0
        %3522 = vmatpush1.bf16.msra.mxu0 0
        %3523 = vmatprep.subr.bf16.mxu0 0
        %3524 = vmatpush1.bf16.msra.mxu0 0
        %3525 = vmatprep.subr.bf16.mxu0 0
        %3526 = vmatpush1.bf16.msra.mxu0 0
        %3527 = vmatprep.subr.bf16.mxu0 0
        %3528 = vmatpush1.bf16.msra.mxu0 0
        %3529 = vmatprep.subr.bf16.mxu0 0
        %3530 = vmatpush1.bf16.msra.mxu0 0
        %3531 = vmatprep.subr.bf16.mxu0 0
        %3532 = vmatpush1.bf16.msra.mxu0 0
        %3533 = vmatprep.subr.bf16.mxu0 0
        %3534 = vmatpush1.bf16.msra.mxu0 0
        %3535 = vmatprep.subr.bf16.mxu0 0
        %3536 = vmatpush1.bf16.msra.mxu0 0
        %3537 = vmatprep.mubr.bf16.mxu0 0
        %3538 = vmatmul.mubr.bf16.gmra.mrb[0].mxu0 %v3503
        %v3539 = vpop.f32.mrb[0].mxu0
        %v3540 = vadd.f32 0.0, %v3539
        %v3541 = vpop.f32.mrb[0].mxu0
        %v3542 = vpop.f32.mrb[0].mxu0
        %v3543 = vadd.f32 0.0, %v3542
        %v3544 = vpop.f32.mrb[0].mxu0
        %3545 = vdwg.mxu0
        %v3547 = vsel %vm3133, %v3315, 0
        %3549 = vmatprep.subr.bf16.mxu0 0
        %3550 = vmatpush1.bf16.msra.mxu0 %v3323
        %3551 = vmatprep.subr.bf16.mxu0 0
        %3552 = vmatpush1.bf16.msra.mxu0 0
        %3553 = vmatprep.subr.bf16.mxu0 0
        %3554 = vmatpush1.bf16.msra.mxu0 0
        %3555 = vmatprep.subr.bf16.mxu0 0
        %3556 = vmatpush1.bf16.msra.mxu0 0
        %3557 = vmatprep.subr.bf16.mxu0 0
        %3558 = vmatpush1.bf16.msra.mxu0 0
        %3559 = vmatprep.subr.bf16.mxu0 0
        %3560 = vmatpush1.bf16.msra.mxu0 0
        %3561 = vmatprep.subr.bf16.mxu0 0
        %3562 = vmatpush1.bf16.msra.mxu0 0
        %3563 = vmatprep.subr.bf16.mxu0 0
        %3564 = vmatpush1.bf16.msra.mxu0 0
        %3565 = vmatprep.subr.bf16.mxu0 0
        %3566 = vmatpush1.bf16.msra.mxu0 0
        %3567 = vmatprep.subr.bf16.mxu0 0
        %3568 = vmatpush1.bf16.msra.mxu0 0
        %3569 = vmatprep.subr.bf16.mxu0 0
        %3570 = vmatpush1.bf16.msra.mxu0 0
        %3571 = vmatprep.subr.bf16.mxu0 0
        %3572 = vmatpush1.bf16.msra.mxu0 0
        %3573 = vmatprep.subr.bf16.mxu0 0
        %3574 = vmatpush1.bf16.msra.mxu0 0
        %3575 = vmatprep.subr.bf16.mxu0 0
        %3576 = vmatpush1.bf16.msra.mxu0 0
        %3577 = vmatprep.subr.bf16.mxu0 0
        %3578 = vmatpush1.bf16.msra.mxu0 0
        %3579 = vmatprep.subr.bf16.mxu0 0
        %3580 = vmatpush1.bf16.msra.mxu0 0
        %3581 = vmatprep.mubr.bf16.mxu0 0
        %3582 = vmatmul.mubr.bf16.gmra.mrb[0].mxu0 %v3547
        %v3583 = vpop.f32.mrb[0].mxu0
        %v3584 = vadd.f32 0.0, %v3583
        %v3585 = vpop.f32.mrb[0].mxu0
        %v3586 = vpop.f32.mrb[0].mxu0
        %v3587 = vadd.f32 0.0, %v3586
        %v3588 = vpop.f32.mrb[0].mxu0
        %3589 = vdwg.mxu0
        %v3591 = vsel %vm3133, %v3316, 0
        %3593 = vmatprep.subr.bf16.mxu0 0
        %3594 = vmatpush1.bf16.msra.mxu0 %v3324
        %3595 = vmatprep.subr.bf16.mxu0 0
        %3596 = vmatpush1.bf16.msra.mxu0 0
        %3597 = vmatprep.subr.bf16.mxu0 0
        %3598 = vmatpush1.bf16.msra.mxu0 0
        %3599 = vmatprep.subr.bf16.mxu0 0
        %3600 = vmatpush1.bf16.msra.mxu0 0
        %3601 = vmatprep.subr.bf16.mxu0 0
        %3602 = vmatpush1.bf16.msra.mxu0 0
        %3603 = vmatprep.subr.bf16.mxu0 0
        %3604 = vmatpush1.bf16.msra.mxu0 0
        %3605 = vmatprep.subr.bf16.mxu0 0
        %3606 = vmatpush1.bf16.msra.mxu0 0
        %3607 = vmatprep.subr.bf16.mxu0 0
        %3608 = vmatpush1.bf16.msra.mxu0 0
        %3609 = vmatprep.subr.bf16.mxu0 0
        %3610 = vmatpush1.bf16.msra.mxu0 0
        %3611 = vmatprep.subr.bf16.mxu0 0
        %3612 = vmatpush1.bf16.msra.mxu0 0
        %3613 = vmatprep.subr.bf16.mxu0 0
        %3614 = vmatpush1.bf16.msra.mxu0 0
        %3615 = vmatprep.subr.bf16.mxu0 0
        %3616 = vmatpush1.bf16.msra.mxu0 0
        %3617 = vmatprep.subr.bf16.mxu0 0
        %3618 = vmatpush1.bf16.msra.mxu0 0
        %3619 = vmatprep.subr.bf16.mxu0 0
        %3620 = vmatpush1.bf16.msra.mxu0 0
        %3621 = vmatprep.subr.bf16.mxu0 0
        %3622 = vmatpush1.bf16.msra.mxu0 0
        %3623 = vmatprep.subr.bf16.mxu0 0
        %3624 = vmatpush1.bf16.msra.mxu0 0
        %3625 = vmatprep.mubr.bf16.mxu0 0
        %3626 = vmatmul.mubr.bf16.gmra.mrb[0].mxu0 %v3591
        %v3627 = vpop.f32.mrb[0].mxu0
        %v3628 = vadd.f32 0.0, %v3627
        %v3629 = vpop.f32.mrb[0].mxu0
        %v3630 = vpop.f32.mrb[0].mxu0
        %v3631 = vadd.f32 0.0, %v3630
        %v3632 = vpop.f32.mrb[0].mxu0
        %3633 = vdwg.mxu0
        %v3635 = vsel %vm3133, %v3317, 0
        %3637 = vmatprep.subr.bf16.mxu0 0
        %3638 = vmatpush1.bf16.msra.mxu0 %v3325
        %3639 = vmatprep.subr.bf16.mxu0 0
        %3640 = vmatpush1.bf16.msra.mxu0 0
        %3641 = vmatprep.subr.bf16.mxu0 0
        %3642 = vmatpush1.bf16.msra.mxu0 0
        %3643 = vmatprep.subr.bf16.mxu0 0
        %3644 = vmatpush1.bf16.msra.mxu0 0
        %3645 = vmatprep.subr.bf16.mxu0 0
        %3646 = vmatpush1.bf16.msra.mxu0 0
        %3647 = vmatprep.subr.bf16.mxu0 0
        %3648 = vmatpush1.bf16.msra.mxu0 0
        %3649 = vmatprep.subr.bf16.mxu0 0
        %3650 = vmatpush1.bf16.msra.mxu0 0
        %3651 = vmatprep.subr.bf16.mxu0 0
        %3652 = vmatpush1.bf16.msra.mxu0 0
        %3653 = vmatprep.subr.bf16.mxu0 0
        %3654 = vmatpush1.bf16.msra.mxu0 0
        %3655 = vmatprep.subr.bf16.mxu0 0
        %3656 = vmatpush1.bf16.msra.mxu0 0
        %3657 = vmatprep.subr.bf16.mxu0 0
        %3658 = vmatpush1.bf16.msra.mxu0 0
        %3659 = vmatprep.subr.bf16.mxu0 0
        %3660 = vmatpush1.bf16.msra.mxu0 0
        %3661 = vmatprep.subr.bf16.mxu0 0
        %3662 = vmatpush1.bf16.msra.mxu0 0
        %3663 = vmatprep.subr.bf16.mxu0 0
        %3664 = vmatpush1.bf16.msra.mxu0 0
        %3665 = vmatprep.subr.bf16.mxu0 0
        %3666 = vmatpush1.bf16.msra.mxu0 0
        %3667 = vmatprep.subr.bf16.mxu0 0
        %3668 = vmatpush1.bf16.msra.mxu0 0
        %3669 = vmatprep.mubr.bf16.mxu0 0
        %3670 = vmatmul.mubr.bf16.gmra.mrb[0].mxu0 %v3635
        %v3671 = vpop.f32.mrb[0].mxu0
        %v3672 = vadd.f32 0.0, %v3671
        %v3673 = vpop.f32.mrb[0].mxu0
        %v3674 = vpop.f32.mrb[0].mxu0
        %v3675 = vadd.f32 0.0, %v3674
        %v3676 = vpop.f32.mrb[0].mxu0
        %3677 = vdwg.mxu0
        %v3678 = vcombine.low %v3364, %v3452
        %v3679 = vcombine.high %v3364, %v3452
        %v3681 = vunpack.c.l.s4 1983009808
        %v3682 = vunpack.c.0.s8 %v3681
        %v3683 = vlaneseq
        %v3684 = vshrl.u32 %v3683, 7
        %v3685 = vsub.s32 %v3682, %v3684
        %v3686 = vrot.slane %v3678, %v3685
        %v3688 = vunpack.c.l.s4 1983009808
        %v3689 = vunpack.c.0.s8 %v3688
        %v3690 = vlaneseq
        %v3691 = vshrl.u32 %v3690, 7
        %v3692 = vsub.s32 %v3689, %v3691
        %v3693 = vrot.slane %v3679, %v3692
        %v3694 = vcombine.low %v3408, %v3496
        %v3695 = vcombine.high %v3408, %v3496
        %v3697 = vunpack.c.l.s4 1983009808
        %v3698 = vunpack.c.0.s8 %v3697
        %v3699 = vlaneseq
        %v3700 = vshrl.u32 %v3699, 7
        %v3701 = vsub.s32 %v3698, %v3700
        %v3702 = vrot.slane %v3694, %v3701
        %v3704 = vunpack.c.l.s4 1983009808
        %v3705 = vunpack.c.0.s8 %v3704
        %v3706 = vlaneseq
        %v3707 = vshrl.u32 %v3706, 7
        %v3708 = vsub.s32 %v3705, %v3707
        %v3709 = vrot.slane %v3695, %v3708
        %v3710 = vcombine.low %v3686, %v3702
        %v3711 = vcombine.high %v3686, %v3702
        %v3713 = vunpack.c.l.s4 1934713408
        %v3714 = vunpack.c.0.s8 %v3713
        %v3715 = vlaneseq
        %v3716 = vshrl.u32 %v3715, 7
        %v3717 = vsub.s32 %v3714, %v3716
        %v3718 = vrot.slane %v3710, %v3717
        %v3720 = vunpack.c.l.s4 1934713408
        %v3721 = vunpack.c.0.s8 %v3720
        %v3722 = vlaneseq
        %v3723 = vshrl.u32 %v3722, 7
        %v3724 = vsub.s32 %v3721, %v3723
        %v3725 = vrot.slane %v3711, %v3724
        %v3726 = vcombine.low %v3693, %v3709
        %v3727 = vcombine.high %v3693, %v3709
        %v3729 = vunpack.c.l.s4 1934713408
        %v3730 = vunpack.c.0.s8 %v3729
        %v3731 = vlaneseq
        %v3732 = vshrl.u32 %v3731, 7
        %v3733 = vsub.s32 %v3730, %v3732
        %v3734 = vrot.slane %v3726, %v3733
        %v3736 = vunpack.c.l.s4 1934713408
        %v3737 = vunpack.c.0.s8 %v3736
        %v3738 = vlaneseq
        %v3739 = vshrl.u32 %v3738, 7
        %v3740 = vsub.s32 %v3737, %v3739
        %v3741 = vrot.slane %v3727, %v3740
        %v3742 = vcombine.high %v3718, 0.0
        %v3743 = vcombine.high %v3725, 0.0
        %v3744 = vcombine.high %v3734, 0.0
        %v3745 = vcombine.high %v3741, 0.0
        %v3746 = vcombine.low %v3367, %v3455
        %v3747 = vcombine.high %v3367, %v3455
        %v3749 = vunpack.c.l.s4 1983009808
        %v3750 = vunpack.c.0.s8 %v3749
        %v3751 = vlaneseq
        %v3752 = vshrl.u32 %v3751, 7
        %v3753 = vsub.s32 %v3750, %v3752
        %v3754 = vrot.slane %v3746, %v3753
        %v3756 = vunpack.c.l.s4 1983009808
        %v3757 = vunpack.c.0.s8 %v3756
        %v3758 = vlaneseq
        %v3759 = vshrl.u32 %v3758, 7
        %v3760 = vsub.s32 %v3757, %v3759
        %v3761 = vrot.slane %v3747, %v3760
        %v3762 = vcombine.low %v3411, %v3499
        %v3763 = vcombine.high %v3411, %v3499
        %v3765 = vunpack.c.l.s4 1983009808
        %v3766 = vunpack.c.0.s8 %v3765
        %v3767 = vlaneseq
        %v3768 = vshrl.u32 %v3767, 7
        %v3769 = vsub.s32 %v3766, %v3768
        %v3770 = vrot.slane %v3762, %v3769
        %v3772 = vunpack.c.l.s4 1983009808
        %v3773 = vunpack.c.0.s8 %v3772
        %v3774 = vlaneseq
        %v3775 = vshrl.u32 %v3774, 7
        %v3776 = vsub.s32 %v3773, %v3775
        %v3777 = vrot.slane %v3763, %v3776
        %v3778 = vcombine.low %v3754, %v3770
        %v3779 = vcombine.high %v3754, %v3770
        %v3781 = vunpack.c.l.s4 1934713408
        %v3782 = vunpack.c.0.s8 %v3781
        %v3783 = vlaneseq
        %v3784 = vshrl.u32 %v3783, 7
        %v3785 = vsub.s32 %v3782, %v3784
        %v3786 = vrot.slane %v3778, %v3785
        %v3788 = vunpack.c.l.s4 1934713408
        %v3789 = vunpack.c.0.s8 %v3788
        %v3790 = vlaneseq
        %v3791 = vshrl.u32 %v3790, 7
        %v3792 = vsub.s32 %v3789, %v3791
        %v3793 = vrot.slane %v3779, %v3792
        %v3794 = vcombine.low %v3761, %v3777
        %v3795 = vcombine.high %v3761, %v3777
        %v3797 = vunpack.c.l.s4 1934713408
        %v3798 = vunpack.c.0.s8 %v3797
        %v3799 = vlaneseq
        %v3800 = vshrl.u32 %v3799, 7
        %v3801 = vsub.s32 %v3798, %v3800
        %v3802 = vrot.slane %v3794, %v3801
        %v3804 = vunpack.c.l.s4 1934713408
        %v3805 = vunpack.c.0.s8 %v3804
        %v3806 = vlaneseq
        %v3807 = vshrl.u32 %v3806, 7
        %v3808 = vsub.s32 %v3805, %v3807
        %v3809 = vrot.slane %v3795, %v3808
        %v3810 = vcombine.high %v3786, 0.0
        %v3811 = vcombine.high %v3793, 0.0
        %v3812 = vcombine.high %v3802, 0.0
        %v3813 = vcombine.high %v3809, 0.0
        %v3814 = vcombine.low %v3540, %v3628
        %v3815 = vcombine.high %v3540, %v3628
        %v3817 = vunpack.c.l.s4 1983009808
        %v3818 = vunpack.c.0.s8 %v3817
        %v3819 = vlaneseq
        %v3820 = vshrl.u32 %v3819, 7
        %v3821 = vsub.s32 %v3818, %v3820
        %v3822 = vrot.slane %v3814, %v3821
        %v3824 = vunpack.c.l.s4 1983009808
        %v3825 = vunpack.c.0.s8 %v3824
        %v3826 = vlaneseq
        %v3827 = vshrl.u32 %v3826, 7
        %v3828 = vsub.s32 %v3825, %v3827
        %v3829 = vrot.slane %v3815, %v3828
        %v3830 = vcombine.low %v3584, %v3672
        %v3831 = vcombine.high %v3584, %v3672
        %v3833 = vunpack.c.l.s4 1983009808
        %v3834 = vunpack.c.0.s8 %v3833
        %v3835 = vlaneseq
        %v3836 = vshrl.u32 %v3835, 7
        %v3837 = vsub.s32 %v3834, %v3836
        %v3838 = vrot.slane %v3830, %v3837
        %v3840 = vunpack.c.l.s4 1983009808
        %v3841 = vunpack.c.0.s8 %v3840
        %v3842 = vlaneseq
        %v3843 = vshrl.u32 %v3842, 7
        %v3844 = vsub.s32 %v3841, %v3843
        %v3845 = vrot.slane %v3831, %v3844
        %v3846 = vcombine.low %v3822, %v3838
        %v3847 = vcombine.high %v3822, %v3838
        %v3849 = vunpack.c.l.s4 1934713408
        %v3850 = vunpack.c.0.s8 %v3849
        %v3851 = vlaneseq
        %v3852 = vshrl.u32 %v3851, 7
        %v3853 = vsub.s32 %v3850, %v3852
        %v3854 = vrot.slane %v3846, %v3853
        %v3856 = vunpack.c.l.s4 1934713408
        %v3857 = vunpack.c.0.s8 %v3856
        %v3858 = vlaneseq
        %v3859 = vshrl.u32 %v3858, 7
        %v3860 = vsub.s32 %v3857, %v3859
        %v3861 = vrot.slane %v3847, %v3860
        %v3862 = vcombine.low %v3829, %v3845
        %v3863 = vcombine.high %v3829, %v3845
        %v3865 = vunpack.c.l.s4 1934713408
        %v3866 = vunpack.c.0.s8 %v3865
        %v3867 = vlaneseq
        %v3868 = vshrl.u32 %v3867, 7
        %v3869 = vsub.s32 %v3866, %v3868
        %v3870 = vrot.slane %v3862, %v3869
        %v3872 = vunpack.c.l.s4 1934713408
        %v3873 = vunpack.c.0.s8 %v3872
        %v3874 = vlaneseq
        %v3875 = vshrl.u32 %v3874, 7
        %v3876 = vsub.s32 %v3873, %v3875
        %v3877 = vrot.slane %v3863, %v3876
        %v3878 = vcombine.high %v3854, 0.0
        %v3879 = vcombine.high %v3861, 0.0
        %v3880 = vcombine.high %v3870, 0.0
        %v3881 = vcombine.high %v3877, 0.0
        %v3882 = vcombine.low %v3543, %v3631
        %v3883 = vcombine.high %v3543, %v3631
        %v3885 = vunpack.c.l.s4 1983009808
        %v3886 = vunpack.c.0.s8 %v3885
        %v3887 = vlaneseq
        %v3888 = vshrl.u32 %v3887, 7
        %v3889 = vsub.s32 %v3886, %v3888
        %v3890 = vrot.slane %v3882, %v3889
        %v3892 = vunpack.c.l.s4 1983009808
        %v3893 = vunpack.c.0.s8 %v3892
        %v3894 = vlaneseq
        %v3895 = vshrl.u32 %v3894, 7
        %v3896 = vsub.s32 %v3893, %v3895
        %v3897 = vrot.slane %v3883, %v3896
        %v3898 = vcombine.low %v3587, %v3675
        %v3899 = vcombine.high %v3587, %v3675
        %v3901 = vunpack.c.l.s4 1983009808
        %v3902 = vunpack.c.0.s8 %v3901
        %v3903 = vlaneseq
        %v3904 = vshrl.u32 %v3903, 7
        %v3905 = vsub.s32 %v3902, %v3904
        %v3906 = vrot.slane %v3898, %v3905
        %v3908 = vunpack.c.l.s4 1983009808
        %v3909 = vunpack.c.0.s8 %v3908
        %v3910 = vlaneseq
        %v3911 = vshrl.u32 %v3910, 7
        %v3912 = vsub.s32 %v3909, %v3911
        %v3913 = vrot.slane %v3899, %v3912
        %v3914 = vcombine.low %v3890, %v3906
        %v3915 = vcombine.high %v3890, %v3906
        %v3917 = vunpack.c.l.s4 1934713408
        %v3918 = vunpack.c.0.s8 %v3917
        %v3919 = vlaneseq
        %v3920 = vshrl.u32 %v3919, 7
        %v3921 = vsub.s32 %v3918, %v3920
        %v3922 = vrot.slane %v3914, %v3921
        %v3924 = vunpack.c.l.s4 1934713408
        %v3925 = vunpack.c.0.s8 %v3924
        %v3926 = vlaneseq
        %v3927 = vshrl.u32 %v3926, 7
        %v3928 = vsub.s32 %v3925, %v3927
        %v3929 = vrot.slane %v3915, %v3928
        %v3930 = vcombine.low %v3897, %v3913
        %v3931 = vcombine.high %v3897, %v3913
        %v3933 = vunpack.c.l.s4 1934713408
        %v3934 = vunpack.c.0.s8 %v3933
        %v3935 = vlaneseq
        %v3936 = vshrl.u32 %v3935, 7
        %v3937 = vsub.s32 %v3934, %v3936
        %v3938 = vrot.slane %v3930, %v3937
        %v3940 = vunpack.c.l.s4 1934713408
        %v3941 = vunpack.c.0.s8 %v3940
        %v3942 = vlaneseq
        %v3943 = vshrl.u32 %v3942, 7
        %v3944 = vsub.s32 %v3941, %v3943
        %v3945 = vrot.slane %v3931, %v3944
        %v3946 = vcombine.high %v3922, 0.0
        %v3947 = vcombine.high %v3929, 0.0
        %v3948 = vcombine.high %v3938, 0.0
        %v3949 = vcombine.high %v3945, 0.0
        %v3950 = vcombine.low %v3718, %v3725
        %v3952 = vunpack.c.l.s4 1983009808
        %v3953 = vunpack.c.0.s8 %v3952
        %v3954 = vlaneseq
        %v3955 = vshrl.u32 %v3954, 7
        %v3956 = vsub.s32 %v3953, %v3955
        %v3957 = vrot.slane %v3950, %v3956
        %v3958 = vcombine.low %v3742, %v3743
        %v3960 = vunpack.c.l.s4 1983009808
        %v3961 = vunpack.c.0.s8 %v3960
        %v3962 = vlaneseq
        %v3963 = vshrl.u32 %v3962, 7
        %v3964 = vsub.s32 %v3961, %v3963
        %v3965 = vrot.slane %v3958, %v3964
        %v3966 = vcombine.low %v3734, %v3741
        %v3968 = vunpack.c.l.s4 1983009808
        %v3969 = vunpack.c.0.s8 %v3968
        %v3970 = vlaneseq
        %v3971 = vshrl.u32 %v3970, 7
        %v3972 = vsub.s32 %v3969, %v3971
        %v3973 = vrot.slane %v3966, %v3972
        %v3974 = vcombine.low %v3744, %v3745
        %v3976 = vunpack.c.l.s4 1983009808
        %v3977 = vunpack.c.0.s8 %v3976
        %v3978 = vlaneseq
        %v3979 = vshrl.u32 %v3978, 7
        %v3980 = vsub.s32 %v3977, %v3979
        %v3981 = vrot.slane %v3974, %v3980
        %v3982 = vcombine.low %v3957, %v3965
        %v3983 = vcombine.high %v3957, %v3965
        %v3985 = vunpack.c.l.s4 1934713408
        %v3986 = vunpack.c.0.s8 %v3985
        %v3987 = vlaneseq
        %v3988 = vshrl.u32 %v3987, 7
        %v3989 = vsub.s32 %v3986, %v3988
        %v3990 = vrot.slane %v3982, %v3989
        %v3992 = vunpack.c.l.s4 1934713408
        %v3993 = vunpack.c.0.s8 %v3992
        %v3994 = vlaneseq
        %v3995 = vshrl.u32 %v3994, 7
        %v3996 = vsub.s32 %v3993, %v3995
        %v3997 = vrot.slane %v3983, %v3996
        %v3998 = vcombine.low %v3973, %v3981
        %v3999 = vcombine.high %v3973, %v3981
        %v4001 = vunpack.c.l.s4 1934713408
        %v4002 = vunpack.c.0.s8 %v4001
        %v4003 = vlaneseq
        %v4004 = vshrl.u32 %v4003, 7
        %v4005 = vsub.s32 %v4002, %v4004
        %v4006 = vrot.slane %v3998, %v4005
        %v4008 = vunpack.c.l.s4 1934713408
        %v4009 = vunpack.c.0.s8 %v4008
        %v4010 = vlaneseq
        %v4011 = vshrl.u32 %v4010, 7
        %v4012 = vsub.s32 %v4009, %v4011
        %v4013 = vrot.slane %v3999, %v4012
        %v4014 = vcombine.low %v3990, %v4006
        %v4015 = vcombine.high %v3990, %v4006
        %v4016 = vcombine.low %v3997, %v4013
        %v4017 = vcombine.high %v3997, %v4013
        %v4018 = vcombine.low %v3786, %v3793
        %v4020 = vunpack.c.l.s4 1983009808
        %v4021 = vunpack.c.0.s8 %v4020
        %v4022 = vlaneseq
        %v4023 = vshrl.u32 %v4022, 7
        %v4024 = vsub.s32 %v4021, %v4023
        %v4025 = vrot.slane %v4018, %v4024
        %v4026 = vcombine.low %v3810, %v3811
        %v4028 = vunpack.c.l.s4 1983009808
        %v4029 = vunpack.c.0.s8 %v4028
        %v4030 = vlaneseq
        %v4031 = vshrl.u32 %v4030, 7
        %v4032 = vsub.s32 %v4029, %v4031
        %v4033 = vrot.slane %v4026, %v4032
        %v4034 = vcombine.low %v3802, %v3809
        %v4036 = vunpack.c.l.s4 1983009808
        %v4037 = vunpack.c.0.s8 %v4036
        %v4038 = vlaneseq
        %v4039 = vshrl.u32 %v4038, 7
        %v4040 = vsub.s32 %v4037, %v4039
        %v4041 = vrot.slane %v4034, %v4040
        %v4042 = vcombine.low %v3812, %v3813
        %v4044 = vunpack.c.l.s4 1983009808
        %v4045 = vunpack.c.0.s8 %v4044
        %v4046 = vlaneseq
        %v4047 = vshrl.u32 %v4046, 7
        %v4048 = vsub.s32 %v4045, %v4047
        %v4049 = vrot.slane %v4042, %v4048
        %v4050 = vcombine.low %v4025, %v4033
        %v4051 = vcombine.high %v4025, %v4033
        %v4053 = vunpack.c.l.s4 1934713408
        %v4054 = vunpack.c.0.s8 %v4053
        %v4055 = vlaneseq
        %v4056 = vshrl.u32 %v4055, 7
        %v4057 = vsub.s32 %v4054, %v4056
        %v4058 = vrot.slane %v4050, %v4057
        %v4060 = vunpack.c.l.s4 1934713408
        %v4061 = vunpack.c.0.s8 %v4060
        %v4062 = vlaneseq
        %v4063 = vshrl.u32 %v4062, 7
        %v4064 = vsub.s32 %v4061, %v4063
        %v4065 = vrot.slane %v4051, %v4064
        %v4066 = vcombine.low %v4041, %v4049
        %v4067 = vcombine.high %v4041, %v4049
        %v4069 = vunpack.c.l.s4 1934713408
        %v4070 = vunpack.c.0.s8 %v4069
        %v4071 = vlaneseq
        %v4072 = vshrl.u32 %v4071, 7
        %v4073 = vsub.s32 %v4070, %v4072
        %v4074 = vrot.slane %v4066, %v4073
        %v4076 = vunpack.c.l.s4 1934713408
        %v4077 = vunpack.c.0.s8 %v4076
        %v4078 = vlaneseq
        %v4079 = vshrl.u32 %v4078, 7
        %v4080 = vsub.s32 %v4077, %v4079
        %v4081 = vrot.slane %v4067, %v4080
        %v4082 = vcombine.low %v4058, %v4074
        %v4083 = vcombine.high %v4058, %v4074
        %v4084 = vcombine.low %v4065, %v4081
        %v4085 = vcombine.high %v4065, %v4081
        %v4086 = vcombine.low %v3854, %v3861
        %v4088 = vunpack.c.l.s4 1983009808
        %v4089 = vunpack.c.0.s8 %v4088
        %v4090 = vlaneseq
        %v4091 = vshrl.u32 %v4090, 7
        %v4092 = vsub.s32 %v4089, %v4091
        %v4093 = vrot.slane %v4086, %v4092
        %v4094 = vcombine.low %v3878, %v3879
        %v4096 = vunpack.c.l.s4 1983009808
        %v4097 = vunpack.c.0.s8 %v4096
        %v4098 = vlaneseq
        %v4099 = vshrl.u32 %v4098, 7
        %v4100 = vsub.s32 %v4097, %v4099
        %v4101 = vrot.slane %v4094, %v4100
        %v4102 = vcombine.low %v3870, %v3877
        %v4104 = vunpack.c.l.s4 1983009808
        %v4105 = vunpack.c.0.s8 %v4104
        %v4106 = vlaneseq
        %v4107 = vshrl.u32 %v4106, 7
        %v4108 = vsub.s32 %v4105, %v4107
        %v4109 = vrot.slane %v4102, %v4108
        %v4110 = vcombine.low %v3880, %v3881
        %v4112 = vunpack.c.l.s4 1983009808
        %v4113 = vunpack.c.0.s8 %v4112
        %v4114 = vlaneseq
        %v4115 = vshrl.u32 %v4114, 7
        %v4116 = vsub.s32 %v4113, %v4115
        %v4117 = vrot.slane %v4110, %v4116
        %v4118 = vcombine.low %v4093, %v4101
        %v4119 = vcombine.high %v4093, %v4101
        %v4121 = vunpack.c.l.s4 1934713408
        %v4122 = vunpack.c.0.s8 %v4121
        %v4123 = vlaneseq
        %v4124 = vshrl.u32 %v4123, 7
        %v4125 = vsub.s32 %v4122, %v4124
        %v4126 = vrot.slane %v4118, %v4125
        %v4128 = vunpack.c.l.s4 1934713408
        %v4129 = vunpack.c.0.s8 %v4128
        %v4130 = vlaneseq
        %v4131 = vshrl.u32 %v4130, 7
        %v4132 = vsub.s32 %v4129, %v4131
        %v4133 = vrot.slane %v4119, %v4132
        %v4134 = vcombine.low %v4109, %v4117
        %v4135 = vcombine.high %v4109, %v4117
        %v4137 = vunpack.c.l.s4 1934713408
        %v4138 = vunpack.c.0.s8 %v4137
        %v4139 = vlaneseq
        %v4140 = vshrl.u32 %v4139, 7
        %v4141 = vsub.s32 %v4138, %v4140
        %v4142 = vrot.slane %v4134, %v4141
        %v4144 = vunpack.c.l.s4 1934713408
        %v4145 = vunpack.c.0.s8 %v4144
        %v4146 = vlaneseq
        %v4147 = vshrl.u32 %v4146, 7
        %v4148 = vsub.s32 %v4145, %v4147
        %v4149 = vrot.slane %v4135, %v4148
        %v4150 = vcombine.low %v4126, %v4142
        %v4151 = vcombine.high %v4126, %v4142
        %v4152 = vcombine.low %v4133, %v4149
        %v4153 = vcombine.high %v4133, %v4149
        %v4154 = vcombine.low %v3922, %v3929
        %v4156 = vunpack.c.l.s4 1983009808
        %v4157 = vunpack.c.0.s8 %v4156
        %v4158 = vlaneseq
        %v4159 = vshrl.u32 %v4158, 7
        %v4160 = vsub.s32 %v4157, %v4159
        %v4161 = vrot.slane %v4154, %v4160
        %v4162 = vcombine.low %v3946, %v3947
        %v4164 = vunpack.c.l.s4 1983009808
        %v4165 = vunpack.c.0.s8 %v4164
        %v4166 = vlaneseq
        %v4167 = vshrl.u32 %v4166, 7
        %v4168 = vsub.s32 %v4165, %v4167
        %v4169 = vrot.slane %v4162, %v4168
        %v4170 = vcombine.low %v3938, %v3945
        %v4172 = vunpack.c.l.s4 1983009808
        %v4173 = vunpack.c.0.s8 %v4172
        %v4174 = vlaneseq
        %v4175 = vshrl.u32 %v4174, 7
        %v4176 = vsub.s32 %v4173, %v4175
        %v4177 = vrot.slane %v4170, %v4176
        %v4178 = vcombine.low %v3948, %v3949
        %v4180 = vunpack.c.l.s4 1983009808
        %v4181 = vunpack.c.0.s8 %v4180
        %v4182 = vlaneseq
        %v4183 = vshrl.u32 %v4182, 7
        %v4184 = vsub.s32 %v4181, %v4183
        %v4185 = vrot.slane %v4178, %v4184
        %v4186 = vcombine.low %v4161, %v4169
        %v4187 = vcombine.high %v4161, %v4169
        %v4189 = vunpack.c.l.s4 1934713408
        %v4190 = vunpack.c.0.s8 %v4189
        %v4191 = vlaneseq
        %v4192 = vshrl.u32 %v4191, 7
        %v4193 = vsub.s32 %v4190, %v4192
        %v4194 = vrot.slane %v4186, %v4193
        %v4196 = vunpack.c.l.s4 1934713408
        %v4197 = vunpack.c.0.s8 %v4196
        %v4198 = vlaneseq
        %v4199 = vshrl.u32 %v4198, 7
        %v4200 = vsub.s32 %v4197, %v4199
        %v4201 = vrot.slane %v4187, %v4200
        %v4202 = vcombine.low %v4177, %v4185
        %v4203 = vcombine.high %v4177, %v4185
        %v4205 = vunpack.c.l.s4 1934713408
        %v4206 = vunpack.c.0.s8 %v4205
        %v4207 = vlaneseq
        %v4208 = vshrl.u32 %v4207, 7
        %v4209 = vsub.s32 %v4206, %v4208
        %v4210 = vrot.slane %v4202, %v4209
        %v4212 = vunpack.c.l.s4 1934713408
        %v4213 = vunpack.c.0.s8 %v4212
        %v4214 = vlaneseq
        %v4215 = vshrl.u32 %v4214, 7
        %v4216 = vsub.s32 %v4213, %v4215
        %v4217 = vrot.slane %v4203, %v4216
        %v4218 = vcombine.low %v4194, %v4210
        %v4219 = vcombine.high %v4194, %v4210
        %v4220 = vcombine.low %v4201, %v4217
        %v4221 = vcombine.high %v4201, %v4217
        %4226 = vrot.lane.b32.xlu0 %v4015, 32
        %v4227 = vpop.permute.xlu0 %4226
        %4228 = vrot.lane.b32.xlu0 %v4083, 32
        %v4229 = vpop.permute.xlu0 %4228
        %4230 = vrot.lane.b32.xlu0 %v4151, 32
        %v4231 = vpop.permute.xlu0 %4230
        %4232 = vrot.lane.b32.xlu0 %v4219, 32
        %v4233 = vpop.permute.xlu0 %4232
        %4242 = vrot.lane.b32.xlu0 %v4016, 64
        %v4243 = vpop.permute.xlu0 %4242
        %4244 = vrot.lane.b32.xlu0 %v4084, 64
        %v4245 = vpop.permute.xlu0 %4244
        %4246 = vrot.lane.b32.xlu0 %v4152, 64
        %v4247 = vpop.permute.xlu0 %4246
        %4248 = vrot.lane.b32.xlu0 %v4220, 64
        %v4249 = vpop.permute.xlu0 %4248
        %4258 = vrot.lane.b32.xlu0 %v4017, 96
        %v4259 = vpop.permute.xlu0 %4258
        %4260 = vrot.lane.b32.xlu0 %v4085, 96
        %v4261 = vpop.permute.xlu0 %4260
        %4262 = vrot.lane.b32.xlu0 %v4153, 96
        %v4263 = vpop.permute.xlu0 %4262
        %4264 = vrot.lane.b32.xlu0 %v4221, 96
        %v4265 = vpop.permute.xlu0 %4264
        %v4270 = vsel %vm2756, %v4014, %v4227
        %v4271 = vsel %vm2756, %v4082, %v4229
        %v4272 = vsel %vm2756, %v4150, %v4231
        %v4273 = vsel %vm2756, %v4218, %v4233
        %vm4274 = vcmask 523264
        %v4275 = vsel %vm4274, %v4270, %v4243
        %v4276 = vsel %vm4274, %v4271, %v4245
        %v4277 = vsel %vm4274, %v4272, %v4247
        %v4278 = vsel %vm4274, %v4273, %v4249
        %vm4279 = vcmask 785408
        %v4280 = vsel %vm4279, %v4275, %v4259
        %v4281 = vsel %vm4279, %v4276, %v4261
        %v4282 = vsel %vm4279, %v4277, %v4263
        %v4283 = vsel %vm4279, %v4278, %v4265
        %v4284 = vpack.c.bf16 %v4281, %v4280
        %v4285 = vpack.c.bf16 %v4283, %v4282
        %v4286 = vld [vmem:[%s542] sm:$0xf]
        %v4287 = vld [vmem:[%s542 + $0x4] sm:$0xf]
        %v4288 = vld [vmem:[%s542 + $0x8] sm:$0xf]
        %v4289 = vld [vmem:[%s542 + $0xc] sm:$0xf]
        %v4290 = vld [vmem:[%s542 + $0x10] sm:$0xf]
        %v4291 = vld [vmem:[%s542 + $0x14] sm:$0xf]
        %v4292 = vld [vmem:[%s542 + $0x18] sm:$0xf]
        %v4293 = vld [vmem:[%s542 + $0x1c] sm:$0xf]
        %v4294 = vld [vmem:[%s542 + $0x20] sm:$0xf]
        %v4295 = vld [vmem:[%s542 + $0x24] sm:$0xf]
        %v4296 = vld [vmem:[%s542 + $0x28] sm:$0xf]
        %v4297 = vld [vmem:[%s542 + $0x2c] sm:$0xf]
        %v4298 = vld [vmem:[%s542 + $0x30] sm:$0xf]
        %v4299 = vld [vmem:[%s542 + $0x34] sm:$0xf]
        %v4300 = vld [vmem:[%s542 + $0x38] sm:$0xf]
        %v4301 = vld [vmem:[%s542 + $0x3c] sm:$0xf]
        %s4302 = scalar_lea.vmem [#allocation10], %s32
        %v4303 = vld [vmem:[%s4302] sm:$0x1]
        %v4305 = vlaneseq
        %v4306 = vshrl.u32 %v4305, 7
        %v4307 = vsub.s32 0, %v4306
        %v4308 = vrot.slane %v4303, %v4307
        %v4326 = vunpack.c.l.b16 %v4286
        %v4327 = vunpack.c.l.b16 %v4287
        %v4328 = vunpack.c.l.b16 %v4288
        %v4329 = vunpack.c.l.b16 %v4289
        %v4330 = vunpack.c.l.b16 %v4290
        %v4331 = vunpack.c.l.b16 %v4291
        %v4332 = vunpack.c.l.b16 %v4292
        %v4333 = vunpack.c.l.b16 %v4293
        %v4334 = vunpack.c.l.b16 %v4294
        %v4335 = vunpack.c.l.b16 %v4295
        %v4336 = vunpack.c.l.b16 %v4296
        %v4337 = vunpack.c.l.b16 %v4297
        %v4338 = vunpack.c.l.b16 %v4298
        %v4339 = vunpack.c.l.b16 %v4299
        %v4340 = vunpack.c.l.b16 %v4300
        %v4341 = vunpack.c.l.b16 %v4301
        %v4342 = vpack.c.b16 %v4327, %v4326
        %v4343 = vpack.c.b16 %v4329, %v4328
        %v4344 = vpack.c.b16 %v4331, %v4330
        %v4345 = vpack.c.b16 %v4333, %v4332
        %v4346 = vpack.c.b16 %v4335, %v4334
        %v4347 = vpack.c.b16 %v4337, %v4336
        %v4348 = vpack.c.b16 %v4339, %v4338
        %v4349 = vpack.c.b16 %v4341, %v4340
        %4358 = vmatprep.subr.bf16.mxu0 0
        %4359 = vmatpush1.bf16.msra.mxu0 %v4342
        %4360 = vmatprep.subr.bf16.mxu0 0
        %4361 = vmatpush1.bf16.msra.mxu0 %v4343
        %4362 = vmatprep.subr.bf16.mxu0 0
        %4363 = vmatpush1.bf16.msra.mxu0 %v4344
        %4364 = vmatprep.subr.bf16.mxu0 0
        %4365 = vmatpush1.bf16.msra.mxu0 %v4345
        %4366 = vmatprep.subr.bf16.mxu0 0
        %4367 = vmatpush1.bf16.msra.mxu0 %v4346
        %4368 = vmatprep.subr.bf16.mxu0 0
        %4369 = vmatpush1.bf16.msra.mxu0 %v4347
        %4370 = vmatprep.subr.bf16.mxu0 0
        %4371 = vmatpush1.bf16.msra.mxu0 %v4348
        %4372 = vmatprep.subr.bf16.mxu0 0
        %4373 = vmatpush1.bf16.msra.mxu0 %v4349
        %4374 = vmatprep.subr.bf16.mxu0 0
        %4375 = vmatpush1.bf16.msra.mxu0 0
        %4376 = vmatprep.subr.bf16.mxu0 0
        %4377 = vmatpush1.bf16.msra.mxu0 0
        %4378 = vmatprep.subr.bf16.mxu0 0
        %4379 = vmatpush1.bf16.msra.mxu0 0
        %4380 = vmatprep.subr.bf16.mxu0 0
        %4381 = vmatpush1.bf16.msra.mxu0 0
        %4382 = vmatprep.subr.bf16.mxu0 0
        %4383 = vmatpush1.bf16.msra.mxu0 0
        %4384 = vmatprep.subr.bf16.mxu0 0
        %4385 = vmatpush1.bf16.msra.mxu0 0
        %4386 = vmatprep.subr.bf16.mxu0 0
        %4387 = vmatpush1.bf16.msra.mxu0 0
        %4388 = vmatprep.subr.bf16.mxu0 0
        %4389 = vmatpush1.bf16.msra.mxu0 0
        %4390 = vmatprep.mubr.bf16.mxu0 0
        %4391 = vmatmul.mubr.bf16.gmra.mrb[0].mxu0 %v4284
        %v4392 = vpop.f32.mrb[0].mxu0
        %v4393 = vadd.f32 %v4308, %v4392
        %v4394 = vpop.f32.mrb[0].mxu0
        %v4395 = vpop.f32.mrb[0].mxu0
        %v4396 = vadd.f32 %v4308, %v4395
        %v4397 = vpop.f32.mrb[0].mxu0
        %4398 = vmatprep.mubr.bf16.mxu0 0
        %4399 = vmatmul.mubr.bf16.gmra.mrb[0].mxu0 %v4285
        %v4400 = vpop.f32.mrb[0].mxu0
        %v4401 = vadd.f32 %v4308, %v4400
        %v4402 = vpop.f32.mrb[0].mxu0
        %v4403 = vpop.f32.mrb[0].mxu0
        %v4404 = vadd.f32 %v4308, %v4403
        %v4405 = vpop.f32.mrb[0].mxu0
        %4406 = vdwg.mxu0
        %v4407 = vadd.f32 %v638, %v4393
        %v4408 = vadd.f32 %v639, %v4396
        %v4409 = vadd.f32 %v640, %v4401
        %v4410 = vadd.f32 %v641, %v4404
        %s4411 = scalar_lea.vmem %s5, %s32
        %v4412 = vld [vmem:[%s4411] sm:$0x1]
        %4413 = vadd.xlane.f32.xlu0 %v4407
        %v4414 = vpop.xlane.xlu0 %4413
        %4415 = vadd.xlane.f32.xlu0 %v4408
        %v4416 = vpop.xlane.xlu0 %4415
        %4417 = vadd.xlane.f32.xlu0 %v4409
        %v4418 = vpop.xlane.xlu0 %4417
        %4419 = vadd.xlane.f32.xlu0 %v4410
        %v4420 = vpop.xlane.xlu0 %4419
        %v4421 = vmul.f32 %v4414, %v652
        %v4422 = vmul.f32 %v4416, %v652
        %v4423 = vmul.f32 %v4418, %v652
        %v4424 = vmul.f32 %v4420, %v652
        %v4425 = vsub.f32 %v4407, %v4421
        %v4426 = vsub.f32 %v4408, %v4422
        %v4427 = vsub.f32 %v4409, %v4423
        %v4428 = vsub.f32 %v4410, %v4424
        %v4429 = vmul.f32 %v4425, %v4425
        %v4430 = vmul.f32 %v4426, %v4426
        %v4431 = vmul.f32 %v4427, %v4427
        %v4432 = vmul.f32 %v4428, %v4428
        %4433 = vadd.xlane.f32.xlu0 %v4429
        %v4434 = vpop.xlane.xlu0 %4433
        %4435 = vadd.xlane.f32.xlu0 %v4430
        %v4436 = vpop.xlane.xlu0 %4435
        %4437 = vadd.xlane.f32.xlu0 %v4431
        %v4438 = vpop.xlane.xlu0 %4437
        %4439 = vadd.xlane.f32.xlu0 %v4432
        %v4440 = vpop.xlane.xlu0 %4439
        %v4441 = vmul.f32 %v4434, %v652
        %v4442 = vmul.f32 %v4436, %v652
        %v4443 = vmul.f32 %v4438, %v652
        %v4444 = vmul.f32 %v4440, %v652
        %v4445 = vadd.f32 %v4441, 1e-05
        %v4446 = vadd.f32 %v4442, 1e-05
        %v4447 = vadd.f32 %v4443, 1e-05
        %v4448 = vadd.f32 %v4444, 1e-05
        %v4449 = vrsqrt.pop %v4445
        %v4450 = vrsqrt.pop %v4446
        %v4451 = vrsqrt.pop %v4447
        %v4452 = vrsqrt.pop %v4448
        %v4453 = vmul.f32 %v4425, %v4449
        %v4454 = vmul.f32 %v4426, %v4450
        %v4455 = vmul.f32 %v4427, %v4451
        %v4456 = vmul.f32 %v4428, %v4452
        %v4458 = vlaneseq
        %v4459 = vshrl.u32 %v4458, 7
        %v4460 = vsub.s32 0, %v4459
        %v4461 = vrot.slane %v4412, %v4460
        %v4463 = vmul.f32 %v4453, %v4461
        %v4464 = vmul.f32 %v4454, %v4461
        %v4465 = vmul.f32 %v4455, %v4461
        %v4466 = vmul.f32 %v4456, %v4461
        %v4467 = vpack.c.bf16 %v4464, %v4463
        %v4468 = vpack.c.bf16 %v4466, %v4465
        %v4469 = vld [vmem:[%s551] sm:$0xff]
        %v4470 = vld [vmem:[%s551 + $0x8] sm:$0xff]
        %v4471 = vld [vmem:[%s551 + $0x10] sm:$0xff]
        %v4472 = vld [vmem:[%s551 + $0x18] sm:$0xff]
        %v4473 = vld [vmem:[%s551 + $0x20] sm:$0xff]
        %v4474 = vld [vmem:[%s551 + $0x28] sm:$0xff]
        %v4475 = vld [vmem:[%s551 + $0x30] sm:$0xff]
        %v4476 = vld [vmem:[%s551 + $0x38] sm:$0xff]
        %v4477 = vld [vmem:[%s551 + $0x40] sm:$0xff]
        %v4478 = vld [vmem:[%s551 + $0x48] sm:$0xff]
        %v4479 = vld [vmem:[%s551 + $0x50] sm:$0xff]
        %v4480 = vld [vmem:[%s551 + $0x58] sm:$0xff]
        %v4481 = vld [vmem:[%s551 + $0x60] sm:$0xff]
        %v4482 = vld [vmem:[%s551 + $0x68] sm:$0xff]
        %v4483 = vld [vmem:[%s551 + $0x70] sm:$0xff]
        %v4484 = vld [vmem:[%s551 + $0x78] sm:$0xff]
        %v4485 = vld [vmem:[%s551 + $0x80] sm:$0xff]
        %v4486 = vld [vmem:[%s551 + $0x88] sm:$0xff]
        %v4487 = vld [vmem:[%s551 + $0x90] sm:$0xff]
        %v4488 = vld [vmem:[%s551 + $0x98] sm:$0xff]
        %v4489 = vld [vmem:[%s551 + $0xa0] sm:$0xff]
        %v4490 = vld [vmem:[%s551 + $0xa8] sm:$0xff]
        %v4491 = vld [vmem:[%s551 + $0xb0] sm:$0xff]
        %v4492 = vld [vmem:[%s551 + $0xb8] sm:$0xff]
        %v4493 = vld [vmem:[%s551 + $0xc0] sm:$0xff]
        %v4494 = vld [vmem:[%s551 + $0xc8] sm:$0xff]
        %v4495 = vld [vmem:[%s551 + $0xd0] sm:$0xff]
        %v4496 = vld [vmem:[%s551 + $0xd8] sm:$0xff]
        %v4497 = vld [vmem:[%s551 + $0xe0] sm:$0xff]
        %v4498 = vld [vmem:[%s551 + $0xe8] sm:$0xff]
        %v4499 = vld [vmem:[%s551 + $0xf0] sm:$0xff]
        %v4500 = vld [vmem:[%s551 + $0xf8] sm:$0xff]
        %s4501 = smul.u32 %s32, 4
        %s4502 = scalar_lea.vmem %s6, %s4501
        %v4503 = vld [vmem:[%s4502] sm:$0xf]
        %v4505 = vlaneseq
        %v4506 = vshrl.u32 %v4505, 7
        %v4507 = vsub.s32 0, %v4506
        %v4508 = vrot.slane %v4503, %v4507
        %v4509 = vlaneseq
        %v4510 = vshrl.u32 %v4509, 7
        %v4511 = vsub.s32 1, %v4510
        %v4512 = vrot.slane %v4503, %v4511
        %v4513 = vlaneseq
        %v4514 = vshrl.u32 %v4513, 7
        %v4515 = vsub.s32 2, %v4514
        %v4516 = vrot.slane %v4503, %v4515
        %v4517 = vlaneseq
        %v4518 = vshrl.u32 %v4517, 7
        %v4519 = vsub.s32 3, %v4518
        %v4520 = vrot.slane %v4503, %v4519
        %v4557 = vunpack.c.l.b16 %v4469
        %v4558 = vunpack.c.h.b16 %v4469
        %v4559 = vunpack.c.l.b16 %v4470
        %v4560 = vunpack.c.h.b16 %v4470
        %v4561 = vunpack.c.l.b16 %v4471
        %v4562 = vunpack.c.h.b16 %v4471
        %v4563 = vunpack.c.l.b16 %v4472
        %v4564 = vunpack.c.h.b16 %v4472
        %v4565 = vunpack.c.l.b16 %v4473
        %v4566 = vunpack.c.h.b16 %v4473
        %v4567 = vunpack.c.l.b16 %v4474
        %v4568 = vunpack.c.h.b16 %v4474
        %v4569 = vunpack.c.l.b16 %v4475
        %v4570 = vunpack.c.h.b16 %v4475
        %v4571 = vunpack.c.l.b16 %v4476
        %v4572 = vunpack.c.h.b16 %v4476
        %v4573 = vunpack.c.l.b16 %v4477
        %v4574 = vunpack.c.h.b16 %v4477
        %v4575 = vunpack.c.l.b16 %v4478
        %v4576 = vunpack.c.h.b16 %v4478
        %v4577 = vunpack.c.l.b16 %v4479
        %v4578 = vunpack.c.h.b16 %v4479
        %v4579 = vunpack.c.l.b16 %v4480
        %v4580 = vunpack.c.h.b16 %v4480
        %v4581 = vunpack.c.l.b16 %v4481
        %v4582 = vunpack.c.h.b16 %v4481
        %v4583 = vunpack.c.l.b16 %v4482
        %v4584 = vunpack.c.h.b16 %v4482
        %v4585 = vunpack.c.l.b16 %v4483
        %v4586 = vunpack.c.h.b16 %v4483
        %v4587 = vunpack.c.l.b16 %v4484
        %v4588 = vunpack.c.h.b16 %v4484
        %v4589 = vunpack.c.l.b16 %v4485
        %v4590 = vunpack.c.h.b16 %v4485
        %v4591 = vunpack.c.l.b16 %v4486
        %v4592 = vunpack.c.h.b16 %v4486
        %v4593 = vunpack.c.l.b16 %v4487
        %v4594 = vunpack.c.h.b16 %v4487
        %v4595 = vunpack.c.l.b16 %v4488
        %v4596 = vunpack.c.h.b16 %v4488
        %v4597 = vunpack.c.l.b16 %v4489
        %v4598 = vunpack.c.h.b16 %v4489
        %v4599 = vunpack.c.l.b16 %v4490
        %v4600 = vunpack.c.h.b16 %v4490
        %v4601 = vunpack.c.l.b16 %v4491
        %v4602 = vunpack.c.h.b16 %v4491
        %v4603 = vunpack.c.l.b16 %v4492
        %v4604 = vunpack.c.h.b16 %v4492
        %v4605 = vunpack.c.l.b16 %v4493
        %v4606 = vunpack.c.h.b16 %v4493
        %v4607 = vunpack.c.l.b16 %v4494
        %v4608 = vunpack.c.h.b16 %v4494
        %v4609 = vunpack.c.l.b16 %v4495
        %v4610 = vunpack.c.h.b16 %v4495
        %v4611 = vunpack.c.l.b16 %v4496
        %v4612 = vunpack.c.h.b16 %v4496
        %v4613 = vunpack.c.l.b16 %v4497
        %v4614 = vunpack.c.h.b16 %v4497
        %v4615 = vunpack.c.l.b16 %v4498
        %v4616 = vunpack.c.h.b16 %v4498
        %v4617 = vunpack.c.l.b16 %v4499
        %v4618 = vunpack.c.h.b16 %v4499
        %v4619 = vunpack.c.l.b16 %v4500
        %v4620 = vunpack.c.h.b16 %v4500
        %v4621 = vpack.c.b16 %v4561, %v4557
        %v4622 = vpack.c.b16 %v4562, %v4558
        %v4623 = vpack.c.b16 %v4563, %v4559
        %v4624 = vpack.c.b16 %v4564, %v4560
        %v4625 = vpack.c.b16 %v4569, %v4565
        %v4626 = vpack.c.b16 %v4570, %v4566
        %v4627 = vpack.c.b16 %v4571, %v4567
        %v4628 = vpack.c.b16 %v4572, %v4568
        %v4629 = vpack.c.b16 %v4577, %v4573
        %v4630 = vpack.c.b16 %v4578, %v4574
        %v4631 = vpack.c.b16 %v4579, %v4575
        %v4632 = vpack.c.b16 %v4580, %v4576
        %v4633 = vpack.c.b16 %v4585, %v4581
        %v4634 = vpack.c.b16 %v4586, %v4582
        %v4635 = vpack.c.b16 %v4587, %v4583
        %v4636 = vpack.c.b16 %v4588, %v4584
        %v4637 = vpack.c.b16 %v4593, %v4589
        %v4638 = vpack.c.b16 %v4594, %v4590
        %v4639 = vpack.c.b16 %v4595, %v4591
        %v4640 = vpack.c.b16 %v4596, %v4592
        %v4641 = vpack.c.b16 %v4601, %v4597
        %v4642 = vpack.c.b16 %v4602, %v4598
        %v4643 = vpack.c.b16 %v4603, %v4599
        %v4644 = vpack.c.b16 %v4604, %v4600
        %v4645 = vpack.c.b16 %v4609, %v4605
        %v4646 = vpack.c.b16 %v4610, %v4606
        %v4647 = vpack.c.b16 %v4611, %v4607
        %v4648 = vpack.c.b16 %v4612, %v4608
        %v4649 = vpack.c.b16 %v4617, %v4613
        %v4650 = vpack.c.b16 %v4618, %v4614
        %v4651 = vpack.c.b16 %v4619, %v4615
        %v4652 = vpack.c.b16 %v4620, %v4616
        %4685 = vmatprep.subr.bf16.mxu0 %v4622
        %4686 = vmatpush1.bf16.msra.mxu0 %v4621
        %4687 = vmatprep.subr.bf16.mxu0 %v4626
        %4688 = vmatpush1.bf16.msra.mxu0 %v4625
        %4689 = vmatprep.subr.bf16.mxu0 %v4630
        %4690 = vmatpush1.bf16.msra.mxu0 %v4629
        %4691 = vmatprep.subr.bf16.mxu0 %v4634
        %4692 = vmatpush1.bf16.msra.mxu0 %v4633
        %4693 = vmatprep.subr.bf16.mxu0 %v4638
        %4694 = vmatpush1.bf16.msra.mxu0 %v4637
        %4695 = vmatprep.subr.bf16.mxu0 %v4642
        %4696 = vmatpush1.bf16.msra.mxu0 %v4641
        %4697 = vmatprep.subr.bf16.mxu0 %v4646
        %4698 = vmatpush1.bf16.msra.mxu0 %v4645
        %4699 = vmatprep.subr.bf16.mxu0 %v4650
        %4700 = vmatpush1.bf16.msra.mxu0 %v4649
        %4701 = vmatprep.subr.bf16.mxu0 0
        %4702 = vmatpush1.bf16.msra.mxu0 0
        %4703 = vmatprep.subr.bf16.mxu0 0
        %4704 = vmatpush1.bf16.msra.mxu0 0
        %4705 = vmatprep.subr.bf16.mxu0 0
        %4706 = vmatpush1.bf16.msra.mxu0 0
        %4707 = vmatprep.subr.bf16.mxu0 0
        %4708 = vmatpush1.bf16.msra.mxu0 0
        %4709 = vmatprep.subr.bf16.mxu0 0
        %4710 = vmatpush1.bf16.msra.mxu0 0
        %4711 = vmatprep.subr.bf16.mxu0 0
        %4712 = vmatpush1.bf16.msra.mxu0 0
        %4713 = vmatprep.subr.bf16.mxu0 0
        %4714 = vmatpush1.bf16.msra.mxu0 0
        %4715 = vmatprep.subr.bf16.mxu0 0
        %4716 = vmatpush1.bf16.msra.mxu0 0
        %4717 = vmatprep.mubr.bf16.mxu0 0
        %4718 = vmatmul.mubr.bf16.gmra.mrb[0].mxu0 %v4467
        %v4719 = vpop.f32.mrb[0].mxu0
        %v4720 = vadd.f32 %v4508, %v4719
        %v4721 = vpop.f32.mrb[0].mxu0
        %v4722 = vadd.f32 %v4512, %v4721
        %v4723 = vpop.f32.mrb[0].mxu0
        %v4724 = vadd.f32 %v4508, %v4723
        %v4725 = vpop.f32.mrb[0].mxu0
        %v4726 = vadd.f32 %v4512, %v4725
        %4727 = vmatprep.mubr.bf16.mxu0 0
        %4728 = vmatmul.mubr.bf16.gmra.mrb[0].mxu0 %v4468
        %v4729 = vpop.f32.mrb[0].mxu0
        %v4730 = vadd.f32 %v4508, %v4729
        %v4731 = vpop.f32.mrb[0].mxu0
        %v4732 = vadd.f32 %v4512, %v4731
        %v4733 = vpop.f32.mrb[0].mxu0
        %v4734 = vadd.f32 %v4508, %v4733
        %v4735 = vpop.f32.mrb[0].mxu0
        %v4736 = vadd.f32 %v4512, %v4735
        %4737 = vdwg.mxu0
        %4738 = vmatprep.subr.bf16.mxu0 %v4624
        %4739 = vmatpush1.bf16.msra.mxu0 %v4623
        %4740 = vmatprep.subr.bf16.mxu0 %v4628
        %4741 = vmatpush1.bf16.msra.mxu0 %v4627
        %4742 = vmatprep.subr.bf16.mxu0 %v4632
        %4743 = vmatpush1.bf16.msra.mxu0 %v4631
        %4744 = vmatprep.subr.bf16.mxu0 %v4636
        %4745 = vmatpush1.bf16.msra.mxu0 %v4635
        %4746 = vmatprep.subr.bf16.mxu0 %v4640
        %4747 = vmatpush1.bf16.msra.mxu0 %v4639
        %4748 = vmatprep.subr.bf16.mxu0 %v4644
        %4749 = vmatpush1.bf16.msra.mxu0 %v4643
        %4750 = vmatprep.subr.bf16.mxu0 %v4648
        %4751 = vmatpush1.bf16.msra.mxu0 %v4647
        %4752 = vmatprep.subr.bf16.mxu0 %v4652
        %4753 = vmatpush1.bf16.msra.mxu0 %v4651
        %4754 = vmatprep.subr.bf16.mxu0 0
        %4755 = vmatpush1.bf16.msra.mxu0 0
        %4756 = vmatprep.subr.bf16.mxu0 0
        %4757 = vmatpush1.bf16.msra.mxu0 0
        %4758 = vmatprep.subr.bf16.mxu0 0
        %4759 = vmatpush1.bf16.msra.mxu0 0
        %4760 = vmatprep.subr.bf16.mxu0 0
        %4761 = vmatpush1.bf16.msra.mxu0 0
        %4762 = vmatprep.subr.bf16.mxu0 0
        %4763 = vmatpush1.bf16.msra.mxu0 0
        %4764 = vmatprep.subr.bf16.mxu0 0
        %4765 = vmatpush1.bf16.msra.mxu0 0
        %4766 = vmatprep.subr.bf16.mxu0 0
        %4767 = vmatpush1.bf16.msra.mxu0 0
        %4768 = vmatprep.subr.bf16.mxu0 0
        %4769 = vmatpush1.bf16.msra.mxu0 0
        %4770 = vmatprep.mubr.bf16.mxu0 0
        %4771 = vmatmul.mubr.bf16.gmra.mrb[0].mxu0 %v4467
        %v4772 = vpop.f32.mrb[0].mxu0
        %v4773 = vadd.f32 %v4516, %v4772
        %v4774 = vpop.f32.mrb[0].mxu0
        %v4775 = vadd.f32 %v4520, %v4774
        %v4776 = vpop.f32.mrb[0].mxu0
        %v4777 = vadd.f32 %v4516, %v4776
        %v4778 = vpop.f32.mrb[0].mxu0
        %v4779 = vadd.f32 %v4520, %v4778
        %4780 = vmatprep.mubr.bf16.mxu0 0
        %4781 = vmatmul.mubr.bf16.gmra.mrb[0].mxu0 %v4468
        %v4782 = vpop.f32.mrb[0].mxu0
        %v4783 = vadd.f32 %v4516, %v4782
        %v4784 = vpop.f32.mrb[0].mxu0
        %v4785 = vadd.f32 %v4520, %v4784
        %v4786 = vpop.f32.mrb[0].mxu0
        %v4787 = vadd.f32 %v4516, %v4786
        %v4788 = vpop.f32.mrb[0].mxu0
        %v4789 = vadd.f32 %v4520, %v4788
        %4790 = vdwg.mxu0
        %v4791 = vmul.f32 %v4720, 0.5
        %v4792 = vmul.f32 %v4722, 0.5
        %v4793 = vmul.f32 %v4773, 0.5
        %v4794 = vmul.f32 %v4775, 0.5
        %v4795 = vmul.f32 %v4724, 0.5
        %v4796 = vmul.f32 %v4726, 0.5
        %v4797 = vmul.f32 %v4777, 0.5
        %v4798 = vmul.f32 %v4779, 0.5
        %v4799 = vmul.f32 %v4730, 0.5
        %v4800 = vmul.f32 %v4732, 0.5
        %v4801 = vmul.f32 %v4783, 0.5
        %v4802 = vmul.f32 %v4785, 0.5
        %v4803 = vmul.f32 %v4734, 0.5
        %v4804 = vmul.f32 %v4736, 0.5
        %v4805 = vmul.f32 %v4787, 0.5
        %v4806 = vmul.f32 %v4789, 0.5
        %v4807 = vrcp.pop 1.4142135
        %v4808 = vmul.f32 %v4720, %v4807
        %v4809 = vmul.f32 %v4722, %v4807
        %v4810 = vmul.f32 %v4773, %v4807
        %v4811 = vmul.f32 %v4775, %v4807
        %v4812 = vmul.f32 %v4724, %v4807
        %v4813 = vmul.f32 %v4726, %v4807
        %v4814 = vmul.f32 %v4777, %v4807
        %v4815 = vmul.f32 %v4779, %v4807
        %v4816 = vmul.f32 %v4730, %v4807
        %v4817 = vmul.f32 %v4732, %v4807
        %v4818 = vmul.f32 %v4783, %v4807
        %v4819 = vmul.f32 %v4785, %v4807
        %v4820 = vmul.f32 %v4734, %v4807
        %v4821 = vmul.f32 %v4736, %v4807
        %v4822 = vmul.f32 %v4787, %v4807
        %v4823 = vmul.f32 %v4789, %v4807
        %v4824 = verf.f32.pop %v4808
        %v4825 = verf.f32.pop %v4809
        %v4826 = verf.f32.pop %v4810
        %v4827 = verf.f32.pop %v4811
        %v4828 = verf.f32.pop %v4812
        %v4829 = verf.f32.pop %v4813
        %v4830 = verf.f32.pop %v4814
        %v4831 = verf.f32.pop %v4815
        %v4832 = verf.f32.pop %v4816
        %v4833 = verf.f32.pop %v4817
        %v4834 = verf.f32.pop %v4818
        %v4835 = verf.f32.pop %v4819
        %v4836 = verf.f32.pop %v4820
        %v4837 = verf.f32.pop %v4821
        %v4838 = verf.f32.pop %v4822
        %v4839 = verf.f32.pop %v4823
        %v4840 = vadd.f32 %v4824, 1.0
        %v4841 = vadd.f32 %v4825, 1.0
        %v4842 = vadd.f32 %v4826, 1.0
        %v4843 = vadd.f32 %v4827, 1.0
        %v4844 = vadd.f32 %v4828, 1.0
        %v4845 = vadd.f32 %v4829, 1.0
        %v4846 = vadd.f32 %v4830, 1.0
        %v4847 = vadd.f32 %v4831, 1.0
        %v4848 = vadd.f32 %v4832, 1.0
        %v4849 = vadd.f32 %v4833, 1.0
        %v4850 = vadd.f32 %v4834, 1.0
        %v4851 = vadd.f32 %v4835, 1.0
        %v4852 = vadd.f32 %v4836, 1.0
        %v4853 = vadd.f32 %v4837, 1.0
        %v4854 = vadd.f32 %v4838, 1.0
        %v4855 = vadd.f32 %v4839, 1.0
        %v4856 = vmul.f32 %v4791, %v4840
        %v4857 = vmul.f32 %v4792, %v4841
        %v4858 = vmul.f32 %v4793, %v4842
        %v4859 = vmul.f32 %v4794, %v4843
        %v4860 = vmul.f32 %v4795, %v4844
        %v4861 = vmul.f32 %v4796, %v4845
        %v4862 = vmul.f32 %v4797, %v4846
        %v4863 = vmul.f32 %v4798, %v4847
        %v4864 = vmul.f32 %v4799, %v4848
        %v4865 = vmul.f32 %v4800, %v4849
        %v4866 = vmul.f32 %v4801, %v4850
        %v4867 = vmul.f32 %v4802, %v4851
        %v4868 = vmul.f32 %v4803, %v4852
        %v4869 = vmul.f32 %v4804, %v4853
        %v4870 = vmul.f32 %v4805, %v4854
        %v4871 = vmul.f32 %v4806, %v4855
        %v4872 = vpack.c.bf16 %v4860, %v4856
        %v4873 = vpack.c.bf16 %v4861, %v4857
        %v4874 = vpack.c.bf16 %v4862, %v4858
        %v4875 = vpack.c.bf16 %v4863, %v4859
        %v4876 = vpack.c.bf16 %v4868, %v4864
        %v4877 = vpack.c.bf16 %v4869, %v4865
        %v4878 = vpack.c.bf16 %v4870, %v4866
        %v4879 = vpack.c.bf16 %v4871, %v4867
        %v4880 = vld [vmem:[%s560] sm:$0xf]
        %v4881 = vld [vmem:[%s560 + $0x4] sm:$0xf]
        %v4882 = vld [vmem:[%s560 + $0x8] sm:$0xf]
        %v4883 = vld [vmem:[%s560 + $0xc] sm:$0xf]
        %v4884 = vld [vmem:[%s560 + $0x10] sm:$0xf]
        %v4885 = vld [vmem:[%s560 + $0x14] sm:$0xf]
        %v4886 = vld [vmem:[%s560 + $0x18] sm:$0xf]
        %v4887 = vld [vmem:[%s560 + $0x1c] sm:$0xf]
        %v4888 = vld [vmem:[%s560 + $0x20] sm:$0xf]
        %v4889 = vld [vmem:[%s560 + $0x24] sm:$0xf]
        %v4890 = vld [vmem:[%s560 + $0x28] sm:$0xf]
        %v4891 = vld [vmem:[%s560 + $0x2c] sm:$0xf]
        %v4892 = vld [vmem:[%s560 + $0x30] sm:$0xf]
        %v4893 = vld [vmem:[%s560 + $0x34] sm:$0xf]
        %v4894 = vld [vmem:[%s560 + $0x38] sm:$0xf]
        %v4895 = vld [vmem:[%s560 + $0x3c] sm:$0xf]
        %v4896 = vld [vmem:[%s560 + $0x40] sm:$0xf]
        %v4897 = vld [vmem:[%s560 + $0x44] sm:$0xf]
        %v4898 = vld [vmem:[%s560 + $0x48] sm:$0xf]
        %v4899 = vld [vmem:[%s560 + $0x4c] sm:$0xf]
        %v4900 = vld [vmem:[%s560 + $0x50] sm:$0xf]
        %v4901 = vld [vmem:[%s560 + $0x54] sm:$0xf]
        %v4902 = vld [vmem:[%s560 + $0x58] sm:$0xf]
        %v4903 = vld [vmem:[%s560 + $0x5c] sm:$0xf]
        %v4904 = vld [vmem:[%s560 + $0x60] sm:$0xf]
        %v4905 = vld [vmem:[%s560 + $0x64] sm:$0xf]
        %v4906 = vld [vmem:[%s560 + $0x68] sm:$0xf]
        %v4907 = vld [vmem:[%s560 + $0x6c] sm:$0xf]
        %v4908 = vld [vmem:[%s560 + $0x70] sm:$0xf]
        %v4909 = vld [vmem:[%s560 + $0x74] sm:$0xf]
        %v4910 = vld [vmem:[%s560 + $0x78] sm:$0xf]
        %v4911 = vld [vmem:[%s560 + $0x7c] sm:$0xf]
        %v4912 = vld [vmem:[%s560 + $0x80] sm:$0xf]
        %v4913 = vld [vmem:[%s560 + $0x84] sm:$0xf]
        %v4914 = vld [vmem:[%s560 + $0x88] sm:$0xf]
        %v4915 = vld [vmem:[%s560 + $0x8c] sm:$0xf]
        %v4916 = vld [vmem:[%s560 + $0x90] sm:$0xf]
        %v4917 = vld [vmem:[%s560 + $0x94] sm:$0xf]
        %v4918 = vld [vmem:[%s560 + $0x98] sm:$0xf]
        %v4919 = vld [vmem:[%s560 + $0x9c] sm:$0xf]
        %v4920 = vld [vmem:[%s560 + $0xa0] sm:$0xf]
        %v4921 = vld [vmem:[%s560 + $0xa4] sm:$0xf]
        %v4922 = vld [vmem:[%s560 + $0xa8] sm:$0xf]
        %v4923 = vld [vmem:[%s560 + $0xac] sm:$0xf]
        %v4924 = vld [vmem:[%s560 + $0xb0] sm:$0xf]
        %v4925 = vld [vmem:[%s560 + $0xb4] sm:$0xf]
        %v4926 = vld [vmem:[%s560 + $0xb8] sm:$0xf]
        %v4927 = vld [vmem:[%s560 + $0xbc] sm:$0xf]
        %v4928 = vld [vmem:[%s560 + $0xc0] sm:$0xf]
        %v4929 = vld [vmem:[%s560 + $0xc4] sm:$0xf]
        %v4930 = vld [vmem:[%s560 + $0xc8] sm:$0xf]
        %v4931 = vld [vmem:[%s560 + $0xcc] sm:$0xf]
        %v4932 = vld [vmem:[%s560 + $0xd0] sm:$0xf]
        %v4933 = vld [vmem:[%s560 + $0xd4] sm:$0xf]
        %v4934 = vld [vmem:[%s560 + $0xd8] sm:$0xf]
        %v4935 = vld [vmem:[%s560 + $0xdc] sm:$0xf]
        %v4936 = vld [vmem:[%s560 + $0xe0] sm:$0xf]
        %v4937 = vld [vmem:[%s560 + $0xe4] sm:$0xf]
        %v4938 = vld [vmem:[%s560 + $0xe8] sm:$0xf]
        %v4939 = vld [vmem:[%s560 + $0xec] sm:$0xf]
        %v4940 = vld [vmem:[%s560 + $0xf0] sm:$0xf]
        %v4941 = vld [vmem:[%s560 + $0xf4] sm:$0xf]
        %v4942 = vld [vmem:[%s560 + $0xf8] sm:$0xf]
        %v4943 = vld [vmem:[%s560 + $0xfc] sm:$0xf]
        %s4944 = scalar_lea.vmem %s7, %s32
        %v4945 = vld [vmem:[%s4944] sm:$0x1]
        %v4947 = vlaneseq
        %v4948 = vshrl.u32 %v4947, 7
        %v4949 = vsub.s32 0, %v4948
        %v4950 = vrot.slane %v4945, %v4949
        %v5016 = vunpack.c.l.b16 %v4880
        %v5017 = vunpack.c.l.b16 %v4881
        %v5018 = vunpack.c.l.b16 %v4882
        %v5019 = vunpack.c.l.b16 %v4883
        %v5020 = vunpack.c.l.b16 %v4884
        %v5021 = vunpack.c.l.b16 %v4885
        %v5022 = vunpack.c.l.b16 %v4886
        %v5023 = vunpack.c.l.b16 %v4887
        %v5024 = vunpack.c.l.b16 %v4888
        %v5025 = vunpack.c.l.b16 %v4889
        %v5026 = vunpack.c.l.b16 %v4890
        %v5027 = vunpack.c.l.b16 %v4891
        %v5028 = vunpack.c.l.b16 %v4892
        %v5029 = vunpack.c.l.b16 %v4893
        %v5030 = vunpack.c.l.b16 %v4894
        %v5031 = vunpack.c.l.b16 %v4895
        %v5032 = vunpack.c.l.b16 %v4896
        %v5033 = vunpack.c.l.b16 %v4897
        %v5034 = vunpack.c.l.b16 %v4898
        %v5035 = vunpack.c.l.b16 %v4899
        %v5036 = vunpack.c.l.b16 %v4900
        %v5037 = vunpack.c.l.b16 %v4901
        %v5038 = vunpack.c.l.b16 %v4902
        %v5039 = vunpack.c.l.b16 %v4903
        %v5040 = vunpack.c.l.b16 %v4904
        %v5041 = vunpack.c.l.b16 %v4905
        %v5042 = vunpack.c.l.b16 %v4906
        %v5043 = vunpack.c.l.b16 %v4907
        %v5044 = vunpack.c.l.b16 %v4908
        %v5045 = vunpack.c.l.b16 %v4909
        %v5046 = vunpack.c.l.b16 %v4910
        %v5047 = vunpack.c.l.b16 %v4911
        %v5048 = vunpack.c.l.b16 %v4912
        %v5049 = vunpack.c.l.b16 %v4913
        %v5050 = vunpack.c.l.b16 %v4914
        %v5051 = vunpack.c.l.b16 %v4915
        %v5052 = vunpack.c.l.b16 %v4916
        %v5053 = vunpack.c.l.b16 %v4917
        %v5054 = vunpack.c.l.b16 %v4918
        %v5055 = vunpack.c.l.b16 %v4919
        %v5056 = vunpack.c.l.b16 %v4920
        %v5057 = vunpack.c.l.b16 %v4921
        %v5058 = vunpack.c.l.b16 %v4922
        %v5059 = vunpack.c.l.b16 %v4923
        %v5060 = vunpack.c.l.b16 %v4924
        %v5061 = vunpack.c.l.b16 %v4925
        %v5062 = vunpack.c.l.b16 %v4926
        %v5063 = vunpack.c.l.b16 %v4927
        %v5064 = vunpack.c.l.b16 %v4928
        %v5065 = vunpack.c.l.b16 %v4929
        %v5066 = vunpack.c.l.b16 %v4930
        %v5067 = vunpack.c.l.b16 %v4931
        %v5068 = vunpack.c.l.b16 %v4932
        %v5069 = vunpack.c.l.b16 %v4933
        %v5070 = vunpack.c.l.b16 %v4934
        %v5071 = vunpack.c.l.b16 %v4935
        %v5072 = vunpack.c.l.b16 %v4936
        %v5073 = vunpack.c.l.b16 %v4937
        %v5074 = vunpack.c.l.b16 %v4938
        %v5075 = vunpack.c.l.b16 %v4939
        %v5076 = vunpack.c.l.b16 %v4940
        %v5077 = vunpack.c.l.b16 %v4941
        %v5078 = vunpack.c.l.b16 %v4942
        %v5079 = vunpack.c.l.b16 %v4943
        %v5080 = vpack.c.b16 %v5017, %v5016
        %v5081 = vpack.c.b16 %v5019, %v5018
        %v5082 = vpack.c.b16 %v5021, %v5020
        %v5083 = vpack.c.b16 %v5023, %v5022
        %v5084 = vpack.c.b16 %v5025, %v5024
        %v5085 = vpack.c.b16 %v5027, %v5026
        %v5086 = vpack.c.b16 %v5029, %v5028
        %v5087 = vpack.c.b16 %v5031, %v5030
        %v5088 = vpack.c.b16 %v5033, %v5032
        %v5089 = vpack.c.b16 %v5035, %v5034
        %v5090 = vpack.c.b16 %v5037, %v5036
        %v5091 = vpack.c.b16 %v5039, %v5038
        %v5092 = vpack.c.b16 %v5041, %v5040
        %v5093 = vpack.c.b16 %v5043, %v5042
        %v5094 = vpack.c.b16 %v5045, %v5044
        %v5095 = vpack.c.b16 %v5047, %v5046
        %v5096 = vpack.c.b16 %v5049, %v5048
        %v5097 = vpack.c.b16 %v5051, %v5050
        %v5098 = vpack.c.b16 %v5053, %v5052
        %v5099 = vpack.c.b16 %v5055, %v5054
        %v5100 = vpack.c.b16 %v5057, %v5056
        %v5101 = vpack.c.b16 %v5059, %v5058
        %v5102 = vpack.c.b16 %v5061, %v5060
        %v5103 = vpack.c.b16 %v5063, %v5062
        %v5104 = vpack.c.b16 %v5065, %v5064
        %v5105 = vpack.c.b16 %v5067, %v5066
        %v5106 = vpack.c.b16 %v5069, %v5068
        %v5107 = vpack.c.b16 %v5071, %v5070
        %v5108 = vpack.c.b16 %v5073, %v5072
        %v5109 = vpack.c.b16 %v5075, %v5074
        %v5110 = vpack.c.b16 %v5077, %v5076
        %v5111 = vpack.c.b16 %v5079, %v5078
        %5144 = vmatprep.subr.bf16.mxu0 0
        %5145 = vmatpush1.bf16.msra.mxu0 %v5080
        %5146 = vmatprep.subr.bf16.mxu0 0
        %5147 = vmatpush1.bf16.msra.mxu0 %v5081
        %5148 = vmatprep.subr.bf16.mxu0 0
        %5149 = vmatpush1.bf16.msra.mxu0 %v5082
        %5150 = vmatprep.subr.bf16.mxu0 0
        %5151 = vmatpush1.bf16.msra.mxu0 %v5083
        %5152 = vmatprep.subr.bf16.mxu0 0
        %5153 = vmatpush1.bf16.msra.mxu0 %v5084
        %5154 = vmatprep.subr.bf16.mxu0 0
        %5155 = vmatpush1.bf16.msra.mxu0 %v5085
        %5156 = vmatprep.subr.bf16.mxu0 0
        %5157 = vmatpush1.bf16.msra.mxu0 %v5086
        %5158 = vmatprep.subr.bf16.mxu0 0
        %5159 = vmatpush1.bf16.msra.mxu0 %v5087
        %5160 = vmatprep.subr.bf16.mxu0 0
        %5161 = vmatpush1.bf16.msra.mxu0 %v5088
        %5162 = vmatprep.subr.bf16.mxu0 0
        %5163 = vmatpush1.bf16.msra.mxu0 %v5089
        %5164 = vmatprep.subr.bf16.mxu0 0
        %5165 = vmatpush1.bf16.msra.mxu0 %v5090
        %5166 = vmatprep.subr.bf16.mxu0 0
        %5167 = vmatpush1.bf16.msra.mxu0 %v5091
        %5168 = vmatprep.subr.bf16.mxu0 0
        %5169 = vmatpush1.bf16.msra.mxu0 %v5092
        %5170 = vmatprep.subr.bf16.mxu0 0
        %5171 = vmatpush1.bf16.msra.mxu0 %v5093
        %5172 = vmatprep.subr.bf16.mxu0 0
        %5173 = vmatpush1.bf16.msra.mxu0 %v5094
        %5174 = vmatprep.subr.bf16.mxu0 0
        %5175 = vmatpush1.bf16.msra.mxu0 %v5095
        %5176 = vmatprep.mubr.bf16.mxu0 %v4873
        %5177 = vmatmul.mubr.bf16.gmra.mrb[0].mxu0 %v4872
        %v5178 = vpop.f32.mrb[0].mxu0
        %v5179 = vadd.f32 %v4950, %v5178
        %v5180 = vpop.f32.mrb[0].mxu0
        %v5181 = vpop.f32.mrb[0].mxu0
        %v5182 = vadd.f32 %v4950, %v5181
        %v5183 = vpop.f32.mrb[0].mxu0
        %5184 = vmatprep.mubr.bf16.mxu0 %v4877
        %5185 = vmatmul.mubr.bf16.gmra.mrb[0].mxu0 %v4876
        %v5186 = vpop.f32.mrb[0].mxu0
        %v5187 = vadd.f32 %v4950, %v5186
        %v5188 = vpop.f32.mrb[0].mxu0
        %v5189 = vpop.f32.mrb[0].mxu0
        %v5190 = vadd.f32 %v4950, %v5189
        %v5191 = vpop.f32.mrb[0].mxu0
        %5192 = vdwg.mxu0
        %5193 = vmatprep.subr.bf16.mxu0 0
        %5194 = vmatpush1.bf16.msra.mxu0 %v5096
        %5195 = vmatprep.subr.bf16.mxu0 0
        %5196 = vmatpush1.bf16.msra.mxu0 %v5097
        %5197 = vmatprep.subr.bf16.mxu0 0
        %5198 = vmatpush1.bf16.msra.mxu0 %v5098
        %5199 = vmatprep.subr.bf16.mxu0 0
        %5200 = vmatpush1.bf16.msra.mxu0 %v5099
        %5201 = vmatprep.subr.bf16.mxu0 0
        %5202 = vmatpush1.bf16.msra.mxu0 %v5100
        %5203 = vmatprep.subr.bf16.mxu0 0
        %5204 = vmatpush1.bf16.msra.mxu0 %v5101
        %5205 = vmatprep.subr.bf16.mxu0 0
        %5206 = vmatpush1.bf16.msra.mxu0 %v5102
        %5207 = vmatprep.subr.bf16.mxu0 0
        %5208 = vmatpush1.bf16.msra.mxu0 %v5103
        %5209 = vmatprep.subr.bf16.mxu0 0
        %5210 = vmatpush1.bf16.msra.mxu0 %v5104
        %5211 = vmatprep.subr.bf16.mxu0 0
        %5212 = vmatpush1.bf16.msra.mxu0 %v5105
        %5213 = vmatprep.subr.bf16.mxu0 0
        %5214 = vmatpush1.bf16.msra.mxu0 %v5106
        %5215 = vmatprep.subr.bf16.mxu0 0
        %5216 = vmatpush1.bf16.msra.mxu0 %v5107
        %5217 = vmatprep.subr.bf16.mxu0 0
        %5218 = vmatpush1.bf16.msra.mxu0 %v5108
        %5219 = vmatprep.subr.bf16.mxu0 0
        %5220 = vmatpush1.bf16.msra.mxu0 %v5109
        %5221 = vmatprep.subr.bf16.mxu0 0
        %5222 = vmatpush1.bf16.msra.mxu0 %v5110
        %5223 = vmatprep.subr.bf16.mxu0 0
        %5224 = vmatpush1.bf16.msra.mxu0 %v5111
        %5225 = vmatprep.mubr.bf16.mxu0 %v4875
        %5226 = vmatmul.mubr.bf16.gmra.mrb[0].mxu0 %v4874
        %v5227 = vpop.f32.mrb[0].mxu0
        %v5228 = vadd.f32 %v5179, %v5227
        %v5229 = vpop.f32.mrb[0].mxu0
        %v5230 = vpop.f32.mrb[0].mxu0
        %v5231 = vadd.f32 %v5182, %v5230
        %v5232 = vpop.f32.mrb[0].mxu0
        %5233 = vmatprep.mubr.bf16.mxu0 %v4879
        %5234 = vmatmul.mubr.bf16.gmra.mrb[0].mxu0 %v4878
        %v5235 = vpop.f32.mrb[0].mxu0
        %v5236 = vadd.f32 %v5187, %v5235
        %v5237 = vpop.f32.mrb[0].mxu0
        %v5238 = vpop.f32.mrb[0].mxu0
        %v5239 = vadd.f32 %v5190, %v5238
        %v5240 = vpop.f32.mrb[0].mxu0
        %5241 = vdwg.mxu0
        %v5242 = vadd.f32 %v4407, %v5228
        %v5243 = vadd.f32 %v4408, %v5231
        %v5244 = vadd.f32 %v4409, %v5236
        %v5245 = vadd.f32 %v4410, %v5239
        %5246 = vst [vmem:[#allocation2] sm:$0xff] %v5242
        %5247 = vst [vmem:[#allocation2 + $0x8] sm:$0xff] %v5243
        %5248 = vst [vmem:[#allocation2 + $0x10] sm:$0xff] %v5244
        %5249 = vst [vmem:[#allocation2 + $0x18] sm:$0xff] %v5245
        %p5250 = scmp.eq.s32.totalorder %s32, 1
        // Predicated region
        $region105: #{tpu_custom_call.1} parent=67 // pred_check
          %p5251 = pneg %p5250
        $region106: #{tpu_custom_call.1} parent=67 // pred_check_branch
          %5253 = sbr.rel (%p5251) target = $region108
        $region107: #{tpu_custom_call.1} parent=67 // pred_region
          %v5254 = vld [vmem:[#allocation7] sm:$0x1]
          %5255 = vadd.xlane.f32.xlu0 %v5242
          %v5256 = vpop.xlane.xlu0 %5255
          %5257 = vadd.xlane.f32.xlu0 %v5243
          %v5258 = vpop.xlane.xlu0 %5257
          %5259 = vadd.xlane.f32.xlu0 %v5244
          %v5260 = vpop.xlane.xlu0 %5259
          %5261 = vadd.xlane.f32.xlu0 %v5245
          %v5262 = vpop.xlane.xlu0 %5261
          %v5263 = vmul.f32 %v5256, %v652
          %v5264 = vmul.f32 %v5258, %v652
          %v5265 = vmul.f32 %v5260, %v652
          %v5266 = vmul.f32 %v5262, %v652
          %v5267 = vsub.f32 %v5242, %v5263
          %v5268 = vsub.f32 %v5243, %v5264
          %v5269 = vsub.f32 %v5244, %v5265
          %v5270 = vsub.f32 %v5245, %v5266
          %v5271 = vmul.f32 %v5267, %v5267
          %v5272 = vmul.f32 %v5268, %v5268
          %v5273 = vmul.f32 %v5269, %v5269
          %v5274 = vmul.f32 %v5270, %v5270
          %5275 = vadd.xlane.f32.xlu0 %v5271
          %v5276 = vpop.xlane.xlu0 %5275
          %5277 = vadd.xlane.f32.xlu0 %v5272
          %v5278 = vpop.xlane.xlu0 %5277
          %5279 = vadd.xlane.f32.xlu0 %v5273
          %v5280 = vpop.xlane.xlu0 %5279
          %5281 = vadd.xlane.f32.xlu0 %v5274
          %v5282 = vpop.xlane.xlu0 %5281
          %v5283 = vmul.f32 %v5276, %v652
          %v5284 = vmul.f32 %v5278, %v652
          %v5285 = vmul.f32 %v5280, %v652
          %v5286 = vmul.f32 %v5282, %v652
          %v5287 = vadd.f32 %v5283, 1e-05
          %v5288 = vadd.f32 %v5284, 1e-05
          %v5289 = vadd.f32 %v5285, 1e-05
          %v5290 = vadd.f32 %v5286, 1e-05
          %v5291 = vrsqrt.pop %v5287
          %v5292 = vrsqrt.pop %v5288
          %v5293 = vrsqrt.pop %v5289
          %v5294 = vrsqrt.pop %v5290
          %v5295 = vmul.f32 %v5267, %v5291
          %v5296 = vmul.f32 %v5268, %v5292
          %v5297 = vmul.f32 %v5269, %v5293
          %v5298 = vmul.f32 %v5270, %v5294
          %v5300 = vlaneseq
          %v5301 = vshrl.u32 %v5300, 7
          %v5302 = vsub.s32 0, %v5301
          %v5303 = vrot.slane %v5254, %v5302
          %v5305 = vmul.f32 %v5295, %v5303
          %v5306 = vmul.f32 %v5296, %v5303
          %v5307 = vmul.f32 %v5297, %v5303
          %v5308 = vmul.f32 %v5298, %v5303
          %5309 = vst [vmem:[#allocation16] sm:$0xff] %v5305
          %5310 = vst [vmem:[#allocation16 + $0x8] sm:$0xff] %v5306
          %5311 = vst [vmem:[#allocation16 + $0x10] sm:$0xff] %v5307
          %5312 = vst [vmem:[#allocation16 + $0x18] sm:$0xff] %v5308
        $region108: #{tpu_custom_call.1} parent=67 // pred_fallthru
          _
        // Predicated region
        $region109: #{tpu_custom_call.1} parent=67 // pred_check
          %p5313 = pneg %p334
        $region110: #{tpu_custom_call.1} parent=67 // pred_check_branch
          %5315 = sbr.rel (%p5313) target = $region112
        $region111: #{tpu_custom_call.1} parent=67 // pred_region
          %s5316 = smul.u32 2, %s31
          %s5318 = ssub.s32 512, 512
          %5319 = vsyncadd [#allocation6], %s5318
          %s5320 = smul.addr %s5316, 2
          %s5321 = smul.addr %s5320, 128
          %s5322 = scalar_lea.hbm %s12, %s5321
          %s5323 = sshll.u32 [#allocation16], 4
          %s5324 = int_to_ptr.vmem [resolvable:$true] %s5323
          %5329 = dma.vmem_to_hbm [thread:$0]  %s5324, 512, %s5322, [#allocation6], 128, 128, 8
        $region112: #{tpu_custom_call.1} parent=67 // pred_fallthru
          _
        // Predicated region
        $region113: #{tpu_custom_call.1} parent=67 // pred_check
          %p5330 = pneg %p334
        $region114: #{tpu_custom_call.1} parent=67 // pred_check_branch
          %5332 = sbr.rel (%p5330) target = $region116
        $region115: #{tpu_custom_call.1} parent=67 // pred_region
          %5333 = dma.done [#allocation6], 512
        $region116: #{tpu_custom_call.1} parent=67 // pred_fallthru
          _
      $region68: #{tpu_custom_call.1} parent=5 // pred_fallthru
        _
      %p5334 = scmp.le.s32.totalorder 2, %s22
      // Predicated region
      $region117: #{tpu_custom_call.1} parent=5 // pred_check
        %p5335 = pneg %p5334
      $region118: #{tpu_custom_call.1} parent=5 // pred_check_branch
        %5337 = sbr.rel (%p5335) target = $region120
      $region119: #{tpu_custom_call.1} parent=5 // pred_region
        %s5338 = ssub.s32 %s22, 2
      $region120: #{tpu_custom_call.1} parent=5 // pred_fallthru
        _
    $region6: #{tpu_custom_call.1} parent=1 // loop_footer
      %s26 = sadd.s32 1, %s22
    $region7: #{tpu_custom_call.1} parent=1 // loop_footer_branch
      %21 = sbr.rel target = $region3
    $region8: #{tpu_custom_call.1} parent=1 // loop_exit
      _
    %5339 = vsyncpa [#allocation5], 1
    %s5340 = scalar_lea.sflag [#allocation5], 1
    %5341 = vsyncpa %s5340, 1
    %5342 = vsyncpa [#allocation8], 1
    %5343 = vsyncpa [#allocation11], 1
    %5344 = vsyncpa [#allocation6], 1
    %s5345 = scalar_lea.sflag [#allocation6], 1
    %5346 = vsyncpa %s5345, 1

</llo_original>
